<compile_context>
chip_gen: v5e
topology: v5e:2x2
jax: 0.10.0
libtpu: 0.0.40
codegen_flags: <defaults>
</compile_context>

<pallas_src>
import jax
import jax.numpy as jnp
import numpy as np
from jax.experimental import pallas as pl
from jax.experimental.pallas import tpu as pltpu


def make_ggnn_kernel(T: int, n_edge_types: int, N: int, D: int, matmul_dtype):
    """Whole-forward Pallas kernel (single invocation, all operands VMEM-resident)."""
    E = n_edge_types

    def kernel(h_ref, adj_ref, wec_ref, mbias_ref, wm_ref, wh_ref, bgru_ref,
               wpg_ref, bpg_ref, seg_ref, out_ref):
        h = h_ref[...].astype(jnp.float32)                     # [N, D]   f32 state
        m_bias = mbias_ref[...]                                # [N, D]   f32 (folded edge biases)
        wm = wm_ref[...]                                       # [D, 4D]  matmul_dtype
        wh = wh_ref[...]                                       # [D, 4D]  matmul_dtype
        # Hoisted bias broadcast (JAX does not CSE broadcast_in_dim inside the
        # unrolled T loop, so broadcast exactly once).
        bgru = jnp.broadcast_to(bgru_ref[...], (N, 4 * D))     # [N, 4D]  f32

        for _ in range(T):                                     # small static T -> unrolled
            hq = h.astype(matmul_dtype)
            # hidden-side GRU pre-activations: depends only on h, issues immediately
            gh = jnp.dot(hq, wh, preferred_element_type=jnp.float32)            # [N, 4D]

            # --- message pass: m = sum_e A_e @ (h @ W_e) + m_bias (bias folded, f32) ---
            # Leading-dim indexing of [E,N,N]/[E,D,D] refs -> no lane/sublane relayout.
            m = m_bias
            for e in range(E):
                p_e = jnp.dot(hq, wec_ref[e],
                              preferred_element_type=jnp.float32)               # [N, D]
                m = m + jnp.dot(adj_ref[e], p_e.astype(matmul_dtype),
                                preferred_element_type=jnp.float32)             # [N, D]

            # --- GRU gates: message-side matmul + hoisted hidden-side + fused biases ---
            gm = jnp.dot(m.astype(matmul_dtype), wm,
                         preferred_element_type=jnp.float32)                    # [N, 4D]
            g = gm + gh + bgru                                                  # [N, 4D] = 128 lanes
            rz = jax.nn.sigmoid(g[:, :2 * D])                  # single EUP slab for r|z
            r = rz[:, :D]
            z = rz[:, D:]
            n = jnp.tanh(g[:, 2 * D:3 * D] + r * g[:, 3 * D:4 * D])
            h = (1.0 - z) * n + z * h                          # state stays f32

        # --- gated readout: one [N,D]@[D,2] matmul (proj_up | gate), then segment sum ---
        pg = jnp.dot(h.astype(matmul_dtype), wpg_ref[...],
                     preferred_element_type=jnp.float32) + bpg_ref[...]         # [N, 2]
        gated = jax.nn.sigmoid(pg[:, 1:2]) * pg[:, 0:1]                         # [N, 1]
        # seg is 0/1 kept in f32 -> exact segment sum.
        out_ref[...] = jnp.dot(seg_ref[...], gated,
                               preferred_element_type=jnp.float32)              # [Gp, 1]

    return kernel


def pack_params(adj, we, be, wih, bih, whh, bhh, wp, bp, wg, bg, matmul_dtype):
    """Host-side packing: fold edge biases, split GRU weights, pack readout heads."""
    E, D, _ = we.shape
    # Fold per-edge-type biases into an exact per-node f32 message bias:
    #   sum_e A_e @ (h W_e + 1 b_e) = sum_e A_e h W_e + sum_e rowsum(A_e)[:,None] * b_e
    deg = jnp.sum(adj, axis=2)                                        # [E, N]
    m_bias = jnp.einsum('en,ed->nd', deg, be[:, 0, :])                # [N, D]  f32

    zero = jnp.zeros((D, D), jnp.float32)
    # message (m) side and hidden (h) side GRU weights, gate order (r, z, n_in, n_hid):
    w_m = jnp.concatenate([wih[0], wih[1], wih[2], zero], axis=1)     # [D, 4D]
    w_h = jnp.concatenate([whh[0], whh[1], zero, whh[2]], axis=1)     # [D, 4D]
    b_gru = jnp.concatenate(
        [bih[0] + bhh[0], bih[1] + bhh[1], bih[2], bhh[2]], axis=1)   # [1, 4D]
    w_pg = jnp.concatenate([wp, wg], axis=1)                          # [D, 2]
    b_pg = jnp.concatenate([bp, bg], axis=1)                          # [1, 2]
    return (adj.astype(matmul_dtype), we.astype(matmul_dtype), m_bias,
            w_m.astype(matmul_dtype), w_h.astype(matmul_dtype), b_gru,
            w_pg.astype(matmul_dtype), b_pg)


def ggnn_forward(h0, adj, we, be, wih, bih, whh, bhh, wp, bp, wg, bg, seg, *, T,
                 matmul_dtype=jnp.bfloat16,
                 node_pad_multiple=8, graph_pad_multiple=8):
    E = adj.shape[0]
    N, D = h0.shape
    G = seg.shape[0]

    # Pad node rows (sublane dim, ideally toward 128 by batching graphs in the caller)
    # and graph rows to hardware-friendly multiples.  Padded nodes have zero adjacency
    # rows/cols and zero segment weight, so they never influence real outputs.
    Np = int(-(-N // node_pad_multiple) * node_pad_multiple)
    Gp = int(-(-G // graph_pad_multiple) * graph_pad_multiple)
    h0p = jnp.pad(h0, ((0, Np - N), (0, 0)))
    adjp = jnp.pad(adj, ((0, 0), (0, Np - N), (0, Np - N)))
    segp = jnp.pad(seg, ((0, Gp - G), (0, Np - N))).astype(jnp.float32)

    packed = pack_params(adjp, we, be, wih, bih, whh, bhh, wp, bp, wg, bg, matmul_dtype)
    args = (h0p, *packed, segp)

    flops = T * (E * 2 * Np * D * D            # per-edge-type projections
                 + E * 2 * Np * Np * D         # message pass
                 + 2 * 2 * Np * D * (4 * D)    # GRU gates (m-side + h-side)
                 ) + 2 * Np * D * 2 + 2 * Gp * Np   # readout projection + segment sum
    transcendentals = T * 3 * Np * D + Np
    bytes_accessed = int(sum(int(a.size) * a.dtype.itemsize for a in args) + Gp * 4)

    kernel = make_ggnn_kernel(T, E, Np, D, matmul_dtype)
    # TODO(synk): for large graphs (Np in the thousands) stream the [E, Np, Np] adjacency
    # from HBM (memory_space=pl.ANY + a node-row-block grid axis marked "parallel" for the
    # v7x 2-TC megacore, contraction blocks "arbitrary" with pl.Buffered(2-3)), and store
    # the 0/1 adjacency in int8 (v5e/v6e) / fp8 (v7x) to halve DMA traffic.
    out = pl.pallas_call(
        kernel,
        out_shape=jax.ShapeDtypeStruct((Gp, 1), jnp.float32),
        in_specs=[pl.BlockSpec(memory_space=pltpu.MemorySpace.VMEM)] * len(args),
        out_specs=pl.BlockSpec(memory_space=pltpu.MemorySpace.VMEM),
        compiler_params=pltpu.CompilerParams(vmem_limit_bytes=32 * 1024 * 1024),
        cost_estimate=pl.CostEstimate(flops=int(flops),
                                      transcendentals=int(transcendentals),
                                      bytes_accessed=bytes_accessed),
    )(*args)
    return out[:G]


def reference(h0, adj, we, be, wih, bih, whh, bhh, wp, bp, wg, bg, seg, T):
    """Pure-JAX f32 reference mirroring the PyTorch forward semantics (unfused)."""
    h = h0
    for _ in range(T):
        m = jnp.zeros_like(h)
        for e in range(adj.shape[0]):
            m = m + adj[e] @ (h @ we[e] + be[e])
        r = jax.nn.sigmoid(m @ wih[0] + bih[0] + h @ whh[0] + bhh[0])
        z = jax.nn.sigmoid(m @ wih[1] + bih[1] + h @ whh[1] + bhh[1])
        n = jnp.tanh(m @ wih[2] + bih[2] + r * (h @ whh[2] + bhh[2]))
        h = (1.0 - z) * n + z * h
    proj_up = h @ wp + bp
    gate = jax.nn.sigmoid(h @ wg + bg)
    return seg @ (gate * proj_up)


if __name__ == "__main__":
    # --- model hyper-parameters (GGNNParams(hidden_layer_size, edge_names, cuda, T)) ---
    D = 32                       # hidden_layer_size
    T = 3                        # propagation steps
    edge_names = ("single", "double")
    E = len(edge_names)

    # --- synthetic StackedNodes: a BATCH of 14 graphs stacked block-diagonally ---
    # (126 nodes total -> padded to 128 rows inside the wrapper, filling MXU rows)
    nodes_per_graph = (7, 9, 8, 10, 7, 11, 9, 8, 10, 9, 7, 11, 8, 12)
    G = len(nodes_per_graph)
    N = sum(nodes_per_graph)
    node_grp_start_with_end = np.cumsum((0,) + nodes_per_graph)

    key = jax.random.PRNGKey(0)
    keys = jax.random.split(key, 12)

    h0 = jax.random.normal(keys[0], (N, D), jnp.float32)          # stacked node features

    # block-diagonal (per-graph) symmetric adjacency per edge type
    adj_np = np.zeros((E, N, N), np.float32)
    rng = np.random.RandomState(0)
    for e in range(E):
        for g in range(G):
            s, t = node_grp_start_with_end[g], node_grp_start_with_end[g + 1]
            blk = (rng.rand(t - s, t - s) < 0.3).astype(np.float32)
            blk = np.triu(blk, 1)
            adj_np[e, s:t, s:t] = blk + blk.T
    adj = jnp.asarray(adj_np)

    # --- deterministic parameters (layout [in, out]; biases broadcastable) ---
    scale = 0.1
    we  = scale * jax.random.normal(keys[1], (E, D, D), jnp.float32)   # per-edge-type Linear(D, D)
    be  = scale * jax.random.normal(keys[2], (E, 1, D), jnp.float32)
    wih = scale * jax.random.normal(keys[3], (3, D, D), jnp.float32)   # GRUCell W_ih, gates (r, z, n)
    bih = scale * jax.random.normal(keys[4], (3, 1, D), jnp.float32)
    whh = scale * jax.random.normal(keys[5], (3, D, D), jnp.float32)   # GRUCell W_hh
    bhh = scale * jax.random.normal(keys[6], (3, 1, D), jnp.float32)
    wp  = scale * jax.random.normal(keys[7], (D, 1), jnp.float32)      # mlp_project_up: Linear(D, 1)
    bp  = scale * jax.random.normal(keys[8], (1, 1), jnp.float32)
    wg  = scale * jax.random.normal(keys[9], (D, 1), jnp.float32)      # mlp_gate: Linear(D, 1)
    bg  = scale * jax.random.normal(keys[10], (1, 1), jnp.float32)

    # one-hot graph membership built from node_grp_start_with_end (host-side glue)
    seg_np = np.zeros((G, N), np.float32)
    for g in range(G):
        seg_np[g, node_grp_start_with_end[g]:node_grp_start_with_end[g + 1]] = 1.0
    seg = jnp.asarray(seg_np)

    ref = reference(h0, adj, we, be, wih, bih, whh, bhh, wp, bp, wg, bg, seg, T)

    # 1) f32 matmul operands: tight semantic check of the fused kernel structure.
    out_f32 = ggnn_forward(h0, adj, we, be, wih, bih, whh, bhh, wp, bp, wg, bg, seg,
                           T=T, matmul_dtype=jnp.float32)
    out_f32 = jax.block_until_ready(out_f32)
    assert out_f32.shape == (G, 1) and out_f32.dtype == jnp.float32
    np.testing.assert_allclose(np.asarray(out_f32), np.asarray(ref), rtol=1e-3, atol=1e-3)

    # 2) bf16 matmul operands with f32 accumulation: the optimized path.  Tolerance covers
    #    the ~2^-9 bf16 operand quantization carried through T=3 GRU steps and the readout
    #    segment sum (biases and the h state / segment sum stay f32).
    out_bf16 = ggnn_forward(h0, adj, we, be, wih, bih, whh, bhh, wp, bp, wg, bg, seg,
                            T=T, matmul_dtype=jnp.bfloat16)
    out_bf16 = jax.block_until_ready(out_bf16)
    assert out_bf16.shape == (G, 1) and out_bf16.dtype == jnp.float32
    np.testing.assert_allclose(np.asarray(out_bf16), np.asarray(ref), rtol=5e-2, atol=5e-2)

    print("KERNEL_OK")
</pallas_src>

<mosaic_0001>
module attributes {stable_mosaic.version = 11 : i64} {
  func.func @kernel(%arg0: memref<128x32xf32, #tpu.memory_space<vmem>>, %arg1: memref<2x128x128xf32, #tpu.memory_space<vmem>>, %arg2: memref<2x32x32xf32, #tpu.memory_space<vmem>>, %arg3: memref<128x32xf32, #tpu.memory_space<vmem>>, %arg4: memref<32x128xf32, #tpu.memory_space<vmem>>, %arg5: memref<32x128xf32, #tpu.memory_space<vmem>>, %arg6: memref<1x128xf32, #tpu.memory_space<vmem>>, %arg7: memref<32x2xf32, #tpu.memory_space<vmem>>, %arg8: memref<1x2xf32, #tpu.memory_space<vmem>>, %arg9: memref<16x128xf32, #tpu.memory_space<vmem>>, %arg10: memref<16x1xf32, #tpu.memory_space<vmem>>) attributes {dimension_semantics = [], scalar_prefetch = 0 : i64, scratch_operands = 0 : i64, tpu.core_type = #tpu.core_type<tc>} {
    %c0 = arith.constant 0 : index
    %c0_0 = arith.constant 0 : index
    %0 = vector.load %arg0[%c0, %c0_0] : memref<128x32xf32, #tpu.memory_space<vmem>>, vector<128x32xf32>
    %c0_1 = arith.constant 0 : index
    %c0_2 = arith.constant 0 : index
    %1 = vector.load %arg3[%c0_1, %c0_2] : memref<128x32xf32, #tpu.memory_space<vmem>>, vector<128x32xf32>
    %c0_3 = arith.constant 0 : index
    %c0_4 = arith.constant 0 : index
    %2 = vector.load %arg4[%c0_3, %c0_4] : memref<32x128xf32, #tpu.memory_space<vmem>>, vector<32x128xf32>
    %c0_5 = arith.constant 0 : index
    %c0_6 = arith.constant 0 : index
    %3 = vector.load %arg5[%c0_5, %c0_6] : memref<32x128xf32, #tpu.memory_space<vmem>>, vector<32x128xf32>
    %c0_7 = arith.constant 0 : index
    %c0_8 = arith.constant 0 : index
    %4 = vector.load %arg6[%c0_7, %c0_8] : memref<1x128xf32, #tpu.memory_space<vmem>>, vector<1x128xf32>
    %5 = vector.shape_cast %4 : vector<1x128xf32> to vector<1x128xf32>
    %6 = vector.broadcast %5 : vector<1x128xf32> to vector<128x128xf32>
    %cst = arith.constant dense<0.000000e+00> : vector<128x128xf32>
    %7 = tpu.matmul %0, %3, %cst {dimension_numbers = #tpu.dot_dimension_numbers<[1], [0], [0], [1], [0, 0, 1, 1], [], []>} : vector<128x32xf32>, vector<32x128xf32>, vector<128x128xf32> -> vector<128x128xf32>
    %c0_9 = arith.constant 0 : index
    %c0_10 = arith.constant 0 : index
    %c0_11 = arith.constant 0 : index
    %8 = vector.load %arg2[%c0_9, %c0_10, %c0_11] : memref<2x32x32xf32, #tpu.memory_space<vmem>>, vector<1x32x32xf32>
    %9 = vector.shape_cast %8 : vector<1x32x32xf32> to vector<32x32xf32>
    %cst_12 = arith.constant dense<0.000000e+00> : vector<128x32xf32>
    %10 = tpu.matmul %0, %9, %cst_12 {dimension_numbers = #tpu.dot_dimension_numbers<[1], [0], [0], [1], [0, 0, 1, 1], [], []>} : vector<128x32xf32>, vector<32x32xf32>, vector<128x32xf32> -> vector<128x32xf32>
    %c0_13 = arith.constant 0 : index
    %c0_14 = arith.constant 0 : index
    %c0_15 = arith.constant 0 : index
    %11 = vector.load %arg1[%c0_13, %c0_14, %c0_15] : memref<2x128x128xf32, #tpu.memory_space<vmem>>, vector<1x128x128xf32>
    %12 = vector.shape_cast %11 : vector<1x128x128xf32> to vector<128x128xf32>
    %cst_16 = arith.constant dense<0.000000e+00> : vector<128x32xf32>
    %13 = tpu.matmul %12, %10, %cst_16 {dimension_numbers = #tpu.dot_dimension_numbers<[1], [0], [0], [1], [0, 0, 1, 1], [], []>} : vector<128x128xf32>, vector<128x32xf32>, vector<128x32xf32> -> vector<128x32xf32>
    %14 = arith.addf %1, %13 : vector<128x32xf32>
    %c1 = arith.constant 1 : index
    %c0_17 = arith.constant 0 : index
    %c0_18 = arith.constant 0 : index
    %15 = vector.load %arg2[%c1, %c0_17, %c0_18] : memref<2x32x32xf32, #tpu.memory_space<vmem>>, vector<1x32x32xf32>
    %16 = vector.shape_cast %15 : vector<1x32x32xf32> to vector<32x32xf32>
    %cst_19 = arith.constant dense<0.000000e+00> : vector<128x32xf32>
    %17 = tpu.matmul %0, %16, %cst_19 {dimension_numbers = #tpu.dot_dimension_numbers<[1], [0], [0], [1], [0, 0, 1, 1], [], []>} : vector<128x32xf32>, vector<32x32xf32>, vector<128x32xf32> -> vector<128x32xf32>
    %c1_20 = arith.constant 1 : index
    %c0_21 = arith.constant 0 : index
    %c0_22 = arith.constant 0 : index
    %18 = vector.load %arg1[%c1_20, %c0_21, %c0_22] : memref<2x128x128xf32, #tpu.memory_space<vmem>>, vector<1x128x128xf32>
    %19 = vector.shape_cast %18 : vector<1x128x128xf32> to vector<128x128xf32>
    %cst_23 = arith.constant dense<0.000000e+00> : vector<128x32xf32>
    %20 = tpu.matmul %19, %17, %cst_23 {dimension_numbers = #tpu.dot_dimension_numbers<[1], [0], [0], [1], [0, 0, 1, 1], [], []>} : vector<128x128xf32>, vector<128x32xf32>, vector<128x32xf32> -> vector<128x32xf32>
    %21 = arith.addf %14, %20 : vector<128x32xf32>
    %cst_24 = arith.constant dense<0.000000e+00> : vector<128x128xf32>
    %22 = tpu.matmul %21, %2, %cst_24 {dimension_numbers = #tpu.dot_dimension_numbers<[1], [0], [0], [1], [0, 0, 1, 1], [], []>} : vector<128x32xf32>, vector<32x128xf32>, vector<128x128xf32> -> vector<128x128xf32>
    %23 = arith.addf %22, %7 : vector<128x128xf32>
    %24 = arith.addf %23, %6 : vector<128x128xf32>
    %25 = vector.extract_strided_slice %24 {offsets = [0, 0], sizes = [128, 64], strides = [1, 1]} : vector<128x128xf32> to vector<128x64xf32>
    %26 = arith.negf %25 : vector<128x64xf32>
    %27 = math.exp %26 : vector<128x64xf32>
    %cst_25 = arith.constant 1.000000e+00 : f32
    %28 = vector.broadcast %cst_25 : f32 to vector<128x64xf32>
    %29 = arith.addf %28, %27 : vector<128x64xf32>
    %30 = arith.divf %28, %29 : vector<128x64xf32>
    %31 = vector.extract_strided_slice %30 {offsets = [0, 0], sizes = [128, 32], strides = [1, 1]} : vector<128x64xf32> to vector<128x32xf32>
    %32 = vector.extract_strided_slice %30 {offsets = [0, 32], sizes = [128, 32], strides = [1, 1]} : vector<128x64xf32> to vector<128x32xf32>
    %33 = vector.extract_strided_slice %24 {offsets = [0, 64], sizes = [128, 32], strides = [1, 1]} : vector<128x128xf32> to vector<128x32xf32>
    %34 = vector.extract_strided_slice %24 {offsets = [0, 96], sizes = [128, 32], strides = [1, 1]} : vector<128x128xf32> to vector<128x32xf32>
    %35 = arith.mulf %31, %34 : vector<128x32xf32>
    %36 = arith.addf %33, %35 : vector<128x32xf32>
    %37 = math.tanh %36 : vector<128x32xf32>
    %cst_26 = arith.constant 1.000000e+00 : f32
    %38 = vector.broadcast %cst_26 : f32 to vector<128x32xf32>
    %39 = arith.subf %38, %32 : vector<128x32xf32>
    %40 = arith.mulf %39, %37 : vector<128x32xf32>
    %41 = arith.mulf %32, %0 : vector<128x32xf32>
    %42 = arith.addf %40, %41 : vector<128x32xf32>
    %cst_27 = arith.constant dense<0.000000e+00> : vector<128x128xf32>
    %43 = tpu.matmul %42, %3, %cst_27 {dimension_numbers = #tpu.dot_dimension_numbers<[1], [0], [0], [1], [0, 0, 1, 1], [], []>} : vector<128x32xf32>, vector<32x128xf32>, vector<128x128xf32> -> vector<128x128xf32>
    %c0_28 = arith.constant 0 : index
    %c0_29 = arith.constant 0 : index
    %c0_30 = arith.constant 0 : index
    %44 = vector.load %arg2[%c0_28, %c0_29, %c0_30] : memref<2x32x32xf32, #tpu.memory_space<vmem>>, vector<1x32x32xf32>
    %45 = vector.shape_cast %44 : vector<1x32x32xf32> to vector<32x32xf32>
    %cst_31 = arith.constant dense<0.000000e+00> : vector<128x32xf32>
    %46 = tpu.matmul %42, %45, %cst_31 {dimension_numbers = #tpu.dot_dimension_numbers<[1], [0], [0], [1], [0, 0, 1, 1], [], []>} : vector<128x32xf32>, vector<32x32xf32>, vector<128x32xf32> -> vector<128x32xf32>
    %c0_32 = arith.constant 0 : index
    %c0_33 = arith.constant 0 : index
    %c0_34 = arith.constant 0 : index
    %47 = vector.load %arg1[%c0_32, %c0_33, %c0_34] : memref<2x128x128xf32, #tpu.memory_space<vmem>>, vector<1x128x128xf32>
    %48 = vector.shape_cast %47 : vector<1x128x128xf32> to vector<128x128xf32>
    %cst_35 = arith.constant dense<0.000000e+00> : vector<128x32xf32>
    %49 = tpu.matmul %48, %46, %cst_35 {dimension_numbers = #tpu.dot_dimension_numbers<[1], [0], [0], [1], [0, 0, 1, 1], [], []>} : vector<128x128xf32>, vector<128x32xf32>, vector<128x32xf32> -> vector<128x32xf32>
    %50 = arith.addf %1, %49 : vector<128x32xf32>
    %c1_36 = arith.constant 1 : index
    %c0_37 = arith.constant 0 : index
    %c0_38 = arith.constant 0 : index
    %51 = vector.load %arg2[%c1_36, %c0_37, %c0_38] : memref<2x32x32xf32, #tpu.memory_space<vmem>>, vector<1x32x32xf32>
    %52 = vector.shape_cast %51 : vector<1x32x32xf32> to vector<32x32xf32>
    %cst_39 = arith.constant dense<0.000000e+00> : vector<128x32xf32>
    %53 = tpu.matmul %42, %52, %cst_39 {dimension_numbers = #tpu.dot_dimension_numbers<[1], [0], [0], [1], [0, 0, 1, 1], [], []>} : vector<128x32xf32>, vector<32x32xf32>, vector<128x32xf32> -> vector<128x32xf32>
    %c1_40 = arith.constant 1 : index
    %c0_41 = arith.constant 0 : index
    %c0_42 = arith.constant 0 : index
    %54 = vector.load %arg1[%c1_40, %c0_41, %c0_42] : memref<2x128x128xf32, #tpu.memory_space<vmem>>, vector<1x128x128xf32>
    %55 = vector.shape_cast %54 : vector<1x128x128xf32> to vector<128x128xf32>
    %cst_43 = arith.constant dense<0.000000e+00> : vector<128x32xf32>
    %56 = tpu.matmul %55, %53, %cst_43 {dimension_numbers = #tpu.dot_dimension_numbers<[1], [0], [0], [1], [0, 0, 1, 1], [], []>} : vector<128x128xf32>, vector<128x32xf32>, vector<128x32xf32> -> vector<128x32xf32>
    %57 = arith.addf %50, %56 : vector<128x32xf32>
    %cst_44 = arith.constant dense<0.000000e+00> : vector<128x128xf32>
    %58 = tpu.matmul %57, %2, %cst_44 {dimension_numbers = #tpu.dot_dimension_numbers<[1], [0], [0], [1], [0, 0, 1, 1], [], []>} : vector<128x32xf32>, vector<32x128xf32>, vector<128x128xf32> -> vector<128x128xf32>
    %59 = arith.addf %58, %43 : vector<128x128xf32>
    %60 = arith.addf %59, %6 : vector<128x128xf32>
    %61 = vector.extract_strided_slice %60 {offsets = [0, 0], sizes = [128, 64], strides = [1, 1]} : vector<128x128xf32> to vector<128x64xf32>
    %62 = arith.negf %61 : vector<128x64xf32>
    %63 = math.exp %62 : vector<128x64xf32>
    %cst_45 = arith.constant 1.000000e+00 : f32
    %64 = vector.broadcast %cst_45 : f32 to vector<128x64xf32>
    %65 = arith.addf %64, %63 : vector<128x64xf32>
    %66 = arith.divf %64, %65 : vector<128x64xf32>
    %67 = vector.extract_strided_slice %66 {offsets = [0, 0], sizes = [128, 32], strides = [1, 1]} : vector<128x64xf32> to vector<128x32xf32>
    %68 = vector.extract_strided_slice %66 {offsets = [0, 32], sizes = [128, 32], strides = [1, 1]} : vector<128x64xf32> to vector<128x32xf32>
    %69 = vector.extract_strided_slice %60 {offsets = [0, 64], sizes = [128, 32], strides = [1, 1]} : vector<128x128xf32> to vector<128x32xf32>
    %70 = vector.extract_strided_slice %60 {offsets = [0, 96], sizes = [128, 32], strides = [1, 1]} : vector<128x128xf32> to vector<128x32xf32>
    %71 = arith.mulf %67, %70 : vector<128x32xf32>
    %72 = arith.addf %69, %71 : vector<128x32xf32>
    %73 = math.tanh %72 : vector<128x32xf32>
    %cst_46 = arith.constant 1.000000e+00 : f32
    %74 = vector.broadcast %cst_46 : f32 to vector<128x32xf32>
    %75 = arith.subf %74, %68 : vector<128x32xf32>
    %76 = arith.mulf %75, %73 : vector<128x32xf32>
    %77 = arith.mulf %68, %42 : vector<128x32xf32>
    %78 = arith.addf %76, %77 : vector<128x32xf32>
    %cst_47 = arith.constant dense<0.000000e+00> : vector<128x128xf32>
    %79 = tpu.matmul %78, %3, %cst_47 {dimension_numbers = #tpu.dot_dimension_numbers<[1], [0], [0], [1], [0, 0, 1, 1], [], []>} : vector<128x32xf32>, vector<32x128xf32>, vector<128x128xf32> -> vector<128x128xf32>
    %c0_48 = arith.constant 0 : index
    %c0_49 = arith.constant 0 : index
    %c0_50 = arith.constant 0 : index
    %80 = vector.load %arg2[%c0_48, %c0_49, %c0_50] : memref<2x32x32xf32, #tpu.memory_space<vmem>>, vector<1x32x32xf32>
    %81 = vector.shape_cast %80 : vector<1x32x32xf32> to vector<32x32xf32>
    %cst_51 = arith.constant dense<0.000000e+00> : vector<128x32xf32>
    %82 = tpu.matmul %78, %81, %cst_51 {dimension_numbers = #tpu.dot_dimension_numbers<[1], [0], [0], [1], [0, 0, 1, 1], [], []>} : vector<128x32xf32>, vector<32x32xf32>, vector<128x32xf32> -> vector<128x32xf32>
    %c0_52 = arith.constant 0 : index
    %c0_53 = arith.constant 0 : index
    %c0_54 = arith.constant 0 : index
    %83 = vector.load %arg1[%c0_52, %c0_53, %c0_54] : memref<2x128x128xf32, #tpu.memory_space<vmem>>, vector<1x128x128xf32>
    %84 = vector.shape_cast %83 : vector<1x128x128xf32> to vector<128x128xf32>
    %cst_55 = arith.constant dense<0.000000e+00> : vector<128x32xf32>
    %85 = tpu.matmul %84, %82, %cst_55 {dimension_numbers = #tpu.dot_dimension_numbers<[1], [0], [0], [1], [0, 0, 1, 1], [], []>} : vector<128x128xf32>, vector<128x32xf32>, vector<128x32xf32> -> vector<128x32xf32>
    %86 = arith.addf %1, %85 : vector<128x32xf32>
    %c1_56 = arith.constant 1 : index
    %c0_57 = arith.constant 0 : index
    %c0_58 = arith.constant 0 : index
    %87 = vector.load %arg2[%c1_56, %c0_57, %c0_58] : memref<2x32x32xf32, #tpu.memory_space<vmem>>, vector<1x32x32xf32>
    %88 = vector.shape_cast %87 : vector<1x32x32xf32> to vector<32x32xf32>
    %cst_59 = arith.constant dense<0.000000e+00> : vector<128x32xf32>
    %89 = tpu.matmul %78, %88, %cst_59 {dimension_numbers = #tpu.dot_dimension_numbers<[1], [0], [0], [1], [0, 0, 1, 1], [], []>} : vector<128x32xf32>, vector<32x32xf32>, vector<128x32xf32> -> vector<128x32xf32>
    %c1_60 = arith.constant 1 : index
    %c0_61 = arith.constant 0 : index
    %c0_62 = arith.constant 0 : index
    %90 = vector.load %arg1[%c1_60, %c0_61, %c0_62] : memref<2x128x128xf32, #tpu.memory_space<vmem>>, vector<1x128x128xf32>
    %91 = vector.shape_cast %90 : vector<1x128x128xf32> to vector<128x128xf32>
    %cst_63 = arith.constant dense<0.000000e+00> : vector<128x32xf32>
    %92 = tpu.matmul %91, %89, %cst_63 {dimension_numbers = #tpu.dot_dimension_numbers<[1], [0], [0], [1], [0, 0, 1, 1], [], []>} : vector<128x128xf32>, vector<128x32xf32>, vector<128x32xf32> -> vector<128x32xf32>
    %93 = arith.addf %86, %92 : vector<128x32xf32>
    %cst_64 = arith.constant dense<0.000000e+00> : vector<128x128xf32>
    %94 = tpu.matmul %93, %2, %cst_64 {dimension_numbers = #tpu.dot_dimension_numbers<[1], [0], [0], [1], [0, 0, 1, 1], [], []>} : vector<128x32xf32>, vector<32x128xf32>, vector<128x128xf32> -> vector<128x128xf32>
    %95 = arith.addf %94, %79 : vector<128x128xf32>
    %96 = arith.addf %95, %6 : vector<128x128xf32>
    %97 = vector.extract_strided_slice %96 {offsets = [0, 0], sizes = [128, 64], strides = [1, 1]} : vector<128x128xf32> to vector<128x64xf32>
    %98 = arith.negf %97 : vector<128x64xf32>
    %99 = math.exp %98 : vector<128x64xf32>
    %cst_65 = arith.constant 1.000000e+00 : f32
    %100 = vector.broadcast %cst_65 : f32 to vector<128x64xf32>
    %101 = arith.addf %100, %99 : vector<128x64xf32>
    %102 = arith.divf %100, %101 : vector<128x64xf32>
    %103 = vector.extract_strided_slice %102 {offsets = [0, 0], sizes = [128, 32], strides = [1, 1]} : vector<128x64xf32> to vector<128x32xf32>
    %104 = vector.extract_strided_slice %102 {offsets = [0, 32], sizes = [128, 32], strides = [1, 1]} : vector<128x64xf32> to vector<128x32xf32>
    %105 = vector.extract_strided_slice %96 {offsets = [0, 64], sizes = [128, 32], strides = [1, 1]} : vector<128x128xf32> to vector<128x32xf32>
    %106 = vector.extract_strided_slice %96 {offsets = [0, 96], sizes = [128, 32], strides = [1, 1]} : vector<128x128xf32> to vector<128x32xf32>
    %107 = arith.mulf %103, %106 : vector<128x32xf32>
    %108 = arith.addf %105, %107 : vector<128x32xf32>
    %109 = math.tanh %108 : vector<128x32xf32>
    %cst_66 = arith.constant 1.000000e+00 : f32
    %110 = vector.broadcast %cst_66 : f32 to vector<128x32xf32>
    %111 = arith.subf %110, %104 : vector<128x32xf32>
    %112 = arith.mulf %111, %109 : vector<128x32xf32>
    %113 = arith.mulf %104, %78 : vector<128x32xf32>
    %114 = arith.addf %112, %113 : vector<128x32xf32>
    %c0_67 = arith.constant 0 : index
    %c0_68 = arith.constant 0 : index
    %115 = vector.load %arg7[%c0_67, %c0_68] : memref<32x2xf32, #tpu.memory_space<vmem>>, vector<32x2xf32>
    %cst_69 = arith.constant dense<0.000000e+00> : vector<128x2xf32>
    %116 = tpu.matmul %114, %115, %cst_69 {dimension_numbers = #tpu.dot_dimension_numbers<[1], [0], [0], [1], [0, 0, 1, 1], [], []>} : vector<128x32xf32>, vector<32x2xf32>, vector<128x2xf32> -> vector<128x2xf32>
    %c0_70 = arith.constant 0 : index
    %c0_71 = arith.constant 0 : index
    %117 = vector.load %arg8[%c0_70, %c0_71] : memref<1x2xf32, #tpu.memory_space<vmem>>, vector<1x2xf32>
    %118 = vector.broadcast %117 : vector<1x2xf32> to vector<128x2xf32>
    %119 = arith.addf %116, %118 : vector<128x2xf32>
    %120 = vector.extract_strided_slice %119 {offsets = [0, 1], sizes = [128, 1], strides = [1, 1]} : vector<128x2xf32> to vector<128x1xf32>
    %121 = arith.negf %120 : vector<128x1xf32>
    %122 = math.exp %121 : vector<128x1xf32>
    %cst_72 = arith.constant 1.000000e+00 : f32
    %123 = vector.broadcast %cst_72 : f32 to vector<128x1xf32>
    %124 = arith.addf %123, %122 : vector<128x1xf32>
    %125 = arith.divf %123, %124 : vector<128x1xf32>
    %126 = vector.extract_strided_slice %119 {offsets = [0, 0], sizes = [128, 1], strides = [1, 1]} : vector<128x2xf32> to vector<128x1xf32>
    %127 = arith.mulf %125, %126 : vector<128x1xf32>
    %c0_73 = arith.constant 0 : index
    %c0_74 = arith.constant 0 : index
    %128 = vector.load %arg9[%c0_73, %c0_74] : memref<16x128xf32, #tpu.memory_space<vmem>>, vector<16x128xf32>
    %cst_75 = arith.constant dense<0.000000e+00> : vector<16x1xf32>
    %129 = tpu.matmul %128, %127, %cst_75 {dimension_numbers = #tpu.dot_dimension_numbers<[1], [0], [0], [1], [0, 0, 1, 1], [], []>} : vector<16x128xf32>, vector<128x1xf32>, vector<16x1xf32> -> vector<16x1xf32>
    %c0_76 = arith.constant 0 : index
    %c0_77 = arith.constant 0 : index
    %130 = vector.load %arg10[%c0_76, %c0_77] : memref<16x1xf32, #tpu.memory_space<vmem>>, vector<16x1xf32>
    tpu.vector_store %arg10[%c0_76, %c0_77], %129 {strides = array<i32>} : memref<16x1xf32, #tpu.memory_space<vmem>>, vector<16x1xf32>,
    return
  }
}

</mosaic_0001>

<llo_original>
// kernel: tpu_custom_call.1
$region0: #{tpu_custom_call.1}
  #allocation0 [shape = 'u32[]', space=smem, size = 0x4, offset = 0x4, fixed_abs, tag = 'smem constant byte address 0x4 - core index']
  #allocation1 [shape = 'u32[72,128]{1,0:T(1,128)}', space=vmem, size = 0x9000, scoped, tag = 'internal scratch']
  %s0 = inlined_call_operand.vmem [shape: f32[128,32], index: 0, kind: input, shape index: {}]
  %s1 = inlined_call_operand.vmem [shape: f32[2,128,128], index: 1, kind: input, shape index: {}]
  %s2 = inlined_call_operand.vmem [shape: f32[2,32,32], index: 2, kind: input, shape index: {}]
  %s3 = inlined_call_operand.vmem [shape: f32[128,32], index: 3, kind: input, shape index: {}]
  %s4 = inlined_call_operand.hbm [shape: f32[32,128], index: 4, kind: input, shape index: {}]
  %s5 = inlined_call_operand.hbm [shape: f32[32,128], index: 5, kind: input, shape index: {}]
  %s6 = inlined_call_operand.vmem [shape: f32[1,128], index: 6, kind: input, shape index: {}]
  %s7 = inlined_call_operand.vmem [shape: f32[32,2], index: 7, kind: input, shape index: {}]
  %s8 = inlined_call_operand.vmem [shape: f32[1,2], index: 8, kind: input, shape index: {}]
  %s9 = inlined_call_operand.hbm [shape: f32[16,128], index: 9, kind: input, shape index: {}]
  %s10 = inlined_call_operand.vmem [shape: f32[16,1], index: 10, kind: output, shape index: {}]
  %s11 = sld [smem:[#allocation0]]
  $region62: #{tpu_custom_call.1} parent=0
    _
  %s13 = ssub.s32 1, %s11
  %s14 = scalar_select 0, %s13, %s11
  $region1: #{tpu_custom_call.1} parent=0
    #allocation2 [shape = 'u8[16384]{0}', space=vmem, size = 0x4000, scoped, tag = 'input window, operand 4, single buffered']
    #allocation3 [shape = 's32[1]{0}', space=sflag, size = 0x4, scoped, tag = 'scoped memory for tpu_custom_call.1']
    #allocation4 [shape = 'u8[16384]{0}', space=vmem, size = 0x4000, scoped, tag = 'input window, operand 5, single buffered']
    #allocation5 [shape = 's32[1]{0}', space=sflag, size = 0x4, scoped, tag = 'scoped memory for tpu_custom_call.1']
    #allocation6 [shape = 'u8[8192]{0}', space=vmem, size = 0x2000, scoped, tag = 'input window, operand 9, single buffered']
    %15 = vsyncpa [#allocation3], 0
    %16 = vsyncpa [#allocation5], 0
    // Predicated region
    $region2: #{tpu_custom_call.1} parent=1 // pred_check
      _
    $region3: #{tpu_custom_call.1} parent=1 // pred_check_branch
      %18 = sbr.rel (0) target = $region5
    $region4: #{tpu_custom_call.1} parent=1 // pred_region
      _
    $region5: #{tpu_custom_call.1} parent=1 // pred_fallthru
      _
    // Predicated region
    $region6: #{tpu_custom_call.1} parent=1 // pred_check
      _
    $region7: #{tpu_custom_call.1} parent=1 // pred_check_branch
      %20 = sbr.rel (0) target = $region9
    $region8: #{tpu_custom_call.1} parent=1 // pred_region
      _
    $region9: #{tpu_custom_call.1} parent=1 // pred_fallthru
      _
    // Predicated region
    $region10: #{tpu_custom_call.1} parent=1 // pred_check
      _
    $region11: #{tpu_custom_call.1} parent=1 // pred_check_branch
      %22 = sbr.rel (0) target = $region13
    $region12: #{tpu_custom_call.1} parent=1 // pred_region
      _
    $region13: #{tpu_custom_call.1} parent=1 // pred_fallthru
      _
    // Predicated region
    $region14: #{tpu_custom_call.1} parent=1 // pred_check
      _
    $region15: #{tpu_custom_call.1} parent=1 // pred_check_branch
      %24 = sbr.rel (0) target = $region17
    $region16: #{tpu_custom_call.1} parent=1 // pred_region
      _
    $region17: #{tpu_custom_call.1} parent=1 // pred_fallthru
      _
    // Predicated region
    $region18: #{tpu_custom_call.1} parent=1 // pred_check
      _
    $region19: #{tpu_custom_call.1} parent=1 // pred_check_branch
      %26 = sbr.rel (0) target = $region21
    $region20: #{tpu_custom_call.1} parent=1 // pred_region
      %28 = vsyncadd [#allocation3], 0
      %s29 = sshll.u32 %s4, 4
      %s30 = int_to_ptr.hbm [resolvable:$true] %s29
      %s31 = sshll.u32 [#allocation2], 4
      %s32 = int_to_ptr.vmem [resolvable:$true] %s31
      %37 = dma.hbm_to_vmem [thread:$0]  %s30, 512, %s32, [#allocation3], 128, 128, 8
    $region21: #{tpu_custom_call.1} parent=1 // pred_fallthru
      _
    // Predicated region
    $region22: #{tpu_custom_call.1} parent=1 // pred_check
      _
    $region23: #{tpu_custom_call.1} parent=1 // pred_check_branch
      %39 = sbr.rel (0) target = $region25
    $region24: #{tpu_custom_call.1} parent=1 // pred_region
      %41 = vsyncadd [#allocation5], 0
      %s42 = sshll.u32 %s5, 4
      %s43 = int_to_ptr.hbm [resolvable:$true] %s42
      %s44 = sshll.u32 [#allocation4], 4
      %s45 = int_to_ptr.vmem [resolvable:$true] %s44
      %50 = dma.hbm_to_vmem [thread:$0]  %s43, 512, %s45, [#allocation5], 128, 128, 8
    $region25: #{tpu_custom_call.1} parent=1 // pred_fallthru
      _
    // Predicated region
    $region26: #{tpu_custom_call.1} parent=1 // pred_check
      _
    $region27: #{tpu_custom_call.1} parent=1 // pred_check_branch
      %52 = sbr.rel (0) target = $region29
    $region28: #{tpu_custom_call.1} parent=1 // pred_region
      _
    $region29: #{tpu_custom_call.1} parent=1 // pred_fallthru
      _
    // Predicated region
    $region30: #{tpu_custom_call.1} parent=1 // pred_check
      _
    $region31: #{tpu_custom_call.1} parent=1 // pred_check_branch
      %54 = sbr.rel (0) target = $region33
    $region32: #{tpu_custom_call.1} parent=1 // pred_region
      _
    $region33: #{tpu_custom_call.1} parent=1 // pred_fallthru
      _
    // Predicated region
    $region34: #{tpu_custom_call.1} parent=1 // pred_check
      _
    $region35: #{tpu_custom_call.1} parent=1 // pred_check_branch
      %56 = sbr.rel (0) target = $region37
    $region36: #{tpu_custom_call.1} parent=1 // pred_region
      _
    $region37: #{tpu_custom_call.1} parent=1 // pred_fallthru
      _
    // Predicated region
    $region38: #{tpu_custom_call.1} parent=1 // pred_check
      _
    $region39: #{tpu_custom_call.1} parent=1 // pred_check_branch
      %58 = sbr.rel (0) target = $region41
    $region40: #{tpu_custom_call.1} parent=1 // pred_region
      %60 = vsyncadd [#allocation5], 0
      %s61 = sshll.u32 %s9, 4
      %s62 = int_to_ptr.hbm [resolvable:$true] %s61
      %s63 = sshll.u32 [#allocation6], 4
      %s64 = int_to_ptr.vmem [resolvable:$true] %s63
      %69 = dma.hbm_to_vmem [thread:$0]  %s62, 256, %s64, [#allocation5], 128, 128, 8
    $region41: #{tpu_custom_call.1} parent=1 // pred_fallthru
      _
    // Predicated region
    $region42: #{tpu_custom_call.1} parent=1 // pred_check
      _
    $region43: #{tpu_custom_call.1} parent=1 // pred_check_branch
      %71 = sbr.rel (0) target = $region45
    $region44: #{tpu_custom_call.1} parent=1 // pred_region
      %73 = dma.done [#allocation3], 512
    $region45: #{tpu_custom_call.1} parent=1 // pred_fallthru
      _
    // Predicated region
    $region46: #{tpu_custom_call.1} parent=1 // pred_check
      _
    $region47: #{tpu_custom_call.1} parent=1 // pred_check_branch
      %75 = sbr.rel (0) target = $region49
    $region48: #{tpu_custom_call.1} parent=1 // pred_region
      %77 = dma.done [#allocation5], 512
    $region49: #{tpu_custom_call.1} parent=1 // pred_fallthru
      _
    // Predicated region
    $region50: #{tpu_custom_call.1} parent=1 // pred_check
      _
    $region51: #{tpu_custom_call.1} parent=1 // pred_check_branch
      %79 = sbr.rel (0) target = $region53
    $region52: #{tpu_custom_call.1} parent=1 // pred_region
      %81 = dma.done [#allocation5], 256
    $region53: #{tpu_custom_call.1} parent=1 // pred_fallthru
      _
    %v82 = vld [vmem:[%s0] sm:$0xff]
    %v83 = vld [vmem:[%s0 + $0x8] sm:$0xff]
    %v84 = vld [vmem:[%s0 + $0x10] sm:$0xff]
    %v85 = vld [vmem:[%s0 + $0x18] sm:$0xff]
    %v86 = vld [vmem:[%s0 + $0x20] sm:$0xff]
    %v87 = vld [vmem:[%s0 + $0x28] sm:$0xff]
    %v88 = vld [vmem:[%s0 + $0x30] sm:$0xff]
    %v89 = vld [vmem:[%s0 + $0x38] sm:$0xff]
    %v90 = vld [vmem:[%s0 + $0x40] sm:$0xff]
    %v91 = vld [vmem:[%s0 + $0x48] sm:$0xff]
    %v92 = vld [vmem:[%s0 + $0x50] sm:$0xff]
    %v93 = vld [vmem:[%s0 + $0x58] sm:$0xff]
    %v94 = vld [vmem:[%s0 + $0x60] sm:$0xff]
    %v95 = vld [vmem:[%s0 + $0x68] sm:$0xff]
    %v96 = vld [vmem:[%s0 + $0x70] sm:$0xff]
    %v97 = vld [vmem:[%s0 + $0x78] sm:$0xff]
    %v98 = vld [vmem:[%s3] sm:$0xff]
    %v99 = vld [vmem:[%s3 + $0x8] sm:$0xff]
    %v100 = vld [vmem:[%s3 + $0x10] sm:$0xff]
    %v101 = vld [vmem:[%s3 + $0x18] sm:$0xff]
    %v102 = vld [vmem:[%s3 + $0x20] sm:$0xff]
    %v103 = vld [vmem:[%s3 + $0x28] sm:$0xff]
    %v104 = vld [vmem:[%s3 + $0x30] sm:$0xff]
    %v105 = vld [vmem:[%s3 + $0x38] sm:$0xff]
    %v106 = vld [vmem:[%s3 + $0x40] sm:$0xff]
    %v107 = vld [vmem:[%s3 + $0x48] sm:$0xff]
    %v108 = vld [vmem:[%s3 + $0x50] sm:$0xff]
    %v109 = vld [vmem:[%s3 + $0x58] sm:$0xff]
    %v110 = vld [vmem:[%s3 + $0x60] sm:$0xff]
    %v111 = vld [vmem:[%s3 + $0x68] sm:$0xff]
    %v112 = vld [vmem:[%s3 + $0x70] sm:$0xff]
    %v113 = vld [vmem:[%s3 + $0x78] sm:$0xff]
    %v114 = vld [vmem:[#allocation2] sm:$0xff]
    %v115 = vld [vmem:[#allocation2 + $0x8] sm:$0xff]
    %v116 = vld [vmem:[#allocation2 + $0x10] sm:$0xff]
    %v117 = vld [vmem:[#allocation2 + $0x18] sm:$0xff]
    %v118 = vld [vmem:[#allocation4] sm:$0xff]
    %v119 = vld [vmem:[#allocation4 + $0x8] sm:$0xff]
    %v120 = vld [vmem:[#allocation4 + $0x10] sm:$0xff]
    %v121 = vld [vmem:[#allocation4 + $0x18] sm:$0xff]
    %v122 = vld [vmem:[%s6] sm:$0x1]
    %v124 = vperm.slane %v122, 0
    %vm126 = vcmask 261120
    %v128 = vsel %vm126, %v82, 0
    %v131 = vsel %vm126, %v83, 0
    %v134 = vsel %vm126, %v84, 0
    %v137 = vsel %vm126, %v85, 0
    %v140 = vsel %vm126, %v86, 0
    %v143 = vsel %vm126, %v87, 0
    %v146 = vsel %vm126, %v88, 0
    %v149 = vsel %vm126, %v89, 0
    %v152 = vsel %vm126, %v90, 0
    %v155 = vsel %vm126, %v91, 0
    %v158 = vsel %vm126, %v92, 0
    %v161 = vsel %vm126, %v93, 0
    %v164 = vsel %vm126, %v94, 0
    %v167 = vsel %vm126, %v95, 0
    %v170 = vsel %vm126, %v96, 0
    %v173 = vsel %vm126, %v97, 0
    %175 = vmatpush.msra.mxu0 0.0
    %176 = vmatpush.msra.mxu0 0.0
    %177 = vmatpush.msra.mxu0 0.0
    %178 = vmatpush.msra.mxu0 0.0
    %179 = vmatpush.msra.mxu0 0.0
    %180 = vmatpush.msra.mxu0 0.0
    %181 = vmatpush.msra.mxu0 0.0
    %182 = vmatpush.msra.mxu0 0.0
    %183 = vmatpush.msra.mxu0 0.0
    %184 = vmatpush.msra.mxu0 0.0
    %185 = vmatpush.msra.mxu0 0.0
    %186 = vmatpush.msra.mxu0 0.0
    %187 = vmatpush.msra.mxu0 %v121
    %188 = vmatpush.msra.mxu0 %v120
    %189 = vmatpush.msra.mxu0 %v119
    %190 = vmatpush.msra.mxu0 %v118
    %191 = vmatmul.f32.gmra.mxu0 %v128
    %v192 = vpop.f32.mrf.mxu0
    %v193 = vadd.f32 0.0, %v192
    %194 = vmatmul.f32.gmra.mxu0 %v131
    %v195 = vpop.f32.mrf.mxu0
    %v196 = vadd.f32 0.0, %v195
    %197 = vmatmul.f32.gmra.mxu0 %v134
    %v198 = vpop.f32.mrf.mxu0
    %v199 = vadd.f32 0.0, %v198
    %200 = vmatmul.f32.gmra.mxu0 %v137
    %v201 = vpop.f32.mrf.mxu0
    %v202 = vadd.f32 0.0, %v201
    %203 = vmatmul.f32.gmra.mxu0 %v140
    %v204 = vpop.f32.mrf.mxu0
    %v205 = vadd.f32 0.0, %v204
    %206 = vmatmul.f32.gmra.mxu0 %v143
    %v207 = vpop.f32.mrf.mxu0
    %v208 = vadd.f32 0.0, %v207
    %209 = vmatmul.f32.gmra.mxu0 %v146
    %v210 = vpop.f32.mrf.mxu0
    %v211 = vadd.f32 0.0, %v210
    %212 = vmatmul.f32.gmra.mxu0 %v149
    %v213 = vpop.f32.mrf.mxu0
    %v214 = vadd.f32 0.0, %v213
    %215 = vmatmul.f32.gmra.mxu0 %v152
    %v216 = vpop.f32.mrf.mxu0
    %v217 = vadd.f32 0.0, %v216
    %218 = vmatmul.f32.gmra.mxu0 %v155
    %v219 = vpop.f32.mrf.mxu0
    %v220 = vadd.f32 0.0, %v219
    %221 = vmatmul.f32.gmra.mxu0 %v158
    %v222 = vpop.f32.mrf.mxu0
    %v223 = vadd.f32 0.0, %v222
    %224 = vmatmul.f32.gmra.mxu0 %v161
    %v225 = vpop.f32.mrf.mxu0
    %v226 = vadd.f32 0.0, %v225
    %227 = vmatmul.f32.gmra.mxu0 %v164
    %v228 = vpop.f32.mrf.mxu0
    %v229 = vadd.f32 0.0, %v228
    %230 = vmatmul.f32.gmra.mxu0 %v167
    %v231 = vpop.f32.mrf.mxu0
    %v232 = vadd.f32 0.0, %v231
    %233 = vmatmul.f32.gmra.mxu0 %v170
    %v234 = vpop.f32.mrf.mxu0
    %v235 = vadd.f32 0.0, %v234
    %236 = vmatmul.f32.gmra.mxu0 %v173
    %v237 = vpop.f32.mrf.mxu0
    %v238 = vadd.f32 0.0, %v237
    %239 = vdwg.mxu0
    %v240 = vld [vmem:[%s2] sm:$0xff]
    %v241 = vld [vmem:[%s2 + $0x8] sm:$0xff]
    %v242 = vld [vmem:[%s2 + $0x10] sm:$0xff]
    %v243 = vld [vmem:[%s2 + $0x18] sm:$0xff]
    %244 = vmatpush.msra.mxu0 0.0
    %245 = vmatpush.msra.mxu0 0.0
    %246 = vmatpush.msra.mxu0 0.0
    %247 = vmatpush.msra.mxu0 0.0
    %248 = vmatpush.msra.mxu0 0.0
    %249 = vmatpush.msra.mxu0 0.0
    %250 = vmatpush.msra.mxu0 0.0
    %251 = vmatpush.msra.mxu0 0.0
    %252 = vmatpush.msra.mxu0 0.0
    %253 = vmatpush.msra.mxu0 0.0
    %254 = vmatpush.msra.mxu0 0.0
    %255 = vmatpush.msra.mxu0 0.0
    %256 = vmatpush.msra.mxu0 %v243
    %257 = vmatpush.msra.mxu0 %v242
    %258 = vmatpush.msra.mxu0 %v241
    %259 = vmatpush.msra.mxu0 %v240
    %260 = vmatmul.f32.gmra.mxu0 %v128
    %v261 = vpop.f32.mrf.mxu0
    %v262 = vadd.f32 0.0, %v261
    %263 = vmatmul.f32.gmra.mxu0 %v131
    %v264 = vpop.f32.mrf.mxu0
    %v265 = vadd.f32 0.0, %v264
    %266 = vmatmul.f32.gmra.mxu0 %v134
    %v267 = vpop.f32.mrf.mxu0
    %v268 = vadd.f32 0.0, %v267
    %269 = vmatmul.f32.gmra.mxu0 %v137
    %v270 = vpop.f32.mrf.mxu0
    %v271 = vadd.f32 0.0, %v270
    %272 = vmatmul.f32.gmra.mxu0 %v140
    %v273 = vpop.f32.mrf.mxu0
    %v274 = vadd.f32 0.0, %v273
    %275 = vmatmul.f32.gmra.mxu0 %v143
    %v276 = vpop.f32.mrf.mxu0
    %v277 = vadd.f32 0.0, %v276
    %278 = vmatmul.f32.gmra.mxu0 %v146
    %v279 = vpop.f32.mrf.mxu0
    %v280 = vadd.f32 0.0, %v279
    %281 = vmatmul.f32.gmra.mxu0 %v149
    %v282 = vpop.f32.mrf.mxu0
    %v283 = vadd.f32 0.0, %v282
    %284 = vmatmul.f32.gmra.mxu0 %v152
    %v285 = vpop.f32.mrf.mxu0
    %v286 = vadd.f32 0.0, %v285
    %287 = vmatmul.f32.gmra.mxu0 %v155
    %v288 = vpop.f32.mrf.mxu0
    %v289 = vadd.f32 0.0, %v288
    %290 = vmatmul.f32.gmra.mxu0 %v158
    %v291 = vpop.f32.mrf.mxu0
    %v292 = vadd.f32 0.0, %v291
    %293 = vmatmul.f32.gmra.mxu0 %v161
    %v294 = vpop.f32.mrf.mxu0
    %v295 = vadd.f32 0.0, %v294
    %296 = vmatmul.f32.gmra.mxu0 %v164
    %v297 = vpop.f32.mrf.mxu0
    %v298 = vadd.f32 0.0, %v297
    %299 = vmatmul.f32.gmra.mxu0 %v167
    %v300 = vpop.f32.mrf.mxu0
    %v301 = vadd.f32 0.0, %v300
    %302 = vmatmul.f32.gmra.mxu0 %v170
    %v303 = vpop.f32.mrf.mxu0
    %v304 = vadd.f32 0.0, %v303
    %305 = vmatmul.f32.gmra.mxu0 %v173
    %v306 = vpop.f32.mrf.mxu0
    %v307 = vadd.f32 0.0, %v306
    %308 = vdwg.mxu0
    %v309 = vld [vmem:[%s1] sm:$0xff]
    %v310 = vld [vmem:[%s1 + $0x8] sm:$0xff]
    %v311 = vld [vmem:[%s1 + $0x10] sm:$0xff]
    %v312 = vld [vmem:[%s1 + $0x18] sm:$0xff]
    %v313 = vld [vmem:[%s1 + $0x20] sm:$0xff]
    %v314 = vld [vmem:[%s1 + $0x28] sm:$0xff]
    %v315 = vld [vmem:[%s1 + $0x30] sm:$0xff]
    %v316 = vld [vmem:[%s1 + $0x38] sm:$0xff]
    %v317 = vld [vmem:[%s1 + $0x40] sm:$0xff]
    %v318 = vld [vmem:[%s1 + $0x48] sm:$0xff]
    %v319 = vld [vmem:[%s1 + $0x50] sm:$0xff]
    %v320 = vld [vmem:[%s1 + $0x58] sm:$0xff]
    %v321 = vld [vmem:[%s1 + $0x60] sm:$0xff]
    %v322 = vld [vmem:[%s1 + $0x68] sm:$0xff]
    %v323 = vld [vmem:[%s1 + $0x70] sm:$0xff]
    %v324 = vld [vmem:[%s1 + $0x78] sm:$0xff]
    %325 = vmatpush.msra.mxu0 %v307
    %326 = vmatpush.msra.mxu0 %v304
    %327 = vmatpush.msra.mxu0 %v301
    %328 = vmatpush.msra.mxu0 %v298
    %329 = vmatpush.msra.mxu0 %v295
    %330 = vmatpush.msra.mxu0 %v292
    %331 = vmatpush.msra.mxu0 %v289
    %332 = vmatpush.msra.mxu0 %v286
    %333 = vmatpush.msra.mxu0 %v283
    %334 = vmatpush.msra.mxu0 %v280
    %335 = vmatpush.msra.mxu0 %v277
    %336 = vmatpush.msra.mxu0 %v274
    %337 = vmatpush.msra.mxu0 %v271
    %338 = vmatpush.msra.mxu0 %v268
    %339 = vmatpush.msra.mxu0 %v265
    %340 = vmatpush.msra.mxu0 %v262
    %341 = vmatmul.f32.gmra.mxu0 %v309
    %v342 = vpop.f32.mrf.mxu0
    %v343 = vadd.f32 0.0, %v342
    %344 = vmatmul.f32.gmra.mxu0 %v310
    %v345 = vpop.f32.mrf.mxu0
    %v346 = vadd.f32 0.0, %v345
    %347 = vmatmul.f32.gmra.mxu0 %v311
    %v348 = vpop.f32.mrf.mxu0
    %v349 = vadd.f32 0.0, %v348
    %350 = vmatmul.f32.gmra.mxu0 %v312
    %v351 = vpop.f32.mrf.mxu0
    %v352 = vadd.f32 0.0, %v351
    %353 = vmatmul.f32.gmra.mxu0 %v313
    %v354 = vpop.f32.mrf.mxu0
    %v355 = vadd.f32 0.0, %v354
    %356 = vmatmul.f32.gmra.mxu0 %v314
    %v357 = vpop.f32.mrf.mxu0
    %v358 = vadd.f32 0.0, %v357
    %359 = vmatmul.f32.gmra.mxu0 %v315
    %v360 = vpop.f32.mrf.mxu0
    %v361 = vadd.f32 0.0, %v360
    %362 = vmatmul.f32.gmra.mxu0 %v316
    %v363 = vpop.f32.mrf.mxu0
    %v364 = vadd.f32 0.0, %v363
    %365 = vmatmul.f32.gmra.mxu0 %v317
    %v366 = vpop.f32.mrf.mxu0
    %v367 = vadd.f32 0.0, %v366
    %368 = vmatmul.f32.gmra.mxu0 %v318
    %v369 = vpop.f32.mrf.mxu0
    %v370 = vadd.f32 0.0, %v369
    %371 = vmatmul.f32.gmra.mxu0 %v319
    %v372 = vpop.f32.mrf.mxu0
    %v373 = vadd.f32 0.0, %v372
    %374 = vmatmul.f32.gmra.mxu0 %v320
    %v375 = vpop.f32.mrf.mxu0
    %v376 = vadd.f32 0.0, %v375
    %377 = vmatmul.f32.gmra.mxu0 %v321
    %v378 = vpop.f32.mrf.mxu0
    %v379 = vadd.f32 0.0, %v378
    %380 = vmatmul.f32.gmra.mxu0 %v322
    %v381 = vpop.f32.mrf.mxu0
    %v382 = vadd.f32 0.0, %v381
    %383 = vmatmul.f32.gmra.mxu0 %v323
    %v384 = vpop.f32.mrf.mxu0
    %v385 = vadd.f32 0.0, %v384
    %386 = vmatmul.f32.gmra.mxu0 %v324
    %v387 = vpop.f32.mrf.mxu0
    %v388 = vadd.f32 0.0, %v387
    %389 = vdwg.mxu0
    %v390 = vadd.f32 %v98, %v343
    %v391 = vadd.f32 %v99, %v346
    %v392 = vadd.f32 %v100, %v349
    %v393 = vadd.f32 %v101, %v352
    %v394 = vadd.f32 %v102, %v355
    %v395 = vadd.f32 %v103, %v358
    %v396 = vadd.f32 %v104, %v361
    %v397 = vadd.f32 %v105, %v364
    %v398 = vadd.f32 %v106, %v367
    %v399 = vadd.f32 %v107, %v370
    %v400 = vadd.f32 %v108, %v373
    %v401 = vadd.f32 %v109, %v376
    %v402 = vadd.f32 %v110, %v379
    %v403 = vadd.f32 %v111, %v382
    %v404 = vadd.f32 %v112, %v385
    %v405 = vadd.f32 %v113, %v388
    %s406 = scalar_lea.vmem %s2, 32
    %v407 = vld [vmem:[%s406] sm:$0xff]
    %v408 = vld [vmem:[%s406 + $0x8] sm:$0xff]
    %v409 = vld [vmem:[%s406 + $0x10] sm:$0xff]
    %v410 = vld [vmem:[%s406 + $0x18] sm:$0xff]
    %411 = vmatpush.msra.mxu0 0.0
    %412 = vmatpush.msra.mxu0 0.0
    %413 = vmatpush.msra.mxu0 0.0
    %414 = vmatpush.msra.mxu0 0.0
    %415 = vmatpush.msra.mxu0 0.0
    %416 = vmatpush.msra.mxu0 0.0
    %417 = vmatpush.msra.mxu0 0.0
    %418 = vmatpush.msra.mxu0 0.0
    %419 = vmatpush.msra.mxu0 0.0
    %420 = vmatpush.msra.mxu0 0.0
    %421 = vmatpush.msra.mxu0 0.0
    %422 = vmatpush.msra.mxu0 0.0
    %423 = vmatpush.msra.mxu0 %v410
    %424 = vmatpush.msra.mxu0 %v409
    %425 = vmatpush.msra.mxu0 %v408
    %426 = vmatpush.msra.mxu0 %v407
    %427 = vmatmul.f32.gmra.mxu0 %v128
    %v428 = vpop.f32.mrf.mxu0
    %v429 = vadd.f32 0.0, %v428
    %430 = vmatmul.f32.gmra.mxu0 %v131
    %v431 = vpop.f32.mrf.mxu0
    %v432 = vadd.f32 0.0, %v431
    %433 = vmatmul.f32.gmra.mxu0 %v134
    %v434 = vpop.f32.mrf.mxu0
    %v435 = vadd.f32 0.0, %v434
    %436 = vmatmul.f32.gmra.mxu0 %v137
    %v437 = vpop.f32.mrf.mxu0
    %v438 = vadd.f32 0.0, %v437
    %439 = vmatmul.f32.gmra.mxu0 %v140
    %v440 = vpop.f32.mrf.mxu0
    %v441 = vadd.f32 0.0, %v440
    %442 = vmatmul.f32.gmra.mxu0 %v143
    %v443 = vpop.f32.mrf.mxu0
    %v444 = vadd.f32 0.0, %v443
    %445 = vmatmul.f32.gmra.mxu0 %v146
    %v446 = vpop.f32.mrf.mxu0
    %v447 = vadd.f32 0.0, %v446
    %448 = vmatmul.f32.gmra.mxu0 %v149
    %v449 = vpop.f32.mrf.mxu0
    %v450 = vadd.f32 0.0, %v449
    %451 = vmatmul.f32.gmra.mxu0 %v152
    %v452 = vpop.f32.mrf.mxu0
    %v453 = vadd.f32 0.0, %v452
    %454 = vmatmul.f32.gmra.mxu0 %v155
    %v455 = vpop.f32.mrf.mxu0
    %v456 = vadd.f32 0.0, %v455
    %457 = vmatmul.f32.gmra.mxu0 %v158
    %v458 = vpop.f32.mrf.mxu0
    %v459 = vadd.f32 0.0, %v458
    %460 = vmatmul.f32.gmra.mxu0 %v161
    %v461 = vpop.f32.mrf.mxu0
    %v462 = vadd.f32 0.0, %v461
    %463 = vmatmul.f32.gmra.mxu0 %v164
    %v464 = vpop.f32.mrf.mxu0
    %v465 = vadd.f32 0.0, %v464
    %466 = vmatmul.f32.gmra.mxu0 %v167
    %v467 = vpop.f32.mrf.mxu0
    %v468 = vadd.f32 0.0, %v467
    %469 = vmatmul.f32.gmra.mxu0 %v170
    %v470 = vpop.f32.mrf.mxu0
    %v471 = vadd.f32 0.0, %v470
    %472 = vmatmul.f32.gmra.mxu0 %v173
    %v473 = vpop.f32.mrf.mxu0
    %v474 = vadd.f32 0.0, %v473
    %475 = vdwg.mxu0
    %s476 = scalar_lea.vmem %s1, 128
    %v477 = vld [vmem:[%s476] sm:$0xff]
    %v478 = vld [vmem:[%s476 + $0x8] sm:$0xff]
    %v479 = vld [vmem:[%s476 + $0x10] sm:$0xff]
    %v480 = vld [vmem:[%s476 + $0x18] sm:$0xff]
    %v481 = vld [vmem:[%s476 + $0x20] sm:$0xff]
    %v482 = vld [vmem:[%s476 + $0x28] sm:$0xff]
    %v483 = vld [vmem:[%s476 + $0x30] sm:$0xff]
    %v484 = vld [vmem:[%s476 + $0x38] sm:$0xff]
    %v485 = vld [vmem:[%s476 + $0x40] sm:$0xff]
    %v486 = vld [vmem:[%s476 + $0x48] sm:$0xff]
    %v487 = vld [vmem:[%s476 + $0x50] sm:$0xff]
    %v488 = vld [vmem:[%s476 + $0x58] sm:$0xff]
    %v489 = vld [vmem:[%s476 + $0x60] sm:$0xff]
    %v490 = vld [vmem:[%s476 + $0x68] sm:$0xff]
    %v491 = vld [vmem:[%s476 + $0x70] sm:$0xff]
    %v492 = vld [vmem:[%s476 + $0x78] sm:$0xff]
    %493 = vmatpush.msra.mxu0 %v474
    %494 = vmatpush.msra.mxu0 %v471
    %495 = vmatpush.msra.mxu0 %v468
    %496 = vmatpush.msra.mxu0 %v465
    %497 = vmatpush.msra.mxu0 %v462
    %498 = vmatpush.msra.mxu0 %v459
    %499 = vmatpush.msra.mxu0 %v456
    %500 = vmatpush.msra.mxu0 %v453
    %501 = vmatpush.msra.mxu0 %v450
    %502 = vmatpush.msra.mxu0 %v447
    %503 = vmatpush.msra.mxu0 %v444
    %504 = vmatpush.msra.mxu0 %v441
    %505 = vmatpush.msra.mxu0 %v438
    %506 = vmatpush.msra.mxu0 %v435
    %507 = vmatpush.msra.mxu0 %v432
    %508 = vmatpush.msra.mxu0 %v429
    %509 = vmatmul.f32.gmra.mxu0 %v477
    %v510 = vpop.f32.mrf.mxu0
    %v511 = vadd.f32 0.0, %v510
    %512 = vmatmul.f32.gmra.mxu0 %v478
    %v513 = vpop.f32.mrf.mxu0
    %v514 = vadd.f32 0.0, %v513
    %515 = vmatmul.f32.gmra.mxu0 %v479
    %v516 = vpop.f32.mrf.mxu0
    %v517 = vadd.f32 0.0, %v516
    %518 = vmatmul.f32.gmra.mxu0 %v480
    %v519 = vpop.f32.mrf.mxu0
    %v520 = vadd.f32 0.0, %v519
    %521 = vmatmul.f32.gmra.mxu0 %v481
    %v522 = vpop.f32.mrf.mxu0
    %v523 = vadd.f32 0.0, %v522
    %524 = vmatmul.f32.gmra.mxu0 %v482
    %v525 = vpop.f32.mrf.mxu0
    %v526 = vadd.f32 0.0, %v525
    %527 = vmatmul.f32.gmra.mxu0 %v483
    %v528 = vpop.f32.mrf.mxu0
    %v529 = vadd.f32 0.0, %v528
    %530 = vmatmul.f32.gmra.mxu0 %v484
    %v531 = vpop.f32.mrf.mxu0
    %v532 = vadd.f32 0.0, %v531
    %533 = vmatmul.f32.gmra.mxu0 %v485
    %v534 = vpop.f32.mrf.mxu0
    %v535 = vadd.f32 0.0, %v534
    %536 = vmatmul.f32.gmra.mxu0 %v486
    %v537 = vpop.f32.mrf.mxu0
    %v538 = vadd.f32 0.0, %v537
    %539 = vmatmul.f32.gmra.mxu0 %v487
    %v540 = vpop.f32.mrf.mxu0
    %v541 = vadd.f32 0.0, %v540
    %542 = vmatmul.f32.gmra.mxu0 %v488
    %v543 = vpop.f32.mrf.mxu0
    %v544 = vadd.f32 0.0, %v543
    %545 = vmatmul.f32.gmra.mxu0 %v489
    %v546 = vpop.f32.mrf.mxu0
    %v547 = vadd.f32 0.0, %v546
    %548 = vmatmul.f32.gmra.mxu0 %v490
    %v549 = vpop.f32.mrf.mxu0
    %v550 = vadd.f32 0.0, %v549
    %551 = vmatmul.f32.gmra.mxu0 %v491
    %v552 = vpop.f32.mrf.mxu0
    %v553 = vadd.f32 0.0, %v552
    %554 = vmatmul.f32.gmra.mxu0 %v492
    %v555 = vpop.f32.mrf.mxu0
    %v556 = vadd.f32 0.0, %v555
    %557 = vdwg.mxu0
    %v558 = vadd.f32 %v390, %v511
    %v559 = vadd.f32 %v391, %v514
    %v560 = vadd.f32 %v392, %v517
    %v561 = vadd.f32 %v393, %v520
    %v562 = vadd.f32 %v394, %v523
    %v563 = vadd.f32 %v395, %v526
    %v564 = vadd.f32 %v396, %v529
    %v565 = vadd.f32 %v397, %v532
    %v566 = vadd.f32 %v398, %v535
    %v567 = vadd.f32 %v399, %v538
    %v568 = vadd.f32 %v400, %v541
    %v569 = vadd.f32 %v401, %v544
    %v570 = vadd.f32 %v402, %v547
    %v571 = vadd.f32 %v403, %v550
    %v572 = vadd.f32 %v404, %v553
    %v573 = vadd.f32 %v405, %v556
    %v575 = vsel %vm126, %v558, 0
    %v578 = vsel %vm126, %v559, 0
    %v581 = vsel %vm126, %v560, 0
    %v584 = vsel %vm126, %v561, 0
    %v587 = vsel %vm126, %v562, 0
    %v590 = vsel %vm126, %v563, 0
    %v593 = vsel %vm126, %v564, 0
    %v596 = vsel %vm126, %v565, 0
    %v599 = vsel %vm126, %v566, 0
    %v602 = vsel %vm126, %v567, 0
    %v605 = vsel %vm126, %v568, 0
    %v608 = vsel %vm126, %v569, 0
    %v611 = vsel %vm126, %v570, 0
    %v614 = vsel %vm126, %v571, 0
    %v617 = vsel %vm126, %v572, 0
    %v620 = vsel %vm126, %v573, 0
    %622 = vmatpush.msra.mxu0 0.0
    %623 = vmatpush.msra.mxu0 0.0
    %624 = vmatpush.msra.mxu0 0.0
    %625 = vmatpush.msra.mxu0 0.0
    %626 = vmatpush.msra.mxu0 0.0
    %627 = vmatpush.msra.mxu0 0.0
    %628 = vmatpush.msra.mxu0 0.0
    %629 = vmatpush.msra.mxu0 0.0
    %630 = vmatpush.msra.mxu0 0.0
    %631 = vmatpush.msra.mxu0 0.0
    %632 = vmatpush.msra.mxu0 0.0
    %633 = vmatpush.msra.mxu0 0.0
    %634 = vmatpush.msra.mxu0 %v117
    %635 = vmatpush.msra.mxu0 %v116
    %636 = vmatpush.msra.mxu0 %v115
    %637 = vmatpush.msra.mxu0 %v114
    %638 = vmatmul.f32.gmra.mxu0 %v575
    %v639 = vpop.f32.mrf.mxu0
    %v640 = vadd.f32 %v193, %v639
    %641 = vmatmul.f32.gmra.mxu0 %v578
    %v642 = vpop.f32.mrf.mxu0
    %v643 = vadd.f32 %v196, %v642
    %644 = vmatmul.f32.gmra.mxu0 %v581
    %v645 = vpop.f32.mrf.mxu0
    %v646 = vadd.f32 %v199, %v645
    %647 = vmatmul.f32.gmra.mxu0 %v584
    %v648 = vpop.f32.mrf.mxu0
    %v649 = vadd.f32 %v202, %v648
    %650 = vmatmul.f32.gmra.mxu0 %v587
    %v651 = vpop.f32.mrf.mxu0
    %v652 = vadd.f32 %v205, %v651
    %653 = vmatmul.f32.gmra.mxu0 %v590
    %v654 = vpop.f32.mrf.mxu0
    %v655 = vadd.f32 %v208, %v654
    %656 = vmatmul.f32.gmra.mxu0 %v593
    %v657 = vpop.f32.mrf.mxu0
    %v658 = vadd.f32 %v211, %v657
    %659 = vmatmul.f32.gmra.mxu0 %v596
    %v660 = vpop.f32.mrf.mxu0
    %v661 = vadd.f32 %v214, %v660
    %662 = vmatmul.f32.gmra.mxu0 %v599
    %v663 = vpop.f32.mrf.mxu0
    %v664 = vadd.f32 %v217, %v663
    %665 = vmatmul.f32.gmra.mxu0 %v602
    %v666 = vpop.f32.mrf.mxu0
    %v667 = vadd.f32 %v220, %v666
    %668 = vmatmul.f32.gmra.mxu0 %v605
    %v669 = vpop.f32.mrf.mxu0
    %v670 = vadd.f32 %v223, %v669
    %671 = vmatmul.f32.gmra.mxu0 %v608
    %v672 = vpop.f32.mrf.mxu0
    %v673 = vadd.f32 %v226, %v672
    %674 = vmatmul.f32.gmra.mxu0 %v611
    %v675 = vpop.f32.mrf.mxu0
    %v676 = vadd.f32 %v229, %v675
    %677 = vmatmul.f32.gmra.mxu0 %v614
    %v678 = vpop.f32.mrf.mxu0
    %v679 = vadd.f32 %v232, %v678
    %680 = vmatmul.f32.gmra.mxu0 %v617
    %v681 = vpop.f32.mrf.mxu0
    %v682 = vadd.f32 %v235, %v681
    %683 = vmatmul.f32.gmra.mxu0 %v620
    %v684 = vpop.f32.mrf.mxu0
    %v685 = vadd.f32 %v238, %v684
    %686 = vdwg.mxu0
    %v687 = vadd.f32 %v640, %v124
    %v688 = vadd.f32 %v643, %v124
    %v689 = vadd.f32 %v646, %v124
    %v690 = vadd.f32 %v649, %v124
    %v691 = vadd.f32 %v652, %v124
    %v692 = vadd.f32 %v655, %v124
    %v693 = vadd.f32 %v658, %v124
    %v694 = vadd.f32 %v661, %v124
    %v695 = vadd.f32 %v664, %v124
    %v696 = vadd.f32 %v667, %v124
    %v697 = vadd.f32 %v670, %v124
    %v698 = vadd.f32 %v673, %v124
    %v699 = vadd.f32 %v676, %v124
    %v700 = vadd.f32 %v679, %v124
    %v701 = vadd.f32 %v682, %v124
    %v702 = vadd.f32 %v685, %v124
    %v703 = vxor.u32 %v687, 2147483648
    %v704 = vxor.u32 %v688, 2147483648
    %v705 = vxor.u32 %v689, 2147483648
    %v706 = vxor.u32 %v690, 2147483648
    %v707 = vxor.u32 %v691, 2147483648
    %v708 = vxor.u32 %v692, 2147483648
    %v709 = vxor.u32 %v693, 2147483648
    %v710 = vxor.u32 %v694, 2147483648
    %v711 = vxor.u32 %v695, 2147483648
    %v712 = vxor.u32 %v696, 2147483648
    %v713 = vxor.u32 %v697, 2147483648
    %v714 = vxor.u32 %v698, 2147483648
    %v715 = vxor.u32 %v699, 2147483648
    %v716 = vxor.u32 %v700, 2147483648
    %v717 = vxor.u32 %v701, 2147483648
    %v718 = vxor.u32 %v702, 2147483648
    %v719 = vmul.f32 %v703, 1.442695
    %v720 = vpow.pop %v719
    %v721 = vmul.f32 %v704, 1.442695
    %v722 = vpow.pop %v721
    %v723 = vmul.f32 %v705, 1.442695
    %v724 = vpow.pop %v723
    %v725 = vmul.f32 %v706, 1.442695
    %v726 = vpow.pop %v725
    %v727 = vmul.f32 %v707, 1.442695
    %v728 = vpow.pop %v727
    %v729 = vmul.f32 %v708, 1.442695
    %v730 = vpow.pop %v729
    %v731 = vmul.f32 %v709, 1.442695
    %v732 = vpow.pop %v731
    %v733 = vmul.f32 %v710, 1.442695
    %v734 = vpow.pop %v733
    %v735 = vmul.f32 %v711, 1.442695
    %v736 = vpow.pop %v735
    %v737 = vmul.f32 %v712, 1.442695
    %v738 = vpow.pop %v737
    %v739 = vmul.f32 %v713, 1.442695
    %v740 = vpow.pop %v739
    %v741 = vmul.f32 %v714, 1.442695
    %v742 = vpow.pop %v741
    %v743 = vmul.f32 %v715, 1.442695
    %v744 = vpow.pop %v743
    %v745 = vmul.f32 %v716, 1.442695
    %v746 = vpow.pop %v745
    %v747 = vmul.f32 %v717, 1.442695
    %v748 = vpow.pop %v747
    %v749 = vmul.f32 %v718, 1.442695
    %v750 = vpow.pop %v749
    %v751 = vadd.f32 %v720, 1.0
    %v752 = vadd.f32 %v722, 1.0
    %v753 = vadd.f32 %v724, 1.0
    %v754 = vadd.f32 %v726, 1.0
    %v755 = vadd.f32 %v728, 1.0
    %v756 = vadd.f32 %v730, 1.0
    %v757 = vadd.f32 %v732, 1.0
    %v758 = vadd.f32 %v734, 1.0
    %v759 = vadd.f32 %v736, 1.0
    %v760 = vadd.f32 %v738, 1.0
    %v761 = vadd.f32 %v740, 1.0
    %v762 = vadd.f32 %v742, 1.0
    %v763 = vadd.f32 %v744, 1.0
    %v764 = vadd.f32 %v746, 1.0
    %v765 = vadd.f32 %v748, 1.0
    %v766 = vadd.f32 %v750, 1.0
    %v767 = vrcp.pop %v751
    %v768 = vmul.f32 %v751, %v767
    %v769 = vsub.f32 1.0, %v768
    %v770 = vmul.f32 %v767, %v769
    %v771 = vadd.f32 %v767, %v770
    %vm772 = vweird.f32 %v751
    %vm773 = vweird.f32 %v767
    %vm774 = vmor %vm772, %vm773
    %v775 = vsel %vm774, %v767, %v771
    %v776 = vand.u32 2147483647, %v751
    %vm777 = vcmp.eq.f32.partialorder %v776, 8.507059e+37
    %v778 = vand.u32 %v751, 2147483648
    %v779 = vor.u32 1.1754944e-38, %v778
    %v780 = vsel %vm777, %v779, %v775
    %v781 = vmul.f32 1.0, %v780
    %v782 = vrcp.pop %v752
    %v783 = vmul.f32 %v752, %v782
    %v784 = vsub.f32 1.0, %v783
    %v785 = vmul.f32 %v782, %v784
    %v786 = vadd.f32 %v782, %v785
    %vm787 = vweird.f32 %v752
    %vm788 = vweird.f32 %v782
    %vm789 = vmor %vm787, %vm788
    %v790 = vsel %vm789, %v782, %v786
    %v791 = vand.u32 2147483647, %v752
    %vm792 = vcmp.eq.f32.partialorder %v791, 8.507059e+37
    %v793 = vand.u32 %v752, 2147483648
    %v794 = vor.u32 1.1754944e-38, %v793
    %v795 = vsel %vm792, %v794, %v790
    %v796 = vmul.f32 1.0, %v795
    %v797 = vrcp.pop %v753
    %v798 = vmul.f32 %v753, %v797
    %v799 = vsub.f32 1.0, %v798
    %v800 = vmul.f32 %v797, %v799
    %v801 = vadd.f32 %v797, %v800
    %vm802 = vweird.f32 %v753
    %vm803 = vweird.f32 %v797
    %vm804 = vmor %vm802, %vm803
    %v805 = vsel %vm804, %v797, %v801
    %v806 = vand.u32 2147483647, %v753
    %vm807 = vcmp.eq.f32.partialorder %v806, 8.507059e+37
    %v808 = vand.u32 %v753, 2147483648
    %v809 = vor.u32 1.1754944e-38, %v808
    %v810 = vsel %vm807, %v809, %v805
    %v811 = vmul.f32 1.0, %v810
    %v812 = vrcp.pop %v754
    %v813 = vmul.f32 %v754, %v812
    %v814 = vsub.f32 1.0, %v813
    %v815 = vmul.f32 %v812, %v814
    %v816 = vadd.f32 %v812, %v815
    %vm817 = vweird.f32 %v754
    %vm818 = vweird.f32 %v812
    %vm819 = vmor %vm817, %vm818
    %v820 = vsel %vm819, %v812, %v816
    %v821 = vand.u32 2147483647, %v754
    %vm822 = vcmp.eq.f32.partialorder %v821, 8.507059e+37
    %v823 = vand.u32 %v754, 2147483648
    %v824 = vor.u32 1.1754944e-38, %v823
    %v825 = vsel %vm822, %v824, %v820
    %v826 = vmul.f32 1.0, %v825
    %v827 = vrcp.pop %v755
    %v828 = vmul.f32 %v755, %v827
    %v829 = vsub.f32 1.0, %v828
    %v830 = vmul.f32 %v827, %v829
    %v831 = vadd.f32 %v827, %v830
    %vm832 = vweird.f32 %v755
    %vm833 = vweird.f32 %v827
    %vm834 = vmor %vm832, %vm833
    %v835 = vsel %vm834, %v827, %v831
    %v836 = vand.u32 2147483647, %v755
    %vm837 = vcmp.eq.f32.partialorder %v836, 8.507059e+37
    %v838 = vand.u32 %v755, 2147483648
    %v839 = vor.u32 1.1754944e-38, %v838
    %v840 = vsel %vm837, %v839, %v835
    %v841 = vmul.f32 1.0, %v840
    %v842 = vrcp.pop %v756
    %v843 = vmul.f32 %v756, %v842
    %v844 = vsub.f32 1.0, %v843
    %v845 = vmul.f32 %v842, %v844
    %v846 = vadd.f32 %v842, %v845
    %vm847 = vweird.f32 %v756
    %vm848 = vweird.f32 %v842
    %vm849 = vmor %vm847, %vm848
    %v850 = vsel %vm849, %v842, %v846
    %v851 = vand.u32 2147483647, %v756
    %vm852 = vcmp.eq.f32.partialorder %v851, 8.507059e+37
    %v853 = vand.u32 %v756, 2147483648
    %v854 = vor.u32 1.1754944e-38, %v853
    %v855 = vsel %vm852, %v854, %v850
    %v856 = vmul.f32 1.0, %v855
    %v857 = vrcp.pop %v757
    %v858 = vmul.f32 %v757, %v857
    %v859 = vsub.f32 1.0, %v858
    %v860 = vmul.f32 %v857, %v859
    %v861 = vadd.f32 %v857, %v860
    %vm862 = vweird.f32 %v757
    %vm863 = vweird.f32 %v857
    %vm864 = vmor %vm862, %vm863
    %v865 = vsel %vm864, %v857, %v861
    %v866 = vand.u32 2147483647, %v757
    %vm867 = vcmp.eq.f32.partialorder %v866, 8.507059e+37
    %v868 = vand.u32 %v757, 2147483648
    %v869 = vor.u32 1.1754944e-38, %v868
    %v870 = vsel %vm867, %v869, %v865
    %v871 = vmul.f32 1.0, %v870
    %v872 = vrcp.pop %v758
    %v873 = vmul.f32 %v758, %v872
    %v874 = vsub.f32 1.0, %v873
    %v875 = vmul.f32 %v872, %v874
    %v876 = vadd.f32 %v872, %v875
    %vm877 = vweird.f32 %v758
    %vm878 = vweird.f32 %v872
    %vm879 = vmor %vm877, %vm878
    %v880 = vsel %vm879, %v872, %v876
    %v881 = vand.u32 2147483647, %v758
    %vm882 = vcmp.eq.f32.partialorder %v881, 8.507059e+37
    %v883 = vand.u32 %v758, 2147483648
    %v884 = vor.u32 1.1754944e-38, %v883
    %v885 = vsel %vm882, %v884, %v880
    %v886 = vmul.f32 1.0, %v885
    %v887 = vrcp.pop %v759
    %v888 = vmul.f32 %v759, %v887
    %v889 = vsub.f32 1.0, %v888
    %v890 = vmul.f32 %v887, %v889
    %v891 = vadd.f32 %v887, %v890
    %vm892 = vweird.f32 %v759
    %vm893 = vweird.f32 %v887
    %vm894 = vmor %vm892, %vm893
    %v895 = vsel %vm894, %v887, %v891
    %v896 = vand.u32 2147483647, %v759
    %vm897 = vcmp.eq.f32.partialorder %v896, 8.507059e+37
    %v898 = vand.u32 %v759, 2147483648
    %v899 = vor.u32 1.1754944e-38, %v898
    %v900 = vsel %vm897, %v899, %v895
    %v901 = vmul.f32 1.0, %v900
    %v902 = vrcp.pop %v760
    %v903 = vmul.f32 %v760, %v902
    %v904 = vsub.f32 1.0, %v903
    %v905 = vmul.f32 %v902, %v904
    %v906 = vadd.f32 %v902, %v905
    %vm907 = vweird.f32 %v760
    %vm908 = vweird.f32 %v902
    %vm909 = vmor %vm907, %vm908
    %v910 = vsel %vm909, %v902, %v906
    %v911 = vand.u32 2147483647, %v760
    %vm912 = vcmp.eq.f32.partialorder %v911, 8.507059e+37
    %v913 = vand.u32 %v760, 2147483648
    %v914 = vor.u32 1.1754944e-38, %v913
    %v915 = vsel %vm912, %v914, %v910
    %v916 = vmul.f32 1.0, %v915
    %v917 = vrcp.pop %v761
    %v918 = vmul.f32 %v761, %v917
    %v919 = vsub.f32 1.0, %v918
    %v920 = vmul.f32 %v917, %v919
    %v921 = vadd.f32 %v917, %v920
    %vm922 = vweird.f32 %v761
    %vm923 = vweird.f32 %v917
    %vm924 = vmor %vm922, %vm923
    %v925 = vsel %vm924, %v917, %v921
    %v926 = vand.u32 2147483647, %v761
    %vm927 = vcmp.eq.f32.partialorder %v926, 8.507059e+37
    %v928 = vand.u32 %v761, 2147483648
    %v929 = vor.u32 1.1754944e-38, %v928
    %v930 = vsel %vm927, %v929, %v925
    %v931 = vmul.f32 1.0, %v930
    %v932 = vrcp.pop %v762
    %v933 = vmul.f32 %v762, %v932
    %v934 = vsub.f32 1.0, %v933
    %v935 = vmul.f32 %v932, %v934
    %v936 = vadd.f32 %v932, %v935
    %vm937 = vweird.f32 %v762
    %vm938 = vweird.f32 %v932
    %vm939 = vmor %vm937, %vm938
    %v940 = vsel %vm939, %v932, %v936
    %v941 = vand.u32 2147483647, %v762
    %vm942 = vcmp.eq.f32.partialorder %v941, 8.507059e+37
    %v943 = vand.u32 %v762, 2147483648
    %v944 = vor.u32 1.1754944e-38, %v943
    %v945 = vsel %vm942, %v944, %v940
    %v946 = vmul.f32 1.0, %v945
    %v947 = vrcp.pop %v763
    %v948 = vmul.f32 %v763, %v947
    %v949 = vsub.f32 1.0, %v948
    %v950 = vmul.f32 %v947, %v949
    %v951 = vadd.f32 %v947, %v950
    %vm952 = vweird.f32 %v763
    %vm953 = vweird.f32 %v947
    %vm954 = vmor %vm952, %vm953
    %v955 = vsel %vm954, %v947, %v951
    %v956 = vand.u32 2147483647, %v763
    %vm957 = vcmp.eq.f32.partialorder %v956, 8.507059e+37
    %v958 = vand.u32 %v763, 2147483648
    %v959 = vor.u32 1.1754944e-38, %v958
    %v960 = vsel %vm957, %v959, %v955
    %v961 = vmul.f32 1.0, %v960
    %v962 = vrcp.pop %v764
    %v963 = vmul.f32 %v764, %v962
    %v964 = vsub.f32 1.0, %v963
    %v965 = vmul.f32 %v962, %v964
    %v966 = vadd.f32 %v962, %v965
    %vm967 = vweird.f32 %v764
    %vm968 = vweird.f32 %v962
    %vm969 = vmor %vm967, %vm968
    %v970 = vsel %vm969, %v962, %v966
    %v971 = vand.u32 2147483647, %v764
    %vm972 = vcmp.eq.f32.partialorder %v971, 8.507059e+37
    %v973 = vand.u32 %v764, 2147483648
    %v974 = vor.u32 1.1754944e-38, %v973
    %v975 = vsel %vm972, %v974, %v970
    %v976 = vmul.f32 1.0, %v975
    %v977 = vrcp.pop %v765
    %v978 = vmul.f32 %v765, %v977
    %v979 = vsub.f32 1.0, %v978
    %v980 = vmul.f32 %v977, %v979
    %v981 = vadd.f32 %v977, %v980
    %vm982 = vweird.f32 %v765
    %vm983 = vweird.f32 %v977
    %vm984 = vmor %vm982, %vm983
    %v985 = vsel %vm984, %v977, %v981
    %v986 = vand.u32 2147483647, %v765
    %vm987 = vcmp.eq.f32.partialorder %v986, 8.507059e+37
    %v988 = vand.u32 %v765, 2147483648
    %v989 = vor.u32 1.1754944e-38, %v988
    %v990 = vsel %vm987, %v989, %v985
    %v991 = vmul.f32 1.0, %v990
    %v992 = vrcp.pop %v766
    %v993 = vmul.f32 %v766, %v992
    %v994 = vsub.f32 1.0, %v993
    %v995 = vmul.f32 %v992, %v994
    %v996 = vadd.f32 %v992, %v995
    %vm997 = vweird.f32 %v766
    %vm998 = vweird.f32 %v992
    %vm999 = vmor %vm997, %vm998
    %v1000 = vsel %vm999, %v992, %v996
    %v1001 = vand.u32 2147483647, %v766
    %vm1002 = vcmp.eq.f32.partialorder %v1001, 8.507059e+37
    %v1003 = vand.u32 %v766, 2147483648
    %v1004 = vor.u32 1.1754944e-38, %v1003
    %v1005 = vsel %vm1002, %v1004, %v1000
    %v1006 = vmul.f32 1.0, %v1005
    %1023 = vrot.lane.b32.xlu0 %v687, 32
    %v1024 = vpop.permute.xlu0 %1023
    %1025 = vrot.lane.b32.xlu0 %v688, 32
    %v1026 = vpop.permute.xlu0 %1025
    %1027 = vrot.lane.b32.xlu0 %v689, 32
    %v1028 = vpop.permute.xlu0 %1027
    %1029 = vrot.lane.b32.xlu0 %v690, 32
    %v1030 = vpop.permute.xlu0 %1029
    %1031 = vrot.lane.b32.xlu0 %v691, 32
    %v1032 = vpop.permute.xlu0 %1031
    %1033 = vrot.lane.b32.xlu0 %v692, 32
    %v1034 = vpop.permute.xlu0 %1033
    %1035 = vrot.lane.b32.xlu0 %v693, 32
    %v1036 = vpop.permute.xlu0 %1035
    %1037 = vrot.lane.b32.xlu0 %v694, 32
    %v1038 = vpop.permute.xlu0 %1037
    %1039 = vrot.lane.b32.xlu0 %v695, 32
    %v1040 = vpop.permute.xlu0 %1039
    %1041 = vrot.lane.b32.xlu0 %v696, 32
    %v1042 = vpop.permute.xlu0 %1041
    %1043 = vrot.lane.b32.xlu0 %v697, 32
    %v1044 = vpop.permute.xlu0 %1043
    %1045 = vrot.lane.b32.xlu0 %v698, 32
    %v1046 = vpop.permute.xlu0 %1045
    %1047 = vrot.lane.b32.xlu0 %v699, 32
    %v1048 = vpop.permute.xlu0 %1047
    %1049 = vrot.lane.b32.xlu0 %v700, 32
    %v1050 = vpop.permute.xlu0 %1049
    %1051 = vrot.lane.b32.xlu0 %v701, 32
    %v1052 = vpop.permute.xlu0 %1051
    %1053 = vrot.lane.b32.xlu0 %v702, 32
    %v1054 = vpop.permute.xlu0 %1053
    %v1071 = vmul.f32 %v781, %v1024
    %v1072 = vmul.f32 %v796, %v1026
    %v1073 = vmul.f32 %v811, %v1028
    %v1074 = vmul.f32 %v826, %v1030
    %v1075 = vmul.f32 %v841, %v1032
    %v1076 = vmul.f32 %v856, %v1034
    %v1077 = vmul.f32 %v871, %v1036
    %v1078 = vmul.f32 %v886, %v1038
    %v1079 = vmul.f32 %v901, %v1040
    %v1080 = vmul.f32 %v916, %v1042
    %v1081 = vmul.f32 %v931, %v1044
    %v1082 = vmul.f32 %v946, %v1046
    %v1083 = vmul.f32 %v961, %v1048
    %v1084 = vmul.f32 %v976, %v1050
    %v1085 = vmul.f32 %v991, %v1052
    %v1086 = vmul.f32 %v1006, %v1054
    %1103 = vrot.lane.b32.xlu0 %v1071, 64
    %v1104 = vpop.permute.xlu0 %1103
    %1105 = vrot.lane.b32.xlu0 %v1072, 64
    %v1106 = vpop.permute.xlu0 %1105
    %1107 = vrot.lane.b32.xlu0 %v1073, 64
    %v1108 = vpop.permute.xlu0 %1107
    %1109 = vrot.lane.b32.xlu0 %v1074, 64
    %v1110 = vpop.permute.xlu0 %1109
    %1111 = vrot.lane.b32.xlu0 %v1075, 64
    %v1112 = vpop.permute.xlu0 %1111
    %1113 = vrot.lane.b32.xlu0 %v1076, 64
    %v1114 = vpop.permute.xlu0 %1113
    %1115 = vrot.lane.b32.xlu0 %v1077, 64
    %v1116 = vpop.permute.xlu0 %1115
    %1117 = vrot.lane.b32.xlu0 %v1078, 64
    %v1118 = vpop.permute.xlu0 %1117
    %1119 = vrot.lane.b32.xlu0 %v1079, 64
    %v1120 = vpop.permute.xlu0 %1119
    %1121 = vrot.lane.b32.xlu0 %v1080, 64
    %v1122 = vpop.permute.xlu0 %1121
    %1123 = vrot.lane.b32.xlu0 %v1081, 64
    %v1124 = vpop.permute.xlu0 %1123
    %1125 = vrot.lane.b32.xlu0 %v1082, 64
    %v1126 = vpop.permute.xlu0 %1125
    %1127 = vrot.lane.b32.xlu0 %v1083, 64
    %v1128 = vpop.permute.xlu0 %1127
    %1129 = vrot.lane.b32.xlu0 %v1084, 64
    %v1130 = vpop.permute.xlu0 %1129
    %1131 = vrot.lane.b32.xlu0 %v1085, 64
    %v1132 = vpop.permute.xlu0 %1131
    %1133 = vrot.lane.b32.xlu0 %v1086, 64
    %v1134 = vpop.permute.xlu0 %1133
    %v1151 = vadd.f32 %v687, %v1104
    %v1152 = vadd.f32 %v688, %v1106
    %v1153 = vadd.f32 %v689, %v1108
    %v1154 = vadd.f32 %v690, %v1110
    %v1155 = vadd.f32 %v691, %v1112
    %v1156 = vadd.f32 %v692, %v1114
    %v1157 = vadd.f32 %v693, %v1116
    %v1158 = vadd.f32 %v694, %v1118
    %v1159 = vadd.f32 %v695, %v1120
    %v1160 = vadd.f32 %v696, %v1122
    %v1161 = vadd.f32 %v697, %v1124
    %v1162 = vadd.f32 %v698, %v1126
    %v1163 = vadd.f32 %v699, %v1128
    %v1164 = vadd.f32 %v700, %v1130
    %v1165 = vadd.f32 %v701, %v1132
    %v1166 = vadd.f32 %v702, %v1134
    %v1167 = vtanh.pop %v1151
    %v1168 = vtanh.pop %v1152
    %v1169 = vtanh.pop %v1153
    %v1170 = vtanh.pop %v1154
    %v1171 = vtanh.pop %v1155
    %v1172 = vtanh.pop %v1156
    %v1173 = vtanh.pop %v1157
    %v1174 = vtanh.pop %v1158
    %v1175 = vtanh.pop %v1159
    %v1176 = vtanh.pop %v1160
    %v1177 = vtanh.pop %v1161
    %v1178 = vtanh.pop %v1162
    %v1179 = vtanh.pop %v1163
    %v1180 = vtanh.pop %v1164
    %v1181 = vtanh.pop %v1165
    %v1182 = vtanh.pop %v1166
    %v1183 = vsub.f32 1.0, %v781
    %v1184 = vsub.f32 1.0, %v796
    %v1185 = vsub.f32 1.0, %v811
    %v1186 = vsub.f32 1.0, %v826
    %v1187 = vsub.f32 1.0, %v841
    %v1188 = vsub.f32 1.0, %v856
    %v1189 = vsub.f32 1.0, %v871
    %v1190 = vsub.f32 1.0, %v886
    %v1191 = vsub.f32 1.0, %v901
    %v1192 = vsub.f32 1.0, %v916
    %v1193 = vsub.f32 1.0, %v931
    %v1194 = vsub.f32 1.0, %v946
    %v1195 = vsub.f32 1.0, %v961
    %v1196 = vsub.f32 1.0, %v976
    %v1197 = vsub.f32 1.0, %v991
    %v1198 = vsub.f32 1.0, %v1006
    %1215 = vrot.lane.b32.xlu0 %v1167, 96
    %v1216 = vpop.permute.xlu0 %1215
    %1217 = vrot.lane.b32.xlu0 %v1168, 96
    %v1218 = vpop.permute.xlu0 %1217
    %1219 = vrot.lane.b32.xlu0 %v1169, 96
    %v1220 = vpop.permute.xlu0 %1219
    %1221 = vrot.lane.b32.xlu0 %v1170, 96
    %v1222 = vpop.permute.xlu0 %1221
    %1223 = vrot.lane.b32.xlu0 %v1171, 96
    %v1224 = vpop.permute.xlu0 %1223
    %1225 = vrot.lane.b32.xlu0 %v1172, 96
    %v1226 = vpop.permute.xlu0 %1225
    %1227 = vrot.lane.b32.xlu0 %v1173, 96
    %v1228 = vpop.permute.xlu0 %1227
    %1229 = vrot.lane.b32.xlu0 %v1174, 96
    %v1230 = vpop.permute.xlu0 %1229
    %1231 = vrot.lane.b32.xlu0 %v1175, 96
    %v1232 = vpop.permute.xlu0 %1231
    %1233 = vrot.lane.b32.xlu0 %v1176, 96
    %v1234 = vpop.permute.xlu0 %1233
    %1235 = vrot.lane.b32.xlu0 %v1177, 96
    %v1236 = vpop.permute.xlu0 %1235
    %1237 = vrot.lane.b32.xlu0 %v1178, 96
    %v1238 = vpop.permute.xlu0 %1237
    %1239 = vrot.lane.b32.xlu0 %v1179, 96
    %v1240 = vpop.permute.xlu0 %1239
    %1241 = vrot.lane.b32.xlu0 %v1180, 96
    %v1242 = vpop.permute.xlu0 %1241
    %1243 = vrot.lane.b32.xlu0 %v1181, 96
    %v1244 = vpop.permute.xlu0 %1243
    %1245 = vrot.lane.b32.xlu0 %v1182, 96
    %v1246 = vpop.permute.xlu0 %1245
    %v1263 = vmul.f32 %v1183, %v1216
    %v1264 = vmul.f32 %v1184, %v1218
    %v1265 = vmul.f32 %v1185, %v1220
    %v1266 = vmul.f32 %v1186, %v1222
    %v1267 = vmul.f32 %v1187, %v1224
    %v1268 = vmul.f32 %v1188, %v1226
    %v1269 = vmul.f32 %v1189, %v1228
    %v1270 = vmul.f32 %v1190, %v1230
    %v1271 = vmul.f32 %v1191, %v1232
    %v1272 = vmul.f32 %v1192, %v1234
    %v1273 = vmul.f32 %v1193, %v1236
    %v1274 = vmul.f32 %v1194, %v1238
    %v1275 = vmul.f32 %v1195, %v1240
    %v1276 = vmul.f32 %v1196, %v1242
    %v1277 = vmul.f32 %v1197, %v1244
    %v1278 = vmul.f32 %v1198, %v1246
    %1279 = vrot.lane.b32.xlu0 %v82, 32
    %v1280 = vpop.permute.xlu0 %1279
    %1281 = vrot.lane.b32.xlu0 %v83, 32
    %v1282 = vpop.permute.xlu0 %1281
    %1283 = vrot.lane.b32.xlu0 %v84, 32
    %v1284 = vpop.permute.xlu0 %1283
    %1285 = vrot.lane.b32.xlu0 %v85, 32
    %v1286 = vpop.permute.xlu0 %1285
    %1287 = vrot.lane.b32.xlu0 %v86, 32
    %v1288 = vpop.permute.xlu0 %1287
    %1289 = vrot.lane.b32.xlu0 %v87, 32
    %v1290 = vpop.permute.xlu0 %1289
    %1291 = vrot.lane.b32.xlu0 %v88, 32
    %v1292 = vpop.permute.xlu0 %1291
    %1293 = vrot.lane.b32.xlu0 %v89, 32
    %v1294 = vpop.permute.xlu0 %1293
    %1295 = vrot.lane.b32.xlu0 %v90, 32
    %v1296 = vpop.permute.xlu0 %1295
    %1297 = vrot.lane.b32.xlu0 %v91, 32
    %v1298 = vpop.permute.xlu0 %1297
    %1299 = vrot.lane.b32.xlu0 %v92, 32
    %v1300 = vpop.permute.xlu0 %1299
    %1301 = vrot.lane.b32.xlu0 %v93, 32
    %v1302 = vpop.permute.xlu0 %1301
    %1303 = vrot.lane.b32.xlu0 %v94, 32
    %v1304 = vpop.permute.xlu0 %1303
    %1305 = vrot.lane.b32.xlu0 %v95, 32
    %v1306 = vpop.permute.xlu0 %1305
    %1307 = vrot.lane.b32.xlu0 %v96, 32
    %v1308 = vpop.permute.xlu0 %1307
    %1309 = vrot.lane.b32.xlu0 %v97, 32
    %v1310 = vpop.permute.xlu0 %1309
    %v1327 = vmul.f32 %v781, %v1280
    %v1328 = vmul.f32 %v796, %v1282
    %v1329 = vmul.f32 %v811, %v1284
    %v1330 = vmul.f32 %v826, %v1286
    %v1331 = vmul.f32 %v841, %v1288
    %v1332 = vmul.f32 %v856, %v1290
    %v1333 = vmul.f32 %v871, %v1292
    %v1334 = vmul.f32 %v886, %v1294
    %v1335 = vmul.f32 %v901, %v1296
    %v1336 = vmul.f32 %v916, %v1298
    %v1337 = vmul.f32 %v931, %v1300
    %v1338 = vmul.f32 %v946, %v1302
    %v1339 = vmul.f32 %v961, %v1304
    %v1340 = vmul.f32 %v976, %v1306
    %v1341 = vmul.f32 %v991, %v1308
    %v1342 = vmul.f32 %v1006, %v1310
    %v1343 = vadd.f32 %v1263, %v1327
    %v1344 = vadd.f32 %v1264, %v1328
    %v1345 = vadd.f32 %v1265, %v1329
    %v1346 = vadd.f32 %v1266, %v1330
    %v1347 = vadd.f32 %v1267, %v1331
    %v1348 = vadd.f32 %v1268, %v1332
    %v1349 = vadd.f32 %v1269, %v1333
    %v1350 = vadd.f32 %v1270, %v1334
    %v1351 = vadd.f32 %v1271, %v1335
    %v1352 = vadd.f32 %v1272, %v1336
    %v1353 = vadd.f32 %v1273, %v1337
    %v1354 = vadd.f32 %v1274, %v1338
    %v1355 = vadd.f32 %v1275, %v1339
    %v1356 = vadd.f32 %v1276, %v1340
    %v1357 = vadd.f32 %v1277, %v1341
    %v1358 = vadd.f32 %v1278, %v1342
    %1375 = vrot.lane.b32.xlu0 %v1343, 96
    %v1376 = vpop.permute.xlu0 %1375
    %1377 = vrot.lane.b32.xlu0 %v1344, 96
    %v1378 = vpop.permute.xlu0 %1377
    %1379 = vrot.lane.b32.xlu0 %v1345, 96
    %v1380 = vpop.permute.xlu0 %1379
    %1381 = vrot.lane.b32.xlu0 %v1346, 96
    %v1382 = vpop.permute.xlu0 %1381
    %1383 = vrot.lane.b32.xlu0 %v1347, 96
    %v1384 = vpop.permute.xlu0 %1383
    %1385 = vrot.lane.b32.xlu0 %v1348, 96
    %v1386 = vpop.permute.xlu0 %1385
    %1387 = vrot.lane.b32.xlu0 %v1349, 96
    %v1388 = vpop.permute.xlu0 %1387
    %1389 = vrot.lane.b32.xlu0 %v1350, 96
    %v1390 = vpop.permute.xlu0 %1389
    %1391 = vrot.lane.b32.xlu0 %v1351, 96
    %v1392 = vpop.permute.xlu0 %1391
    %1393 = vrot.lane.b32.xlu0 %v1352, 96
    %v1394 = vpop.permute.xlu0 %1393
    %1395 = vrot.lane.b32.xlu0 %v1353, 96
    %v1396 = vpop.permute.xlu0 %1395
    %1397 = vrot.lane.b32.xlu0 %v1354, 96
    %v1398 = vpop.permute.xlu0 %1397
    %1399 = vrot.lane.b32.xlu0 %v1355, 96
    %v1400 = vpop.permute.xlu0 %1399
    %1401 = vrot.lane.b32.xlu0 %v1356, 96
    %v1402 = vpop.permute.xlu0 %1401
    %1403 = vrot.lane.b32.xlu0 %v1357, 96
    %v1404 = vpop.permute.xlu0 %1403
    %1405 = vrot.lane.b32.xlu0 %v1358, 96
    %v1406 = vpop.permute.xlu0 %1405
    %v1407 = vsel %vm126, %v1376, 0
    %v1409 = vsel %vm126, %v1378, 0
    %v1411 = vsel %vm126, %v1380, 0
    %v1413 = vsel %vm126, %v1382, 0
    %v1415 = vsel %vm126, %v1384, 0
    %v1417 = vsel %vm126, %v1386, 0
    %v1419 = vsel %vm126, %v1388, 0
    %v1421 = vsel %vm126, %v1390, 0
    %v1423 = vsel %vm126, %v1392, 0
    %v1425 = vsel %vm126, %v1394, 0
    %v1427 = vsel %vm126, %v1396, 0
    %v1429 = vsel %vm126, %v1398, 0
    %v1431 = vsel %vm126, %v1400, 0
    %v1433 = vsel %vm126, %v1402, 0
    %v1435 = vsel %vm126, %v1404, 0
    %v1437 = vsel %vm126, %v1406, 0
    %1439 = vmatpush.msra.mxu0 0.0
    %1440 = vmatpush.msra.mxu0 0.0
    %1441 = vmatpush.msra.mxu0 0.0
    %1442 = vmatpush.msra.mxu0 0.0
    %1443 = vmatpush.msra.mxu0 0.0
    %1444 = vmatpush.msra.mxu0 0.0
    %1445 = vmatpush.msra.mxu0 0.0
    %1446 = vmatpush.msra.mxu0 0.0
    %1447 = vmatpush.msra.mxu0 0.0
    %1448 = vmatpush.msra.mxu0 0.0
    %1449 = vmatpush.msra.mxu0 0.0
    %1450 = vmatpush.msra.mxu0 0.0
    %1451 = vmatpush.msra.mxu0 %v121
    %1452 = vmatpush.msra.mxu0 %v120
    %1453 = vmatpush.msra.mxu0 %v119
    %1454 = vmatpush.msra.mxu0 %v118
    %1455 = vmatmul.f32.gmra.mxu0 %v1407
    %v1456 = vpop.f32.mrf.mxu0
    %v1457 = vadd.f32 0.0, %v1456
    %1458 = vmatmul.f32.gmra.mxu0 %v1409
    %v1459 = vpop.f32.mrf.mxu0
    %v1460 = vadd.f32 0.0, %v1459
    %1461 = vmatmul.f32.gmra.mxu0 %v1411
    %v1462 = vpop.f32.mrf.mxu0
    %v1463 = vadd.f32 0.0, %v1462
    %1464 = vmatmul.f32.gmra.mxu0 %v1413
    %v1465 = vpop.f32.mrf.mxu0
    %v1466 = vadd.f32 0.0, %v1465
    %1467 = vmatmul.f32.gmra.mxu0 %v1415
    %v1468 = vpop.f32.mrf.mxu0
    %v1469 = vadd.f32 0.0, %v1468
    %1470 = vmatmul.f32.gmra.mxu0 %v1417
    %v1471 = vpop.f32.mrf.mxu0
    %v1472 = vadd.f32 0.0, %v1471
    %1473 = vmatmul.f32.gmra.mxu0 %v1419
    %v1474 = vpop.f32.mrf.mxu0
    %v1475 = vadd.f32 0.0, %v1474
    %1476 = vmatmul.f32.gmra.mxu0 %v1421
    %v1477 = vpop.f32.mrf.mxu0
    %v1478 = vadd.f32 0.0, %v1477
    %1479 = vmatmul.f32.gmra.mxu0 %v1423
    %v1480 = vpop.f32.mrf.mxu0
    %v1481 = vadd.f32 0.0, %v1480
    %1482 = vmatmul.f32.gmra.mxu0 %v1425
    %v1483 = vpop.f32.mrf.mxu0
    %v1484 = vadd.f32 0.0, %v1483
    %1485 = vmatmul.f32.gmra.mxu0 %v1427
    %v1486 = vpop.f32.mrf.mxu0
    %v1487 = vadd.f32 0.0, %v1486
    %1488 = vmatmul.f32.gmra.mxu0 %v1429
    %v1489 = vpop.f32.mrf.mxu0
    %v1490 = vadd.f32 0.0, %v1489
    %1491 = vmatmul.f32.gmra.mxu0 %v1431
    %v1492 = vpop.f32.mrf.mxu0
    %v1493 = vadd.f32 0.0, %v1492
    %1494 = vmatmul.f32.gmra.mxu0 %v1433
    %v1495 = vpop.f32.mrf.mxu0
    %v1496 = vadd.f32 0.0, %v1495
    %1497 = vmatmul.f32.gmra.mxu0 %v1435
    %v1498 = vpop.f32.mrf.mxu0
    %v1499 = vadd.f32 0.0, %v1498
    %1500 = vmatmul.f32.gmra.mxu0 %v1437
    %v1501 = vpop.f32.mrf.mxu0
    %v1502 = vadd.f32 0.0, %v1501
    %1503 = vdwg.mxu0
    %1504 = vmatpush.msra.mxu0 0.0
    %1505 = vmatpush.msra.mxu0 0.0
    %1506 = vmatpush.msra.mxu0 0.0
    %1507 = vmatpush.msra.mxu0 0.0
    %1508 = vmatpush.msra.mxu0 0.0
    %1509 = vmatpush.msra.mxu0 0.0
    %1510 = vmatpush.msra.mxu0 0.0
    %1511 = vmatpush.msra.mxu0 0.0
    %1512 = vmatpush.msra.mxu0 0.0
    %1513 = vmatpush.msra.mxu0 0.0
    %1514 = vmatpush.msra.mxu0 0.0
    %1515 = vmatpush.msra.mxu0 0.0
    %1516 = vmatpush.msra.mxu0 %v243
    %1517 = vmatpush.msra.mxu0 %v242
    %1518 = vmatpush.msra.mxu0 %v241
    %1519 = vmatpush.msra.mxu0 %v240
    %1520 = vmatmul.f32.gmra.mxu0 %v1407
    %v1521 = vpop.f32.mrf.mxu0
    %v1522 = vadd.f32 0.0, %v1521
    %1523 = vmatmul.f32.gmra.mxu0 %v1409
    %v1524 = vpop.f32.mrf.mxu0
    %v1525 = vadd.f32 0.0, %v1524
    %1526 = vmatmul.f32.gmra.mxu0 %v1411
    %v1527 = vpop.f32.mrf.mxu0
    %v1528 = vadd.f32 0.0, %v1527
    %1529 = vmatmul.f32.gmra.mxu0 %v1413
    %v1530 = vpop.f32.mrf.mxu0
    %v1531 = vadd.f32 0.0, %v1530
    %1532 = vmatmul.f32.gmra.mxu0 %v1415
    %v1533 = vpop.f32.mrf.mxu0
    %v1534 = vadd.f32 0.0, %v1533
    %1535 = vmatmul.f32.gmra.mxu0 %v1417
    %v1536 = vpop.f32.mrf.mxu0
    %v1537 = vadd.f32 0.0, %v1536
    %1538 = vmatmul.f32.gmra.mxu0 %v1419
    %v1539 = vpop.f32.mrf.mxu0
    %v1540 = vadd.f32 0.0, %v1539
    %1541 = vmatmul.f32.gmra.mxu0 %v1421
    %v1542 = vpop.f32.mrf.mxu0
    %v1543 = vadd.f32 0.0, %v1542
    %1544 = vmatmul.f32.gmra.mxu0 %v1423
    %v1545 = vpop.f32.mrf.mxu0
    %v1546 = vadd.f32 0.0, %v1545
    %1547 = vmatmul.f32.gmra.mxu0 %v1425
    %v1548 = vpop.f32.mrf.mxu0
    %v1549 = vadd.f32 0.0, %v1548
    %1550 = vmatmul.f32.gmra.mxu0 %v1427
    %v1551 = vpop.f32.mrf.mxu0
    %v1552 = vadd.f32 0.0, %v1551
    %1553 = vmatmul.f32.gmra.mxu0 %v1429
    %v1554 = vpop.f32.mrf.mxu0
    %v1555 = vadd.f32 0.0, %v1554
    %1556 = vmatmul.f32.gmra.mxu0 %v1431
    %v1557 = vpop.f32.mrf.mxu0
    %v1558 = vadd.f32 0.0, %v1557
    %1559 = vmatmul.f32.gmra.mxu0 %v1433
    %v1560 = vpop.f32.mrf.mxu0
    %v1561 = vadd.f32 0.0, %v1560
    %1562 = vmatmul.f32.gmra.mxu0 %v1435
    %v1563 = vpop.f32.mrf.mxu0
    %v1564 = vadd.f32 0.0, %v1563
    %1565 = vmatmul.f32.gmra.mxu0 %v1437
    %v1566 = vpop.f32.mrf.mxu0
    %v1567 = vadd.f32 0.0, %v1566
    %1568 = vdwg.mxu0
    %1569 = vmatpush.msra.mxu0 %v1567
    %1570 = vmatpush.msra.mxu0 %v1564
    %1571 = vmatpush.msra.mxu0 %v1561
    %1572 = vmatpush.msra.mxu0 %v1558
    %1573 = vmatpush.msra.mxu0 %v1555
    %1574 = vmatpush.msra.mxu0 %v1552
    %1575 = vmatpush.msra.mxu0 %v1549
    %1576 = vmatpush.msra.mxu0 %v1546
    %1577 = vmatpush.msra.mxu0 %v1543
    %1578 = vmatpush.msra.mxu0 %v1540
    %1579 = vmatpush.msra.mxu0 %v1537
    %1580 = vmatpush.msra.mxu0 %v1534
    %1581 = vmatpush.msra.mxu0 %v1531
    %1582 = vmatpush.msra.mxu0 %v1528
    %1583 = vmatpush.msra.mxu0 %v1525
    %1584 = vmatpush.msra.mxu0 %v1522
    %1585 = vmatmul.f32.gmra.mxu0 %v309
    %v1586 = vpop.f32.mrf.mxu0
    %v1587 = vadd.f32 0.0, %v1586
    %1588 = vmatmul.f32.gmra.mxu0 %v310
    %v1589 = vpop.f32.mrf.mxu0
    %v1590 = vadd.f32 0.0, %v1589
    %1591 = vmatmul.f32.gmra.mxu0 %v311
    %v1592 = vpop.f32.mrf.mxu0
    %v1593 = vadd.f32 0.0, %v1592
    %1594 = vmatmul.f32.gmra.mxu0 %v312
    %v1595 = vpop.f32.mrf.mxu0
    %v1596 = vadd.f32 0.0, %v1595
    %1597 = vmatmul.f32.gmra.mxu0 %v313
    %v1598 = vpop.f32.mrf.mxu0
    %v1599 = vadd.f32 0.0, %v1598
    %1600 = vmatmul.f32.gmra.mxu0 %v314
    %v1601 = vpop.f32.mrf.mxu0
    %v1602 = vadd.f32 0.0, %v1601
    %1603 = vmatmul.f32.gmra.mxu0 %v315
    %v1604 = vpop.f32.mrf.mxu0
    %v1605 = vadd.f32 0.0, %v1604
    %1606 = vmatmul.f32.gmra.mxu0 %v316
    %v1607 = vpop.f32.mrf.mxu0
    %v1608 = vadd.f32 0.0, %v1607
    %1609 = vmatmul.f32.gmra.mxu0 %v317
    %v1610 = vpop.f32.mrf.mxu0
    %v1611 = vadd.f32 0.0, %v1610
    %1612 = vmatmul.f32.gmra.mxu0 %v318
    %v1613 = vpop.f32.mrf.mxu0
    %v1614 = vadd.f32 0.0, %v1613
    %1615 = vmatmul.f32.gmra.mxu0 %v319
    %v1616 = vpop.f32.mrf.mxu0
    %v1617 = vadd.f32 0.0, %v1616
    %1618 = vmatmul.f32.gmra.mxu0 %v320
    %v1619 = vpop.f32.mrf.mxu0
    %v1620 = vadd.f32 0.0, %v1619
    %1621 = vmatmul.f32.gmra.mxu0 %v321
    %v1622 = vpop.f32.mrf.mxu0
    %v1623 = vadd.f32 0.0, %v1622
    %1624 = vmatmul.f32.gmra.mxu0 %v322
    %v1625 = vpop.f32.mrf.mxu0
    %v1626 = vadd.f32 0.0, %v1625
    %1627 = vmatmul.f32.gmra.mxu0 %v323
    %v1628 = vpop.f32.mrf.mxu0
    %v1629 = vadd.f32 0.0, %v1628
    %1630 = vmatmul.f32.gmra.mxu0 %v324
    %v1631 = vpop.f32.mrf.mxu0
    %v1632 = vadd.f32 0.0, %v1631
    %1633 = vdwg.mxu0
    %v1634 = vadd.f32 %v98, %v1587
    %v1635 = vadd.f32 %v99, %v1590
    %v1636 = vadd.f32 %v100, %v1593
    %v1637 = vadd.f32 %v101, %v1596
    %v1638 = vadd.f32 %v102, %v1599
    %v1639 = vadd.f32 %v103, %v1602
    %v1640 = vadd.f32 %v104, %v1605
    %v1641 = vadd.f32 %v105, %v1608
    %v1642 = vadd.f32 %v106, %v1611
    %v1643 = vadd.f32 %v107, %v1614
    %v1644 = vadd.f32 %v108, %v1617
    %v1645 = vadd.f32 %v109, %v1620
    %v1646 = vadd.f32 %v110, %v1623
    %v1647 = vadd.f32 %v111, %v1626
    %v1648 = vadd.f32 %v112, %v1629
    %v1649 = vadd.f32 %v113, %v1632
    %1650 = vmatpush.msra.mxu0 0.0
    %1651 = vmatpush.msra.mxu0 0.0
    %1652 = vmatpush.msra.mxu0 0.0
    %1653 = vmatpush.msra.mxu0 0.0
    %1654 = vmatpush.msra.mxu0 0.0
    %1655 = vmatpush.msra.mxu0 0.0
    %1656 = vmatpush.msra.mxu0 0.0
    %1657 = vmatpush.msra.mxu0 0.0
    %1658 = vmatpush.msra.mxu0 0.0
    %1659 = vmatpush.msra.mxu0 0.0
    %1660 = vmatpush.msra.mxu0 0.0
    %1661 = vmatpush.msra.mxu0 0.0
    %1662 = vmatpush.msra.mxu0 %v410
    %1663 = vmatpush.msra.mxu0 %v409
    %1664 = vmatpush.msra.mxu0 %v408
    %1665 = vmatpush.msra.mxu0 %v407
    %1666 = vmatmul.f32.gmra.mxu0 %v1407
    %v1667 = vpop.f32.mrf.mxu0
    %v1668 = vadd.f32 0.0, %v1667
    %1669 = vmatmul.f32.gmra.mxu0 %v1409
    %v1670 = vpop.f32.mrf.mxu0
    %v1671 = vadd.f32 0.0, %v1670
    %1672 = vmatmul.f32.gmra.mxu0 %v1411
    %v1673 = vpop.f32.mrf.mxu0
    %v1674 = vadd.f32 0.0, %v1673
    %1675 = vmatmul.f32.gmra.mxu0 %v1413
    %v1676 = vpop.f32.mrf.mxu0
    %v1677 = vadd.f32 0.0, %v1676
    %1678 = vmatmul.f32.gmra.mxu0 %v1415
    %v1679 = vpop.f32.mrf.mxu0
    %v1680 = vadd.f32 0.0, %v1679
    %1681 = vmatmul.f32.gmra.mxu0 %v1417
    %v1682 = vpop.f32.mrf.mxu0
    %v1683 = vadd.f32 0.0, %v1682
    %1684 = vmatmul.f32.gmra.mxu0 %v1419
    %v1685 = vpop.f32.mrf.mxu0
    %v1686 = vadd.f32 0.0, %v1685
    %1687 = vmatmul.f32.gmra.mxu0 %v1421
    %v1688 = vpop.f32.mrf.mxu0
    %v1689 = vadd.f32 0.0, %v1688
    %1690 = vmatmul.f32.gmra.mxu0 %v1423
    %v1691 = vpop.f32.mrf.mxu0
    %v1692 = vadd.f32 0.0, %v1691
    %1693 = vmatmul.f32.gmra.mxu0 %v1425
    %v1694 = vpop.f32.mrf.mxu0
    %v1695 = vadd.f32 0.0, %v1694
    %1696 = vmatmul.f32.gmra.mxu0 %v1427
    %v1697 = vpop.f32.mrf.mxu0
    %v1698 = vadd.f32 0.0, %v1697
    %1699 = vmatmul.f32.gmra.mxu0 %v1429
    %v1700 = vpop.f32.mrf.mxu0
    %v1701 = vadd.f32 0.0, %v1700
    %1702 = vmatmul.f32.gmra.mxu0 %v1431
    %v1703 = vpop.f32.mrf.mxu0
    %v1704 = vadd.f32 0.0, %v1703
    %1705 = vmatmul.f32.gmra.mxu0 %v1433
    %v1706 = vpop.f32.mrf.mxu0
    %v1707 = vadd.f32 0.0, %v1706
    %1708 = vmatmul.f32.gmra.mxu0 %v1435
    %v1709 = vpop.f32.mrf.mxu0
    %v1710 = vadd.f32 0.0, %v1709
    %1711 = vmatmul.f32.gmra.mxu0 %v1437
    %v1712 = vpop.f32.mrf.mxu0
    %v1713 = vadd.f32 0.0, %v1712
    %1714 = vdwg.mxu0
    %1715 = vmatpush.msra.mxu0 %v1713
    %1716 = vmatpush.msra.mxu0 %v1710
    %1717 = vmatpush.msra.mxu0 %v1707
    %1718 = vmatpush.msra.mxu0 %v1704
    %1719 = vmatpush.msra.mxu0 %v1701
    %1720 = vmatpush.msra.mxu0 %v1698
    %1721 = vmatpush.msra.mxu0 %v1695
    %1722 = vmatpush.msra.mxu0 %v1692
    %1723 = vmatpush.msra.mxu0 %v1689
    %1724 = vmatpush.msra.mxu0 %v1686
    %1725 = vmatpush.msra.mxu0 %v1683
    %1726 = vmatpush.msra.mxu0 %v1680
    %1727 = vmatpush.msra.mxu0 %v1677
    %1728 = vmatpush.msra.mxu0 %v1674
    %1729 = vmatpush.msra.mxu0 %v1671
    %1730 = vmatpush.msra.mxu0 %v1668
    %1731 = vmatmul.f32.gmra.mxu0 %v477
    %v1732 = vpop.f32.mrf.mxu0
    %v1733 = vadd.f32 0.0, %v1732
    %1734 = vmatmul.f32.gmra.mxu0 %v478
    %v1735 = vpop.f32.mrf.mxu0
    %v1736 = vadd.f32 0.0, %v1735
    %1737 = vmatmul.f32.gmra.mxu0 %v479
    %v1738 = vpop.f32.mrf.mxu0
    %v1739 = vadd.f32 0.0, %v1738
    %1740 = vmatmul.f32.gmra.mxu0 %v480
    %v1741 = vpop.f32.mrf.mxu0
    %v1742 = vadd.f32 0.0, %v1741
    %1743 = vmatmul.f32.gmra.mxu0 %v481
    %v1744 = vpop.f32.mrf.mxu0
    %v1745 = vadd.f32 0.0, %v1744
    %1746 = vmatmul.f32.gmra.mxu0 %v482
    %v1747 = vpop.f32.mrf.mxu0
    %v1748 = vadd.f32 0.0, %v1747
    %1749 = vmatmul.f32.gmra.mxu0 %v483
    %v1750 = vpop.f32.mrf.mxu0
    %v1751 = vadd.f32 0.0, %v1750
    %1752 = vmatmul.f32.gmra.mxu0 %v484
    %v1753 = vpop.f32.mrf.mxu0
    %v1754 = vadd.f32 0.0, %v1753
    %1755 = vmatmul.f32.gmra.mxu0 %v485
    %v1756 = vpop.f32.mrf.mxu0
    %v1757 = vadd.f32 0.0, %v1756
    %1758 = vmatmul.f32.gmra.mxu0 %v486
    %v1759 = vpop.f32.mrf.mxu0
    %v1760 = vadd.f32 0.0, %v1759
    %1761 = vmatmul.f32.gmra.mxu0 %v487
    %v1762 = vpop.f32.mrf.mxu0
    %v1763 = vadd.f32 0.0, %v1762
    %1764 = vmatmul.f32.gmra.mxu0 %v488
    %v1765 = vpop.f32.mrf.mxu0
    %v1766 = vadd.f32 0.0, %v1765
    %1767 = vmatmul.f32.gmra.mxu0 %v489
    %v1768 = vpop.f32.mrf.mxu0
    %v1769 = vadd.f32 0.0, %v1768
    %1770 = vmatmul.f32.gmra.mxu0 %v490
    %v1771 = vpop.f32.mrf.mxu0
    %v1772 = vadd.f32 0.0, %v1771
    %1773 = vmatmul.f32.gmra.mxu0 %v491
    %v1774 = vpop.f32.mrf.mxu0
    %v1775 = vadd.f32 0.0, %v1774
    %1776 = vmatmul.f32.gmra.mxu0 %v492
    %v1777 = vpop.f32.mrf.mxu0
    %v1778 = vadd.f32 0.0, %v1777
    %1779 = vdwg.mxu0
    %v1780 = vadd.f32 %v1634, %v1733
    %v1781 = vadd.f32 %v1635, %v1736
    %v1782 = vadd.f32 %v1636, %v1739
    %v1783 = vadd.f32 %v1637, %v1742
    %v1784 = vadd.f32 %v1638, %v1745
    %v1785 = vadd.f32 %v1639, %v1748
    %v1786 = vadd.f32 %v1640, %v1751
    %v1787 = vadd.f32 %v1641, %v1754
    %v1788 = vadd.f32 %v1642, %v1757
    %v1789 = vadd.f32 %v1643, %v1760
    %v1790 = vadd.f32 %v1644, %v1763
    %v1791 = vadd.f32 %v1645, %v1766
    %v1792 = vadd.f32 %v1646, %v1769
    %v1793 = vadd.f32 %v1647, %v1772
    %v1794 = vadd.f32 %v1648, %v1775
    %v1795 = vadd.f32 %v1649, %v1778
    %v1797 = vsel %vm126, %v1780, 0
    %v1800 = vsel %vm126, %v1781, 0
    %v1803 = vsel %vm126, %v1782, 0
    %v1806 = vsel %vm126, %v1783, 0
    %v1809 = vsel %vm126, %v1784, 0
    %v1812 = vsel %vm126, %v1785, 0
    %v1815 = vsel %vm126, %v1786, 0
    %v1818 = vsel %vm126, %v1787, 0
    %v1821 = vsel %vm126, %v1788, 0
    %v1824 = vsel %vm126, %v1789, 0
    %v1827 = vsel %vm126, %v1790, 0
    %v1830 = vsel %vm126, %v1791, 0
    %v1833 = vsel %vm126, %v1792, 0
    %v1836 = vsel %vm126, %v1793, 0
    %v1839 = vsel %vm126, %v1794, 0
    %v1842 = vsel %vm126, %v1795, 0
    %1844 = vmatpush.msra.mxu0 0.0
    %1845 = vmatpush.msra.mxu0 0.0
    %1846 = vmatpush.msra.mxu0 0.0
    %1847 = vmatpush.msra.mxu0 0.0
    %1848 = vmatpush.msra.mxu0 0.0
    %1849 = vmatpush.msra.mxu0 0.0
    %1850 = vmatpush.msra.mxu0 0.0
    %1851 = vmatpush.msra.mxu0 0.0
    %1852 = vmatpush.msra.mxu0 0.0
    %1853 = vmatpush.msra.mxu0 0.0
    %1854 = vmatpush.msra.mxu0 0.0
    %1855 = vmatpush.msra.mxu0 0.0
    %1856 = vmatpush.msra.mxu0 %v117
    %1857 = vmatpush.msra.mxu0 %v116
    %1858 = vmatpush.msra.mxu0 %v115
    %1859 = vmatpush.msra.mxu0 %v114
    %1860 = vmatmul.f32.gmra.mxu0 %v1797
    %v1861 = vpop.f32.mrf.mxu0
    %v1862 = vadd.f32 %v1457, %v1861
    %1863 = vmatmul.f32.gmra.mxu0 %v1800
    %v1864 = vpop.f32.mrf.mxu0
    %v1865 = vadd.f32 %v1460, %v1864
    %1866 = vmatmul.f32.gmra.mxu0 %v1803
    %v1867 = vpop.f32.mrf.mxu0
    %v1868 = vadd.f32 %v1463, %v1867
    %1869 = vmatmul.f32.gmra.mxu0 %v1806
    %v1870 = vpop.f32.mrf.mxu0
    %v1871 = vadd.f32 %v1466, %v1870
    %1872 = vmatmul.f32.gmra.mxu0 %v1809
    %v1873 = vpop.f32.mrf.mxu0
    %v1874 = vadd.f32 %v1469, %v1873
    %1875 = vmatmul.f32.gmra.mxu0 %v1812
    %v1876 = vpop.f32.mrf.mxu0
    %v1877 = vadd.f32 %v1472, %v1876
    %1878 = vmatmul.f32.gmra.mxu0 %v1815
    %v1879 = vpop.f32.mrf.mxu0
    %v1880 = vadd.f32 %v1475, %v1879
    %1881 = vmatmul.f32.gmra.mxu0 %v1818
    %v1882 = vpop.f32.mrf.mxu0
    %v1883 = vadd.f32 %v1478, %v1882
    %1884 = vmatmul.f32.gmra.mxu0 %v1821
    %v1885 = vpop.f32.mrf.mxu0
    %v1886 = vadd.f32 %v1481, %v1885
    %1887 = vmatmul.f32.gmra.mxu0 %v1824
    %v1888 = vpop.f32.mrf.mxu0
    %v1889 = vadd.f32 %v1484, %v1888
    %1890 = vmatmul.f32.gmra.mxu0 %v1827
    %v1891 = vpop.f32.mrf.mxu0
    %v1892 = vadd.f32 %v1487, %v1891
    %1893 = vmatmul.f32.gmra.mxu0 %v1830
    %v1894 = vpop.f32.mrf.mxu0
    %v1895 = vadd.f32 %v1490, %v1894
    %1896 = vmatmul.f32.gmra.mxu0 %v1833
    %v1897 = vpop.f32.mrf.mxu0
    %v1898 = vadd.f32 %v1493, %v1897
    %1899 = vmatmul.f32.gmra.mxu0 %v1836
    %v1900 = vpop.f32.mrf.mxu0
    %v1901 = vadd.f32 %v1496, %v1900
    %1902 = vmatmul.f32.gmra.mxu0 %v1839
    %v1903 = vpop.f32.mrf.mxu0
    %v1904 = vadd.f32 %v1499, %v1903
    %1905 = vmatmul.f32.gmra.mxu0 %v1842
    %v1906 = vpop.f32.mrf.mxu0
    %v1907 = vadd.f32 %v1502, %v1906
    %1908 = vdwg.mxu0
    %v1909 = vadd.f32 %v1862, %v124
    %v1910 = vadd.f32 %v1865, %v124
    %v1911 = vadd.f32 %v1868, %v124
    %v1912 = vadd.f32 %v1871, %v124
    %v1913 = vadd.f32 %v1874, %v124
    %v1914 = vadd.f32 %v1877, %v124
    %v1915 = vadd.f32 %v1880, %v124
    %v1916 = vadd.f32 %v1883, %v124
    %v1917 = vadd.f32 %v1886, %v124
    %v1918 = vadd.f32 %v1889, %v124
    %v1919 = vadd.f32 %v1892, %v124
    %v1920 = vadd.f32 %v1895, %v124
    %v1921 = vadd.f32 %v1898, %v124
    %v1922 = vadd.f32 %v1901, %v124
    %v1923 = vadd.f32 %v1904, %v124
    %v1924 = vadd.f32 %v1907, %v124
    %v1925 = vxor.u32 %v1909, 2147483648
    %v1926 = vxor.u32 %v1910, 2147483648
    %v1927 = vxor.u32 %v1911, 2147483648
    %v1928 = vxor.u32 %v1912, 2147483648
    %v1929 = vxor.u32 %v1913, 2147483648
    %v1930 = vxor.u32 %v1914, 2147483648
    %v1931 = vxor.u32 %v1915, 2147483648
    %v1932 = vxor.u32 %v1916, 2147483648
    %v1933 = vxor.u32 %v1917, 2147483648
    %v1934 = vxor.u32 %v1918, 2147483648
    %v1935 = vxor.u32 %v1919, 2147483648
    %v1936 = vxor.u32 %v1920, 2147483648
    %v1937 = vxor.u32 %v1921, 2147483648
    %v1938 = vxor.u32 %v1922, 2147483648
    %v1939 = vxor.u32 %v1923, 2147483648
    %v1940 = vxor.u32 %v1924, 2147483648
    %v1941 = vmul.f32 %v1925, 1.442695
    %v1942 = vpow.pop %v1941
    %v1943 = vmul.f32 %v1926, 1.442695
    %v1944 = vpow.pop %v1943
    %v1945 = vmul.f32 %v1927, 1.442695
    %v1946 = vpow.pop %v1945
    %v1947 = vmul.f32 %v1928, 1.442695
    %v1948 = vpow.pop %v1947
    %v1949 = vmul.f32 %v1929, 1.442695
    %v1950 = vpow.pop %v1949
    %v1951 = vmul.f32 %v1930, 1.442695
    %v1952 = vpow.pop %v1951
    %v1953 = vmul.f32 %v1931, 1.442695
    %v1954 = vpow.pop %v1953
    %v1955 = vmul.f32 %v1932, 1.442695
    %v1956 = vpow.pop %v1955
    %v1957 = vmul.f32 %v1933, 1.442695
    %v1958 = vpow.pop %v1957
    %v1959 = vmul.f32 %v1934, 1.442695
    %v1960 = vpow.pop %v1959
    %v1961 = vmul.f32 %v1935, 1.442695
    %v1962 = vpow.pop %v1961
    %v1963 = vmul.f32 %v1936, 1.442695
    %v1964 = vpow.pop %v1963
    %v1965 = vmul.f32 %v1937, 1.442695
    %v1966 = vpow.pop %v1965
    %v1967 = vmul.f32 %v1938, 1.442695
    %v1968 = vpow.pop %v1967
    %v1969 = vmul.f32 %v1939, 1.442695
    %v1970 = vpow.pop %v1969
    %v1971 = vmul.f32 %v1940, 1.442695
    %v1972 = vpow.pop %v1971
    %v1973 = vadd.f32 %v1942, 1.0
    %v1974 = vadd.f32 %v1944, 1.0
    %v1975 = vadd.f32 %v1946, 1.0
    %v1976 = vadd.f32 %v1948, 1.0
    %v1977 = vadd.f32 %v1950, 1.0
    %v1978 = vadd.f32 %v1952, 1.0
    %v1979 = vadd.f32 %v1954, 1.0
    %v1980 = vadd.f32 %v1956, 1.0
    %v1981 = vadd.f32 %v1958, 1.0
    %v1982 = vadd.f32 %v1960, 1.0
    %v1983 = vadd.f32 %v1962, 1.0
    %v1984 = vadd.f32 %v1964, 1.0
    %v1985 = vadd.f32 %v1966, 1.0
    %v1986 = vadd.f32 %v1968, 1.0
    %v1987 = vadd.f32 %v1970, 1.0
    %v1988 = vadd.f32 %v1972, 1.0
    %v1989 = vrcp.pop %v1973
    %v1990 = vmul.f32 %v1973, %v1989
    %v1991 = vsub.f32 1.0, %v1990
    %v1992 = vmul.f32 %v1989, %v1991
    %v1993 = vadd.f32 %v1989, %v1992
    %vm1994 = vweird.f32 %v1973
    %vm1995 = vweird.f32 %v1989
    %vm1996 = vmor %vm1994, %vm1995
    %v1997 = vsel %vm1996, %v1989, %v1993
    %v1998 = vand.u32 2147483647, %v1973
    %vm1999 = vcmp.eq.f32.partialorder %v1998, 8.507059e+37
    %v2000 = vand.u32 %v1973, 2147483648
    %v2001 = vor.u32 1.1754944e-38, %v2000
    %v2002 = vsel %vm1999, %v2001, %v1997
    %v2003 = vmul.f32 1.0, %v2002
    %v2004 = vrcp.pop %v1974
    %v2005 = vmul.f32 %v1974, %v2004
    %v2006 = vsub.f32 1.0, %v2005
    %v2007 = vmul.f32 %v2004, %v2006
    %v2008 = vadd.f32 %v2004, %v2007
    %vm2009 = vweird.f32 %v1974
    %vm2010 = vweird.f32 %v2004
    %vm2011 = vmor %vm2009, %vm2010
    %v2012 = vsel %vm2011, %v2004, %v2008
    %v2013 = vand.u32 2147483647, %v1974
    %vm2014 = vcmp.eq.f32.partialorder %v2013, 8.507059e+37
    %v2015 = vand.u32 %v1974, 2147483648
    %v2016 = vor.u32 1.1754944e-38, %v2015
    %v2017 = vsel %vm2014, %v2016, %v2012
    %v2018 = vmul.f32 1.0, %v2017
    %v2019 = vrcp.pop %v1975
    %v2020 = vmul.f32 %v1975, %v2019
    %v2021 = vsub.f32 1.0, %v2020
    %v2022 = vmul.f32 %v2019, %v2021
    %v2023 = vadd.f32 %v2019, %v2022
    %vm2024 = vweird.f32 %v1975
    %vm2025 = vweird.f32 %v2019
    %vm2026 = vmor %vm2024, %vm2025
    %v2027 = vsel %vm2026, %v2019, %v2023
    %v2028 = vand.u32 2147483647, %v1975
    %vm2029 = vcmp.eq.f32.partialorder %v2028, 8.507059e+37
    %v2030 = vand.u32 %v1975, 2147483648
    %v2031 = vor.u32 1.1754944e-38, %v2030
    %v2032 = vsel %vm2029, %v2031, %v2027
    %v2033 = vmul.f32 1.0, %v2032
    %v2034 = vrcp.pop %v1976
    %v2035 = vmul.f32 %v1976, %v2034
    %v2036 = vsub.f32 1.0, %v2035
    %v2037 = vmul.f32 %v2034, %v2036
    %v2038 = vadd.f32 %v2034, %v2037
    %vm2039 = vweird.f32 %v1976
    %vm2040 = vweird.f32 %v2034
    %vm2041 = vmor %vm2039, %vm2040
    %v2042 = vsel %vm2041, %v2034, %v2038
    %v2043 = vand.u32 2147483647, %v1976
    %vm2044 = vcmp.eq.f32.partialorder %v2043, 8.507059e+37
    %v2045 = vand.u32 %v1976, 2147483648
    %v2046 = vor.u32 1.1754944e-38, %v2045
    %v2047 = vsel %vm2044, %v2046, %v2042
    %v2048 = vmul.f32 1.0, %v2047
    %v2049 = vrcp.pop %v1977
    %v2050 = vmul.f32 %v1977, %v2049
    %v2051 = vsub.f32 1.0, %v2050
    %v2052 = vmul.f32 %v2049, %v2051
    %v2053 = vadd.f32 %v2049, %v2052
    %vm2054 = vweird.f32 %v1977
    %vm2055 = vweird.f32 %v2049
    %vm2056 = vmor %vm2054, %vm2055
    %v2057 = vsel %vm2056, %v2049, %v2053
    %v2058 = vand.u32 2147483647, %v1977
    %vm2059 = vcmp.eq.f32.partialorder %v2058, 8.507059e+37
    %v2060 = vand.u32 %v1977, 2147483648
    %v2061 = vor.u32 1.1754944e-38, %v2060
    %v2062 = vsel %vm2059, %v2061, %v2057
    %v2063 = vmul.f32 1.0, %v2062
    %v2064 = vrcp.pop %v1978
    %v2065 = vmul.f32 %v1978, %v2064
    %v2066 = vsub.f32 1.0, %v2065
    %v2067 = vmul.f32 %v2064, %v2066
    %v2068 = vadd.f32 %v2064, %v2067
    %vm2069 = vweird.f32 %v1978
    %vm2070 = vweird.f32 %v2064
    %vm2071 = vmor %vm2069, %vm2070
    %v2072 = vsel %vm2071, %v2064, %v2068
    %v2073 = vand.u32 2147483647, %v1978
    %vm2074 = vcmp.eq.f32.partialorder %v2073, 8.507059e+37
    %v2075 = vand.u32 %v1978, 2147483648
    %v2076 = vor.u32 1.1754944e-38, %v2075
    %v2077 = vsel %vm2074, %v2076, %v2072
    %v2078 = vmul.f32 1.0, %v2077
    %v2079 = vrcp.pop %v1979
    %v2080 = vmul.f32 %v1979, %v2079
    %v2081 = vsub.f32 1.0, %v2080
    %v2082 = vmul.f32 %v2079, %v2081
    %v2083 = vadd.f32 %v2079, %v2082
    %vm2084 = vweird.f32 %v1979
    %vm2085 = vweird.f32 %v2079
    %vm2086 = vmor %vm2084, %vm2085
    %v2087 = vsel %vm2086, %v2079, %v2083
    %v2088 = vand.u32 2147483647, %v1979
    %vm2089 = vcmp.eq.f32.partialorder %v2088, 8.507059e+37
    %v2090 = vand.u32 %v1979, 2147483648
    %v2091 = vor.u32 1.1754944e-38, %v2090
    %v2092 = vsel %vm2089, %v2091, %v2087
    %v2093 = vmul.f32 1.0, %v2092
    %v2094 = vrcp.pop %v1980
    %v2095 = vmul.f32 %v1980, %v2094
    %v2096 = vsub.f32 1.0, %v2095
    %v2097 = vmul.f32 %v2094, %v2096
    %v2098 = vadd.f32 %v2094, %v2097
    %vm2099 = vweird.f32 %v1980
    %vm2100 = vweird.f32 %v2094
    %vm2101 = vmor %vm2099, %vm2100
    %v2102 = vsel %vm2101, %v2094, %v2098
    %v2103 = vand.u32 2147483647, %v1980
    %vm2104 = vcmp.eq.f32.partialorder %v2103, 8.507059e+37
    %v2105 = vand.u32 %v1980, 2147483648
    %v2106 = vor.u32 1.1754944e-38, %v2105
    %v2107 = vsel %vm2104, %v2106, %v2102
    %v2108 = vmul.f32 1.0, %v2107
    %v2109 = vrcp.pop %v1981
    %v2110 = vmul.f32 %v1981, %v2109
    %v2111 = vsub.f32 1.0, %v2110
    %v2112 = vmul.f32 %v2109, %v2111
    %v2113 = vadd.f32 %v2109, %v2112
    %vm2114 = vweird.f32 %v1981
    %vm2115 = vweird.f32 %v2109
    %vm2116 = vmor %vm2114, %vm2115
    %v2117 = vsel %vm2116, %v2109, %v2113
    %v2118 = vand.u32 2147483647, %v1981
    %vm2119 = vcmp.eq.f32.partialorder %v2118, 8.507059e+37
    %v2120 = vand.u32 %v1981, 2147483648
    %v2121 = vor.u32 1.1754944e-38, %v2120
    %v2122 = vsel %vm2119, %v2121, %v2117
    %v2123 = vmul.f32 1.0, %v2122
    %v2124 = vrcp.pop %v1982
    %v2125 = vmul.f32 %v1982, %v2124
    %v2126 = vsub.f32 1.0, %v2125
    %v2127 = vmul.f32 %v2124, %v2126
    %v2128 = vadd.f32 %v2124, %v2127
    %vm2129 = vweird.f32 %v1982
    %vm2130 = vweird.f32 %v2124
    %vm2131 = vmor %vm2129, %vm2130
    %v2132 = vsel %vm2131, %v2124, %v2128
    %v2133 = vand.u32 2147483647, %v1982
    %vm2134 = vcmp.eq.f32.partialorder %v2133, 8.507059e+37
    %v2135 = vand.u32 %v1982, 2147483648
    %v2136 = vor.u32 1.1754944e-38, %v2135
    %v2137 = vsel %vm2134, %v2136, %v2132
    %v2138 = vmul.f32 1.0, %v2137
    %v2139 = vrcp.pop %v1983
    %v2140 = vmul.f32 %v1983, %v2139
    %v2141 = vsub.f32 1.0, %v2140
    %v2142 = vmul.f32 %v2139, %v2141
    %v2143 = vadd.f32 %v2139, %v2142
    %vm2144 = vweird.f32 %v1983
    %vm2145 = vweird.f32 %v2139
    %vm2146 = vmor %vm2144, %vm2145
    %v2147 = vsel %vm2146, %v2139, %v2143
    %v2148 = vand.u32 2147483647, %v1983
    %vm2149 = vcmp.eq.f32.partialorder %v2148, 8.507059e+37
    %v2150 = vand.u32 %v1983, 2147483648
    %v2151 = vor.u32 1.1754944e-38, %v2150
    %v2152 = vsel %vm2149, %v2151, %v2147
    %v2153 = vmul.f32 1.0, %v2152
    %v2154 = vrcp.pop %v1984
    %v2155 = vmul.f32 %v1984, %v2154
    %v2156 = vsub.f32 1.0, %v2155
    %v2157 = vmul.f32 %v2154, %v2156
    %v2158 = vadd.f32 %v2154, %v2157
    %vm2159 = vweird.f32 %v1984
    %vm2160 = vweird.f32 %v2154
    %vm2161 = vmor %vm2159, %vm2160
    %v2162 = vsel %vm2161, %v2154, %v2158
    %v2163 = vand.u32 2147483647, %v1984
    %vm2164 = vcmp.eq.f32.partialorder %v2163, 8.507059e+37
    %v2165 = vand.u32 %v1984, 2147483648
    %v2166 = vor.u32 1.1754944e-38, %v2165
    %v2167 = vsel %vm2164, %v2166, %v2162
    %v2168 = vmul.f32 1.0, %v2167
    %v2169 = vrcp.pop %v1985
    %v2170 = vmul.f32 %v1985, %v2169
    %v2171 = vsub.f32 1.0, %v2170
    %v2172 = vmul.f32 %v2169, %v2171
    %v2173 = vadd.f32 %v2169, %v2172
    %vm2174 = vweird.f32 %v1985
    %vm2175 = vweird.f32 %v2169
    %vm2176 = vmor %vm2174, %vm2175
    %v2177 = vsel %vm2176, %v2169, %v2173
    %v2178 = vand.u32 2147483647, %v1985
    %vm2179 = vcmp.eq.f32.partialorder %v2178, 8.507059e+37
    %v2180 = vand.u32 %v1985, 2147483648
    %v2181 = vor.u32 1.1754944e-38, %v2180
    %v2182 = vsel %vm2179, %v2181, %v2177
    %v2183 = vmul.f32 1.0, %v2182
    %v2184 = vrcp.pop %v1986
    %v2185 = vmul.f32 %v1986, %v2184
    %v2186 = vsub.f32 1.0, %v2185
    %v2187 = vmul.f32 %v2184, %v2186
    %v2188 = vadd.f32 %v2184, %v2187
    %vm2189 = vweird.f32 %v1986
    %vm2190 = vweird.f32 %v2184
    %vm2191 = vmor %vm2189, %vm2190
    %v2192 = vsel %vm2191, %v2184, %v2188
    %v2193 = vand.u32 2147483647, %v1986
    %vm2194 = vcmp.eq.f32.partialorder %v2193, 8.507059e+37
    %v2195 = vand.u32 %v1986, 2147483648
    %v2196 = vor.u32 1.1754944e-38, %v2195
    %v2197 = vsel %vm2194, %v2196, %v2192
    %v2198 = vmul.f32 1.0, %v2197
    %v2199 = vrcp.pop %v1987
    %v2200 = vmul.f32 %v1987, %v2199
    %v2201 = vsub.f32 1.0, %v2200
    %v2202 = vmul.f32 %v2199, %v2201
    %v2203 = vadd.f32 %v2199, %v2202
    %vm2204 = vweird.f32 %v1987
    %vm2205 = vweird.f32 %v2199
    %vm2206 = vmor %vm2204, %vm2205
    %v2207 = vsel %vm2206, %v2199, %v2203
    %v2208 = vand.u32 2147483647, %v1987
    %vm2209 = vcmp.eq.f32.partialorder %v2208, 8.507059e+37
    %v2210 = vand.u32 %v1987, 2147483648
    %v2211 = vor.u32 1.1754944e-38, %v2210
    %v2212 = vsel %vm2209, %v2211, %v2207
    %v2213 = vmul.f32 1.0, %v2212
    %v2214 = vrcp.pop %v1988
    %v2215 = vmul.f32 %v1988, %v2214
    %v2216 = vsub.f32 1.0, %v2215
    %v2217 = vmul.f32 %v2214, %v2216
    %v2218 = vadd.f32 %v2214, %v2217
    %vm2219 = vweird.f32 %v1988
    %vm2220 = vweird.f32 %v2214
    %vm2221 = vmor %vm2219, %vm2220
    %v2222 = vsel %vm2221, %v2214, %v2218
    %v2223 = vand.u32 2147483647, %v1988
    %vm2224 = vcmp.eq.f32.partialorder %v2223, 8.507059e+37
    %v2225 = vand.u32 %v1988, 2147483648
    %v2226 = vor.u32 1.1754944e-38, %v2225
    %v2227 = vsel %vm2224, %v2226, %v2222
    %v2228 = vmul.f32 1.0, %v2227
    %2245 = vrot.lane.b32.xlu0 %v1909, 32
    %v2246 = vpop.permute.xlu0 %2245
    %2247 = vrot.lane.b32.xlu0 %v1910, 32
    %v2248 = vpop.permute.xlu0 %2247
    %2249 = vrot.lane.b32.xlu0 %v1911, 32
    %v2250 = vpop.permute.xlu0 %2249
    %2251 = vrot.lane.b32.xlu0 %v1912, 32
    %v2252 = vpop.permute.xlu0 %2251
    %2253 = vrot.lane.b32.xlu0 %v1913, 32
    %v2254 = vpop.permute.xlu0 %2253
    %2255 = vrot.lane.b32.xlu0 %v1914, 32
    %v2256 = vpop.permute.xlu0 %2255
    %2257 = vrot.lane.b32.xlu0 %v1915, 32
    %v2258 = vpop.permute.xlu0 %2257
    %2259 = vrot.lane.b32.xlu0 %v1916, 32
    %v2260 = vpop.permute.xlu0 %2259
    %2261 = vrot.lane.b32.xlu0 %v1917, 32
    %v2262 = vpop.permute.xlu0 %2261
    %2263 = vrot.lane.b32.xlu0 %v1918, 32
    %v2264 = vpop.permute.xlu0 %2263
    %2265 = vrot.lane.b32.xlu0 %v1919, 32
    %v2266 = vpop.permute.xlu0 %2265
    %2267 = vrot.lane.b32.xlu0 %v1920, 32
    %v2268 = vpop.permute.xlu0 %2267
    %2269 = vrot.lane.b32.xlu0 %v1921, 32
    %v2270 = vpop.permute.xlu0 %2269
    %2271 = vrot.lane.b32.xlu0 %v1922, 32
    %v2272 = vpop.permute.xlu0 %2271
    %2273 = vrot.lane.b32.xlu0 %v1923, 32
    %v2274 = vpop.permute.xlu0 %2273
    %2275 = vrot.lane.b32.xlu0 %v1924, 32
    %v2276 = vpop.permute.xlu0 %2275
    %v2293 = vmul.f32 %v2003, %v2246
    %v2294 = vmul.f32 %v2018, %v2248
    %v2295 = vmul.f32 %v2033, %v2250
    %v2296 = vmul.f32 %v2048, %v2252
    %v2297 = vmul.f32 %v2063, %v2254
    %v2298 = vmul.f32 %v2078, %v2256
    %v2299 = vmul.f32 %v2093, %v2258
    %v2300 = vmul.f32 %v2108, %v2260
    %v2301 = vmul.f32 %v2123, %v2262
    %v2302 = vmul.f32 %v2138, %v2264
    %v2303 = vmul.f32 %v2153, %v2266
    %v2304 = vmul.f32 %v2168, %v2268
    %v2305 = vmul.f32 %v2183, %v2270
    %v2306 = vmul.f32 %v2198, %v2272
    %v2307 = vmul.f32 %v2213, %v2274
    %v2308 = vmul.f32 %v2228, %v2276
    %2325 = vrot.lane.b32.xlu0 %v2293, 64
    %v2326 = vpop.permute.xlu0 %2325
    %2327 = vrot.lane.b32.xlu0 %v2294, 64
    %v2328 = vpop.permute.xlu0 %2327
    %2329 = vrot.lane.b32.xlu0 %v2295, 64
    %v2330 = vpop.permute.xlu0 %2329
    %2331 = vrot.lane.b32.xlu0 %v2296, 64
    %v2332 = vpop.permute.xlu0 %2331
    %2333 = vrot.lane.b32.xlu0 %v2297, 64
    %v2334 = vpop.permute.xlu0 %2333
    %2335 = vrot.lane.b32.xlu0 %v2298, 64
    %v2336 = vpop.permute.xlu0 %2335
    %2337 = vrot.lane.b32.xlu0 %v2299, 64
    %v2338 = vpop.permute.xlu0 %2337
    %2339 = vrot.lane.b32.xlu0 %v2300, 64
    %v2340 = vpop.permute.xlu0 %2339
    %2341 = vrot.lane.b32.xlu0 %v2301, 64
    %v2342 = vpop.permute.xlu0 %2341
    %2343 = vrot.lane.b32.xlu0 %v2302, 64
    %v2344 = vpop.permute.xlu0 %2343
    %2345 = vrot.lane.b32.xlu0 %v2303, 64
    %v2346 = vpop.permute.xlu0 %2345
    %2347 = vrot.lane.b32.xlu0 %v2304, 64
    %v2348 = vpop.permute.xlu0 %2347
    %2349 = vrot.lane.b32.xlu0 %v2305, 64
    %v2350 = vpop.permute.xlu0 %2349
    %2351 = vrot.lane.b32.xlu0 %v2306, 64
    %v2352 = vpop.permute.xlu0 %2351
    %2353 = vrot.lane.b32.xlu0 %v2307, 64
    %v2354 = vpop.permute.xlu0 %2353
    %2355 = vrot.lane.b32.xlu0 %v2308, 64
    %v2356 = vpop.permute.xlu0 %2355
    %v2373 = vadd.f32 %v1909, %v2326
    %v2374 = vadd.f32 %v1910, %v2328
    %v2375 = vadd.f32 %v1911, %v2330
    %v2376 = vadd.f32 %v1912, %v2332
    %v2377 = vadd.f32 %v1913, %v2334
    %v2378 = vadd.f32 %v1914, %v2336
    %v2379 = vadd.f32 %v1915, %v2338
    %v2380 = vadd.f32 %v1916, %v2340
    %v2381 = vadd.f32 %v1917, %v2342
    %v2382 = vadd.f32 %v1918, %v2344
    %v2383 = vadd.f32 %v1919, %v2346
    %v2384 = vadd.f32 %v1920, %v2348
    %v2385 = vadd.f32 %v1921, %v2350
    %v2386 = vadd.f32 %v1922, %v2352
    %v2387 = vadd.f32 %v1923, %v2354
    %v2388 = vadd.f32 %v1924, %v2356
    %v2389 = vtanh.pop %v2373
    %v2390 = vtanh.pop %v2374
    %v2391 = vtanh.pop %v2375
    %v2392 = vtanh.pop %v2376
    %v2393 = vtanh.pop %v2377
    %v2394 = vtanh.pop %v2378
    %v2395 = vtanh.pop %v2379
    %v2396 = vtanh.pop %v2380
    %v2397 = vtanh.pop %v2381
    %v2398 = vtanh.pop %v2382
    %v2399 = vtanh.pop %v2383
    %v2400 = vtanh.pop %v2384
    %v2401 = vtanh.pop %v2385
    %v2402 = vtanh.pop %v2386
    %v2403 = vtanh.pop %v2387
    %v2404 = vtanh.pop %v2388
    %v2405 = vsub.f32 1.0, %v2003
    %v2406 = vsub.f32 1.0, %v2018
    %v2407 = vsub.f32 1.0, %v2033
    %v2408 = vsub.f32 1.0, %v2048
    %v2409 = vsub.f32 1.0, %v2063
    %v2410 = vsub.f32 1.0, %v2078
    %v2411 = vsub.f32 1.0, %v2093
    %v2412 = vsub.f32 1.0, %v2108
    %v2413 = vsub.f32 1.0, %v2123
    %v2414 = vsub.f32 1.0, %v2138
    %v2415 = vsub.f32 1.0, %v2153
    %v2416 = vsub.f32 1.0, %v2168
    %v2417 = vsub.f32 1.0, %v2183
    %v2418 = vsub.f32 1.0, %v2198
    %v2419 = vsub.f32 1.0, %v2213
    %v2420 = vsub.f32 1.0, %v2228
    %2437 = vrot.lane.b32.xlu0 %v2389, 96
    %v2438 = vpop.permute.xlu0 %2437
    %2439 = vrot.lane.b32.xlu0 %v2390, 96
    %v2440 = vpop.permute.xlu0 %2439
    %2441 = vrot.lane.b32.xlu0 %v2391, 96
    %v2442 = vpop.permute.xlu0 %2441
    %2443 = vrot.lane.b32.xlu0 %v2392, 96
    %v2444 = vpop.permute.xlu0 %2443
    %2445 = vrot.lane.b32.xlu0 %v2393, 96
    %v2446 = vpop.permute.xlu0 %2445
    %2447 = vrot.lane.b32.xlu0 %v2394, 96
    %v2448 = vpop.permute.xlu0 %2447
    %2449 = vrot.lane.b32.xlu0 %v2395, 96
    %v2450 = vpop.permute.xlu0 %2449
    %2451 = vrot.lane.b32.xlu0 %v2396, 96
    %v2452 = vpop.permute.xlu0 %2451
    %2453 = vrot.lane.b32.xlu0 %v2397, 96
    %v2454 = vpop.permute.xlu0 %2453
    %2455 = vrot.lane.b32.xlu0 %v2398, 96
    %v2456 = vpop.permute.xlu0 %2455
    %2457 = vrot.lane.b32.xlu0 %v2399, 96
    %v2458 = vpop.permute.xlu0 %2457
    %2459 = vrot.lane.b32.xlu0 %v2400, 96
    %v2460 = vpop.permute.xlu0 %2459
    %2461 = vrot.lane.b32.xlu0 %v2401, 96
    %v2462 = vpop.permute.xlu0 %2461
    %2463 = vrot.lane.b32.xlu0 %v2402, 96
    %v2464 = vpop.permute.xlu0 %2463
    %2465 = vrot.lane.b32.xlu0 %v2403, 96
    %v2466 = vpop.permute.xlu0 %2465
    %2467 = vrot.lane.b32.xlu0 %v2404, 96
    %v2468 = vpop.permute.xlu0 %2467
    %v2485 = vmul.f32 %v2405, %v2438
    %v2486 = vmul.f32 %v2406, %v2440
    %v2487 = vmul.f32 %v2407, %v2442
    %v2488 = vmul.f32 %v2408, %v2444
    %v2489 = vmul.f32 %v2409, %v2446
    %v2490 = vmul.f32 %v2410, %v2448
    %v2491 = vmul.f32 %v2411, %v2450
    %v2492 = vmul.f32 %v2412, %v2452
    %v2493 = vmul.f32 %v2413, %v2454
    %v2494 = vmul.f32 %v2414, %v2456
    %v2495 = vmul.f32 %v2415, %v2458
    %v2496 = vmul.f32 %v2416, %v2460
    %v2497 = vmul.f32 %v2417, %v2462
    %v2498 = vmul.f32 %v2418, %v2464
    %v2499 = vmul.f32 %v2419, %v2466
    %v2500 = vmul.f32 %v2420, %v2468
    %v2501 = vmul.f32 %v2003, %v1343
    %v2502 = vmul.f32 %v2018, %v1344
    %v2503 = vmul.f32 %v2033, %v1345
    %v2504 = vmul.f32 %v2048, %v1346
    %v2505 = vmul.f32 %v2063, %v1347
    %v2506 = vmul.f32 %v2078, %v1348
    %v2507 = vmul.f32 %v2093, %v1349
    %v2508 = vmul.f32 %v2108, %v1350
    %v2509 = vmul.f32 %v2123, %v1351
    %v2510 = vmul.f32 %v2138, %v1352
    %v2511 = vmul.f32 %v2153, %v1353
    %v2512 = vmul.f32 %v2168, %v1354
    %v2513 = vmul.f32 %v2183, %v1355
    %v2514 = vmul.f32 %v2198, %v1356
    %v2515 = vmul.f32 %v2213, %v1357
    %v2516 = vmul.f32 %v2228, %v1358
    %v2517 = vadd.f32 %v2485, %v2501
    %v2518 = vadd.f32 %v2486, %v2502
    %v2519 = vadd.f32 %v2487, %v2503
    %v2520 = vadd.f32 %v2488, %v2504
    %v2521 = vadd.f32 %v2489, %v2505
    %v2522 = vadd.f32 %v2490, %v2506
    %v2523 = vadd.f32 %v2491, %v2507
    %v2524 = vadd.f32 %v2492, %v2508
    %v2525 = vadd.f32 %v2493, %v2509
    %v2526 = vadd.f32 %v2494, %v2510
    %v2527 = vadd.f32 %v2495, %v2511
    %v2528 = vadd.f32 %v2496, %v2512
    %v2529 = vadd.f32 %v2497, %v2513
    %v2530 = vadd.f32 %v2498, %v2514
    %v2531 = vadd.f32 %v2499, %v2515
    %v2532 = vadd.f32 %v2500, %v2516
    %2549 = vrot.lane.b32.xlu0 %v2517, 96
    %v2550 = vpop.permute.xlu0 %2549
    %2551 = vrot.lane.b32.xlu0 %v2518, 96
    %v2552 = vpop.permute.xlu0 %2551
    %2553 = vrot.lane.b32.xlu0 %v2519, 96
    %v2554 = vpop.permute.xlu0 %2553
    %2555 = vrot.lane.b32.xlu0 %v2520, 96
    %v2556 = vpop.permute.xlu0 %2555
    %2557 = vrot.lane.b32.xlu0 %v2521, 96
    %v2558 = vpop.permute.xlu0 %2557
    %2559 = vrot.lane.b32.xlu0 %v2522, 96
    %v2560 = vpop.permute.xlu0 %2559
    %2561 = vrot.lane.b32.xlu0 %v2523, 96
    %v2562 = vpop.permute.xlu0 %2561
    %2563 = vrot.lane.b32.xlu0 %v2524, 96
    %v2564 = vpop.permute.xlu0 %2563
    %2565 = vrot.lane.b32.xlu0 %v2525, 96
    %v2566 = vpop.permute.xlu0 %2565
    %2567 = vrot.lane.b32.xlu0 %v2526, 96
    %v2568 = vpop.permute.xlu0 %2567
    %2569 = vrot.lane.b32.xlu0 %v2527, 96
    %v2570 = vpop.permute.xlu0 %2569
    %2571 = vrot.lane.b32.xlu0 %v2528, 96
    %v2572 = vpop.permute.xlu0 %2571
    %2573 = vrot.lane.b32.xlu0 %v2529, 96
    %v2574 = vpop.permute.xlu0 %2573
    %2575 = vrot.lane.b32.xlu0 %v2530, 96
    %v2576 = vpop.permute.xlu0 %2575
    %2577 = vrot.lane.b32.xlu0 %v2531, 96
    %v2578 = vpop.permute.xlu0 %2577
    %2579 = vrot.lane.b32.xlu0 %v2532, 96
    %v2580 = vpop.permute.xlu0 %2579
    %v2581 = vsel %vm126, %v2550, 0
    %v2583 = vsel %vm126, %v2552, 0
    %v2585 = vsel %vm126, %v2554, 0
    %v2587 = vsel %vm126, %v2556, 0
    %v2589 = vsel %vm126, %v2558, 0
    %v2591 = vsel %vm126, %v2560, 0
    %v2593 = vsel %vm126, %v2562, 0
    %v2595 = vsel %vm126, %v2564, 0
    %v2597 = vsel %vm126, %v2566, 0
    %v2599 = vsel %vm126, %v2568, 0
    %v2601 = vsel %vm126, %v2570, 0
    %v2603 = vsel %vm126, %v2572, 0
    %v2605 = vsel %vm126, %v2574, 0
    %v2607 = vsel %vm126, %v2576, 0
    %v2609 = vsel %vm126, %v2578, 0
    %v2611 = vsel %vm126, %v2580, 0
    %2613 = vmatpush.msra.mxu0 0.0
    %2614 = vmatpush.msra.mxu0 0.0
    %2615 = vmatpush.msra.mxu0 0.0
    %2616 = vmatpush.msra.mxu0 0.0
    %2617 = vmatpush.msra.mxu0 0.0
    %2618 = vmatpush.msra.mxu0 0.0
    %2619 = vmatpush.msra.mxu0 0.0
    %2620 = vmatpush.msra.mxu0 0.0
    %2621 = vmatpush.msra.mxu0 0.0
    %2622 = vmatpush.msra.mxu0 0.0
    %2623 = vmatpush.msra.mxu0 0.0
    %2624 = vmatpush.msra.mxu0 0.0
    %2625 = vmatpush.msra.mxu0 %v121
    %2626 = vmatpush.msra.mxu0 %v120
    %2627 = vmatpush.msra.mxu0 %v119
    %2628 = vmatpush.msra.mxu0 %v118
    %2629 = vmatmul.f32.gmra.mxu0 %v2581
    %v2630 = vpop.f32.mrf.mxu0
    %v2631 = vadd.f32 0.0, %v2630
    %2632 = vmatmul.f32.gmra.mxu0 %v2583
    %v2633 = vpop.f32.mrf.mxu0
    %v2634 = vadd.f32 0.0, %v2633
    %2635 = vmatmul.f32.gmra.mxu0 %v2585
    %v2636 = vpop.f32.mrf.mxu0
    %v2637 = vadd.f32 0.0, %v2636
    %2638 = vmatmul.f32.gmra.mxu0 %v2587
    %v2639 = vpop.f32.mrf.mxu0
    %v2640 = vadd.f32 0.0, %v2639
    %2641 = vmatmul.f32.gmra.mxu0 %v2589
    %v2642 = vpop.f32.mrf.mxu0
    %v2643 = vadd.f32 0.0, %v2642
    %2644 = vmatmul.f32.gmra.mxu0 %v2591
    %v2645 = vpop.f32.mrf.mxu0
    %v2646 = vadd.f32 0.0, %v2645
    %2647 = vmatmul.f32.gmra.mxu0 %v2593
    %v2648 = vpop.f32.mrf.mxu0
    %v2649 = vadd.f32 0.0, %v2648
    %2650 = vmatmul.f32.gmra.mxu0 %v2595
    %v2651 = vpop.f32.mrf.mxu0
    %v2652 = vadd.f32 0.0, %v2651
    %2653 = vmatmul.f32.gmra.mxu0 %v2597
    %v2654 = vpop.f32.mrf.mxu0
    %v2655 = vadd.f32 0.0, %v2654
    %2656 = vmatmul.f32.gmra.mxu0 %v2599
    %v2657 = vpop.f32.mrf.mxu0
    %v2658 = vadd.f32 0.0, %v2657
    %2659 = vmatmul.f32.gmra.mxu0 %v2601
    %v2660 = vpop.f32.mrf.mxu0
    %v2661 = vadd.f32 0.0, %v2660
    %2662 = vmatmul.f32.gmra.mxu0 %v2603
    %v2663 = vpop.f32.mrf.mxu0
    %v2664 = vadd.f32 0.0, %v2663
    %2665 = vmatmul.f32.gmra.mxu0 %v2605
    %v2666 = vpop.f32.mrf.mxu0
    %v2667 = vadd.f32 0.0, %v2666
    %2668 = vmatmul.f32.gmra.mxu0 %v2607
    %v2669 = vpop.f32.mrf.mxu0
    %v2670 = vadd.f32 0.0, %v2669
    %2671 = vmatmul.f32.gmra.mxu0 %v2609
    %v2672 = vpop.f32.mrf.mxu0
    %v2673 = vadd.f32 0.0, %v2672
    %2674 = vmatmul.f32.gmra.mxu0 %v2611
    %v2675 = vpop.f32.mrf.mxu0
    %v2676 = vadd.f32 0.0, %v2675
    %2677 = vdwg.mxu0
    %2678 = vmatpush.msra.mxu0 0.0
    %2679 = vmatpush.msra.mxu0 0.0
    %2680 = vmatpush.msra.mxu0 0.0
    %2681 = vmatpush.msra.mxu0 0.0
    %2682 = vmatpush.msra.mxu0 0.0
    %2683 = vmatpush.msra.mxu0 0.0
    %2684 = vmatpush.msra.mxu0 0.0
    %2685 = vmatpush.msra.mxu0 0.0
    %2686 = vmatpush.msra.mxu0 0.0
    %2687 = vmatpush.msra.mxu0 0.0
    %2688 = vmatpush.msra.mxu0 0.0
    %2689 = vmatpush.msra.mxu0 0.0
    %2690 = vmatpush.msra.mxu0 %v243
    %2691 = vmatpush.msra.mxu0 %v242
    %2692 = vmatpush.msra.mxu0 %v241
    %2693 = vmatpush.msra.mxu0 %v240
    %2694 = vmatmul.f32.gmra.mxu0 %v2581
    %v2695 = vpop.f32.mrf.mxu0
    %v2696 = vadd.f32 0.0, %v2695
    %2697 = vmatmul.f32.gmra.mxu0 %v2583
    %v2698 = vpop.f32.mrf.mxu0
    %v2699 = vadd.f32 0.0, %v2698
    %2700 = vmatmul.f32.gmra.mxu0 %v2585
    %v2701 = vpop.f32.mrf.mxu0
    %v2702 = vadd.f32 0.0, %v2701
    %2703 = vmatmul.f32.gmra.mxu0 %v2587
    %v2704 = vpop.f32.mrf.mxu0
    %v2705 = vadd.f32 0.0, %v2704
    %2706 = vmatmul.f32.gmra.mxu0 %v2589
    %v2707 = vpop.f32.mrf.mxu0
    %v2708 = vadd.f32 0.0, %v2707
    %2709 = vmatmul.f32.gmra.mxu0 %v2591
    %v2710 = vpop.f32.mrf.mxu0
    %v2711 = vadd.f32 0.0, %v2710
    %2712 = vmatmul.f32.gmra.mxu0 %v2593
    %v2713 = vpop.f32.mrf.mxu0
    %v2714 = vadd.f32 0.0, %v2713
    %2715 = vmatmul.f32.gmra.mxu0 %v2595
    %v2716 = vpop.f32.mrf.mxu0
    %v2717 = vadd.f32 0.0, %v2716
    %2718 = vmatmul.f32.gmra.mxu0 %v2597
    %v2719 = vpop.f32.mrf.mxu0
    %v2720 = vadd.f32 0.0, %v2719
    %2721 = vmatmul.f32.gmra.mxu0 %v2599
    %v2722 = vpop.f32.mrf.mxu0
    %v2723 = vadd.f32 0.0, %v2722
    %2724 = vmatmul.f32.gmra.mxu0 %v2601
    %v2725 = vpop.f32.mrf.mxu0
    %v2726 = vadd.f32 0.0, %v2725
    %2727 = vmatmul.f32.gmra.mxu0 %v2603
    %v2728 = vpop.f32.mrf.mxu0
    %v2729 = vadd.f32 0.0, %v2728
    %2730 = vmatmul.f32.gmra.mxu0 %v2605
    %v2731 = vpop.f32.mrf.mxu0
    %v2732 = vadd.f32 0.0, %v2731
    %2733 = vmatmul.f32.gmra.mxu0 %v2607
    %v2734 = vpop.f32.mrf.mxu0
    %v2735 = vadd.f32 0.0, %v2734
    %2736 = vmatmul.f32.gmra.mxu0 %v2609
    %v2737 = vpop.f32.mrf.mxu0
    %v2738 = vadd.f32 0.0, %v2737
    %2739 = vmatmul.f32.gmra.mxu0 %v2611
    %v2740 = vpop.f32.mrf.mxu0
    %v2741 = vadd.f32 0.0, %v2740
    %2742 = vdwg.mxu0
    %2743 = vmatpush.msra.mxu0 %v2741
    %2744 = vmatpush.msra.mxu0 %v2738
    %2745 = vmatpush.msra.mxu0 %v2735
    %2746 = vmatpush.msra.mxu0 %v2732
    %2747 = vmatpush.msra.mxu0 %v2729
    %2748 = vmatpush.msra.mxu0 %v2726
    %2749 = vmatpush.msra.mxu0 %v2723
    %2750 = vmatpush.msra.mxu0 %v2720
    %2751 = vmatpush.msra.mxu0 %v2717
    %2752 = vmatpush.msra.mxu0 %v2714
    %2753 = vmatpush.msra.mxu0 %v2711
    %2754 = vmatpush.msra.mxu0 %v2708
    %2755 = vmatpush.msra.mxu0 %v2705
    %2756 = vmatpush.msra.mxu0 %v2702
    %2757 = vmatpush.msra.mxu0 %v2699
    %2758 = vmatpush.msra.mxu0 %v2696
    %2759 = vmatmul.f32.gmra.mxu0 %v309
    %v2760 = vpop.f32.mrf.mxu0
    %v2761 = vadd.f32 0.0, %v2760
    %2762 = vmatmul.f32.gmra.mxu0 %v310
    %v2763 = vpop.f32.mrf.mxu0
    %v2764 = vadd.f32 0.0, %v2763
    %2765 = vmatmul.f32.gmra.mxu0 %v311
    %v2766 = vpop.f32.mrf.mxu0
    %v2767 = vadd.f32 0.0, %v2766
    %2768 = vmatmul.f32.gmra.mxu0 %v312
    %v2769 = vpop.f32.mrf.mxu0
    %v2770 = vadd.f32 0.0, %v2769
    %2771 = vmatmul.f32.gmra.mxu0 %v313
    %v2772 = vpop.f32.mrf.mxu0
    %v2773 = vadd.f32 0.0, %v2772
    %2774 = vmatmul.f32.gmra.mxu0 %v314
    %v2775 = vpop.f32.mrf.mxu0
    %v2776 = vadd.f32 0.0, %v2775
    %2777 = vmatmul.f32.gmra.mxu0 %v315
    %v2778 = vpop.f32.mrf.mxu0
    %v2779 = vadd.f32 0.0, %v2778
    %2780 = vmatmul.f32.gmra.mxu0 %v316
    %v2781 = vpop.f32.mrf.mxu0
    %v2782 = vadd.f32 0.0, %v2781
    %2783 = vmatmul.f32.gmra.mxu0 %v317
    %v2784 = vpop.f32.mrf.mxu0
    %v2785 = vadd.f32 0.0, %v2784
    %2786 = vmatmul.f32.gmra.mxu0 %v318
    %v2787 = vpop.f32.mrf.mxu0
    %v2788 = vadd.f32 0.0, %v2787
    %2789 = vmatmul.f32.gmra.mxu0 %v319
    %v2790 = vpop.f32.mrf.mxu0
    %v2791 = vadd.f32 0.0, %v2790
    %2792 = vmatmul.f32.gmra.mxu0 %v320
    %v2793 = vpop.f32.mrf.mxu0
    %v2794 = vadd.f32 0.0, %v2793
    %2795 = vmatmul.f32.gmra.mxu0 %v321
    %v2796 = vpop.f32.mrf.mxu0
    %v2797 = vadd.f32 0.0, %v2796
    %2798 = vmatmul.f32.gmra.mxu0 %v322
    %v2799 = vpop.f32.mrf.mxu0
    %v2800 = vadd.f32 0.0, %v2799
    %2801 = vmatmul.f32.gmra.mxu0 %v323
    %v2802 = vpop.f32.mrf.mxu0
    %v2803 = vadd.f32 0.0, %v2802
    %2804 = vmatmul.f32.gmra.mxu0 %v324
    %v2805 = vpop.f32.mrf.mxu0
    %v2806 = vadd.f32 0.0, %v2805
    %2807 = vdwg.mxu0
    %v2808 = vadd.f32 %v98, %v2761
    %v2809 = vadd.f32 %v99, %v2764
    %v2810 = vadd.f32 %v100, %v2767
    %v2811 = vadd.f32 %v101, %v2770
    %v2812 = vadd.f32 %v102, %v2773
    %v2813 = vadd.f32 %v103, %v2776
    %v2814 = vadd.f32 %v104, %v2779
    %v2815 = vadd.f32 %v105, %v2782
    %v2816 = vadd.f32 %v106, %v2785
    %v2817 = vadd.f32 %v107, %v2788
    %v2818 = vadd.f32 %v108, %v2791
    %v2819 = vadd.f32 %v109, %v2794
    %v2820 = vadd.f32 %v110, %v2797
    %v2821 = vadd.f32 %v111, %v2800
    %v2822 = vadd.f32 %v112, %v2803
    %v2823 = vadd.f32 %v113, %v2806
    %2824 = vmatpush.msra.mxu0 0.0
    %2825 = vmatpush.msra.mxu0 0.0
    %2826 = vmatpush.msra.mxu0 0.0
    %2827 = vmatpush.msra.mxu0 0.0
    %2828 = vmatpush.msra.mxu0 0.0
    %2829 = vmatpush.msra.mxu0 0.0
    %2830 = vmatpush.msra.mxu0 0.0
    %2831 = vmatpush.msra.mxu0 0.0
    %2832 = vmatpush.msra.mxu0 0.0
    %2833 = vmatpush.msra.mxu0 0.0
    %2834 = vmatpush.msra.mxu0 0.0
    %2835 = vmatpush.msra.mxu0 0.0
    %2836 = vmatpush.msra.mxu0 %v410
    %2837 = vmatpush.msra.mxu0 %v409
    %2838 = vmatpush.msra.mxu0 %v408
    %2839 = vmatpush.msra.mxu0 %v407
    %2840 = vmatmul.f32.gmra.mxu0 %v2581
    %v2841 = vpop.f32.mrf.mxu0
    %v2842 = vadd.f32 0.0, %v2841
    %2843 = vmatmul.f32.gmra.mxu0 %v2583
    %v2844 = vpop.f32.mrf.mxu0
    %v2845 = vadd.f32 0.0, %v2844
    %2846 = vmatmul.f32.gmra.mxu0 %v2585
    %v2847 = vpop.f32.mrf.mxu0
    %v2848 = vadd.f32 0.0, %v2847
    %2849 = vmatmul.f32.gmra.mxu0 %v2587
    %v2850 = vpop.f32.mrf.mxu0
    %v2851 = vadd.f32 0.0, %v2850
    %2852 = vmatmul.f32.gmra.mxu0 %v2589
    %v2853 = vpop.f32.mrf.mxu0
    %v2854 = vadd.f32 0.0, %v2853
    %2855 = vmatmul.f32.gmra.mxu0 %v2591
    %v2856 = vpop.f32.mrf.mxu0
    %v2857 = vadd.f32 0.0, %v2856
    %2858 = vmatmul.f32.gmra.mxu0 %v2593
    %v2859 = vpop.f32.mrf.mxu0
    %v2860 = vadd.f32 0.0, %v2859
    %2861 = vmatmul.f32.gmra.mxu0 %v2595
    %v2862 = vpop.f32.mrf.mxu0
    %v2863 = vadd.f32 0.0, %v2862
    %2864 = vmatmul.f32.gmra.mxu0 %v2597
    %v2865 = vpop.f32.mrf.mxu0
    %v2866 = vadd.f32 0.0, %v2865
    %2867 = vmatmul.f32.gmra.mxu0 %v2599
    %v2868 = vpop.f32.mrf.mxu0
    %v2869 = vadd.f32 0.0, %v2868
    %2870 = vmatmul.f32.gmra.mxu0 %v2601
    %v2871 = vpop.f32.mrf.mxu0
    %v2872 = vadd.f32 0.0, %v2871
    %2873 = vmatmul.f32.gmra.mxu0 %v2603
    %v2874 = vpop.f32.mrf.mxu0
    %v2875 = vadd.f32 0.0, %v2874
    %2876 = vmatmul.f32.gmra.mxu0 %v2605
    %v2877 = vpop.f32.mrf.mxu0
    %v2878 = vadd.f32 0.0, %v2877
    %2879 = vmatmul.f32.gmra.mxu0 %v2607
    %v2880 = vpop.f32.mrf.mxu0
    %v2881 = vadd.f32 0.0, %v2880
    %2882 = vmatmul.f32.gmra.mxu0 %v2609
    %v2883 = vpop.f32.mrf.mxu0
    %v2884 = vadd.f32 0.0, %v2883
    %2885 = vmatmul.f32.gmra.mxu0 %v2611
    %v2886 = vpop.f32.mrf.mxu0
    %v2887 = vadd.f32 0.0, %v2886
    %2888 = vdwg.mxu0
    %2889 = vmatpush.msra.mxu0 %v2887
    %2890 = vmatpush.msra.mxu0 %v2884
    %2891 = vmatpush.msra.mxu0 %v2881
    %2892 = vmatpush.msra.mxu0 %v2878
    %2893 = vmatpush.msra.mxu0 %v2875
    %2894 = vmatpush.msra.mxu0 %v2872
    %2895 = vmatpush.msra.mxu0 %v2869
    %2896 = vmatpush.msra.mxu0 %v2866
    %2897 = vmatpush.msra.mxu0 %v2863
    %2898 = vmatpush.msra.mxu0 %v2860
    %2899 = vmatpush.msra.mxu0 %v2857
    %2900 = vmatpush.msra.mxu0 %v2854
    %2901 = vmatpush.msra.mxu0 %v2851
    %2902 = vmatpush.msra.mxu0 %v2848
    %2903 = vmatpush.msra.mxu0 %v2845
    %2904 = vmatpush.msra.mxu0 %v2842
    %2905 = vmatmul.f32.gmra.mxu0 %v477
    %v2906 = vpop.f32.mrf.mxu0
    %v2907 = vadd.f32 0.0, %v2906
    %2908 = vmatmul.f32.gmra.mxu0 %v478
    %v2909 = vpop.f32.mrf.mxu0
    %v2910 = vadd.f32 0.0, %v2909
    %2911 = vmatmul.f32.gmra.mxu0 %v479
    %v2912 = vpop.f32.mrf.mxu0
    %v2913 = vadd.f32 0.0, %v2912
    %2914 = vmatmul.f32.gmra.mxu0 %v480
    %v2915 = vpop.f32.mrf.mxu0
    %v2916 = vadd.f32 0.0, %v2915
    %2917 = vmatmul.f32.gmra.mxu0 %v481
    %v2918 = vpop.f32.mrf.mxu0
    %v2919 = vadd.f32 0.0, %v2918
    %2920 = vmatmul.f32.gmra.mxu0 %v482
    %v2921 = vpop.f32.mrf.mxu0
    %v2922 = vadd.f32 0.0, %v2921
    %2923 = vmatmul.f32.gmra.mxu0 %v483
    %v2924 = vpop.f32.mrf.mxu0
    %v2925 = vadd.f32 0.0, %v2924
    %2926 = vmatmul.f32.gmra.mxu0 %v484
    %v2927 = vpop.f32.mrf.mxu0
    %v2928 = vadd.f32 0.0, %v2927
    %2929 = vmatmul.f32.gmra.mxu0 %v485
    %v2930 = vpop.f32.mrf.mxu0
    %v2931 = vadd.f32 0.0, %v2930
    %2932 = vmatmul.f32.gmra.mxu0 %v486
    %v2933 = vpop.f32.mrf.mxu0
    %v2934 = vadd.f32 0.0, %v2933
    %2935 = vmatmul.f32.gmra.mxu0 %v487
    %v2936 = vpop.f32.mrf.mxu0
    %v2937 = vadd.f32 0.0, %v2936
    %2938 = vmatmul.f32.gmra.mxu0 %v488
    %v2939 = vpop.f32.mrf.mxu0
    %v2940 = vadd.f32 0.0, %v2939
    %2941 = vmatmul.f32.gmra.mxu0 %v489
    %v2942 = vpop.f32.mrf.mxu0
    %v2943 = vadd.f32 0.0, %v2942
    %2944 = vmatmul.f32.gmra.mxu0 %v490
    %v2945 = vpop.f32.mrf.mxu0
    %v2946 = vadd.f32 0.0, %v2945
    %2947 = vmatmul.f32.gmra.mxu0 %v491
    %v2948 = vpop.f32.mrf.mxu0
    %v2949 = vadd.f32 0.0, %v2948
    %2950 = vmatmul.f32.gmra.mxu0 %v492
    %v2951 = vpop.f32.mrf.mxu0
    %v2952 = vadd.f32 0.0, %v2951
    %2953 = vdwg.mxu0
    %v2954 = vadd.f32 %v2808, %v2907
    %v2955 = vadd.f32 %v2809, %v2910
    %v2956 = vadd.f32 %v2810, %v2913
    %v2957 = vadd.f32 %v2811, %v2916
    %v2958 = vadd.f32 %v2812, %v2919
    %v2959 = vadd.f32 %v2813, %v2922
    %v2960 = vadd.f32 %v2814, %v2925
    %v2961 = vadd.f32 %v2815, %v2928
    %v2962 = vadd.f32 %v2816, %v2931
    %v2963 = vadd.f32 %v2817, %v2934
    %v2964 = vadd.f32 %v2818, %v2937
    %v2965 = vadd.f32 %v2819, %v2940
    %v2966 = vadd.f32 %v2820, %v2943
    %v2967 = vadd.f32 %v2821, %v2946
    %v2968 = vadd.f32 %v2822, %v2949
    %v2969 = vadd.f32 %v2823, %v2952
    %v2971 = vsel %vm126, %v2954, 0
    %v2974 = vsel %vm126, %v2955, 0
    %v2977 = vsel %vm126, %v2956, 0
    %v2980 = vsel %vm126, %v2957, 0
    %v2983 = vsel %vm126, %v2958, 0
    %v2986 = vsel %vm126, %v2959, 0
    %v2989 = vsel %vm126, %v2960, 0
    %v2992 = vsel %vm126, %v2961, 0
    %v2995 = vsel %vm126, %v2962, 0
    %v2998 = vsel %vm126, %v2963, 0
    %v3001 = vsel %vm126, %v2964, 0
    %v3004 = vsel %vm126, %v2965, 0
    %v3007 = vsel %vm126, %v2966, 0
    %v3010 = vsel %vm126, %v2967, 0
    %v3013 = vsel %vm126, %v2968, 0
    %v3016 = vsel %vm126, %v2969, 0
    %3018 = vmatpush.msra.mxu0 0.0
    %3019 = vmatpush.msra.mxu0 0.0
    %3020 = vmatpush.msra.mxu0 0.0
    %3021 = vmatpush.msra.mxu0 0.0
    %3022 = vmatpush.msra.mxu0 0.0
    %3023 = vmatpush.msra.mxu0 0.0
    %3024 = vmatpush.msra.mxu0 0.0
    %3025 = vmatpush.msra.mxu0 0.0
    %3026 = vmatpush.msra.mxu0 0.0
    %3027 = vmatpush.msra.mxu0 0.0
    %3028 = vmatpush.msra.mxu0 0.0
    %3029 = vmatpush.msra.mxu0 0.0
    %3030 = vmatpush.msra.mxu0 %v117
    %3031 = vmatpush.msra.mxu0 %v116
    %3032 = vmatpush.msra.mxu0 %v115
    %3033 = vmatpush.msra.mxu0 %v114
    %3034 = vmatmul.f32.gmra.mxu0 %v2971
    %v3035 = vpop.f32.mrf.mxu0
    %v3036 = vadd.f32 %v2631, %v3035
    %3037 = vmatmul.f32.gmra.mxu0 %v2974
    %v3038 = vpop.f32.mrf.mxu0
    %v3039 = vadd.f32 %v2634, %v3038
    %3040 = vmatmul.f32.gmra.mxu0 %v2977
    %v3041 = vpop.f32.mrf.mxu0
    %v3042 = vadd.f32 %v2637, %v3041
    %3043 = vmatmul.f32.gmra.mxu0 %v2980
    %v3044 = vpop.f32.mrf.mxu0
    %v3045 = vadd.f32 %v2640, %v3044
    %3046 = vmatmul.f32.gmra.mxu0 %v2983
    %v3047 = vpop.f32.mrf.mxu0
    %v3048 = vadd.f32 %v2643, %v3047
    %3049 = vmatmul.f32.gmra.mxu0 %v2986
    %v3050 = vpop.f32.mrf.mxu0
    %v3051 = vadd.f32 %v2646, %v3050
    %3052 = vmatmul.f32.gmra.mxu0 %v2989
    %v3053 = vpop.f32.mrf.mxu0
    %v3054 = vadd.f32 %v2649, %v3053
    %3055 = vmatmul.f32.gmra.mxu0 %v2992
    %v3056 = vpop.f32.mrf.mxu0
    %v3057 = vadd.f32 %v2652, %v3056
    %3058 = vmatmul.f32.gmra.mxu0 %v2995
    %v3059 = vpop.f32.mrf.mxu0
    %v3060 = vadd.f32 %v2655, %v3059
    %3061 = vmatmul.f32.gmra.mxu0 %v2998
    %v3062 = vpop.f32.mrf.mxu0
    %v3063 = vadd.f32 %v2658, %v3062
    %3064 = vmatmul.f32.gmra.mxu0 %v3001
    %v3065 = vpop.f32.mrf.mxu0
    %v3066 = vadd.f32 %v2661, %v3065
    %3067 = vmatmul.f32.gmra.mxu0 %v3004
    %v3068 = vpop.f32.mrf.mxu0
    %v3069 = vadd.f32 %v2664, %v3068
    %3070 = vmatmul.f32.gmra.mxu0 %v3007
    %v3071 = vpop.f32.mrf.mxu0
    %v3072 = vadd.f32 %v2667, %v3071
    %3073 = vmatmul.f32.gmra.mxu0 %v3010
    %v3074 = vpop.f32.mrf.mxu0
    %v3075 = vadd.f32 %v2670, %v3074
    %3076 = vmatmul.f32.gmra.mxu0 %v3013
    %v3077 = vpop.f32.mrf.mxu0
    %v3078 = vadd.f32 %v2673, %v3077
    %3079 = vmatmul.f32.gmra.mxu0 %v3016
    %v3080 = vpop.f32.mrf.mxu0
    %v3081 = vadd.f32 %v2676, %v3080
    %3082 = vdwg.mxu0
    %v3083 = vadd.f32 %v3036, %v124
    %v3084 = vadd.f32 %v3039, %v124
    %v3085 = vadd.f32 %v3042, %v124
    %v3086 = vadd.f32 %v3045, %v124
    %v3087 = vadd.f32 %v3048, %v124
    %v3088 = vadd.f32 %v3051, %v124
    %v3089 = vadd.f32 %v3054, %v124
    %v3090 = vadd.f32 %v3057, %v124
    %v3091 = vadd.f32 %v3060, %v124
    %v3092 = vadd.f32 %v3063, %v124
    %v3093 = vadd.f32 %v3066, %v124
    %v3094 = vadd.f32 %v3069, %v124
    %v3095 = vadd.f32 %v3072, %v124
    %v3096 = vadd.f32 %v3075, %v124
    %v3097 = vadd.f32 %v3078, %v124
    %v3098 = vadd.f32 %v3081, %v124
    %v3099 = vxor.u32 %v3083, 2147483648
    %v3100 = vxor.u32 %v3084, 2147483648
    %v3101 = vxor.u32 %v3085, 2147483648
    %v3102 = vxor.u32 %v3086, 2147483648
    %v3103 = vxor.u32 %v3087, 2147483648
    %v3104 = vxor.u32 %v3088, 2147483648
    %v3105 = vxor.u32 %v3089, 2147483648
    %v3106 = vxor.u32 %v3090, 2147483648
    %v3107 = vxor.u32 %v3091, 2147483648
    %v3108 = vxor.u32 %v3092, 2147483648
    %v3109 = vxor.u32 %v3093, 2147483648
    %v3110 = vxor.u32 %v3094, 2147483648
    %v3111 = vxor.u32 %v3095, 2147483648
    %v3112 = vxor.u32 %v3096, 2147483648
    %v3113 = vxor.u32 %v3097, 2147483648
    %v3114 = vxor.u32 %v3098, 2147483648
    %v3115 = vmul.f32 %v3099, 1.442695
    %v3116 = vpow.pop %v3115
    %v3117 = vmul.f32 %v3100, 1.442695
    %v3118 = vpow.pop %v3117
    %v3119 = vmul.f32 %v3101, 1.442695
    %v3120 = vpow.pop %v3119
    %v3121 = vmul.f32 %v3102, 1.442695
    %v3122 = vpow.pop %v3121
    %v3123 = vmul.f32 %v3103, 1.442695
    %v3124 = vpow.pop %v3123
    %v3125 = vmul.f32 %v3104, 1.442695
    %v3126 = vpow.pop %v3125
    %v3127 = vmul.f32 %v3105, 1.442695
    %v3128 = vpow.pop %v3127
    %v3129 = vmul.f32 %v3106, 1.442695
    %v3130 = vpow.pop %v3129
    %v3131 = vmul.f32 %v3107, 1.442695
    %v3132 = vpow.pop %v3131
    %v3133 = vmul.f32 %v3108, 1.442695
    %v3134 = vpow.pop %v3133
    %v3135 = vmul.f32 %v3109, 1.442695
    %v3136 = vpow.pop %v3135
    %v3137 = vmul.f32 %v3110, 1.442695
    %v3138 = vpow.pop %v3137
    %v3139 = vmul.f32 %v3111, 1.442695
    %v3140 = vpow.pop %v3139
    %v3141 = vmul.f32 %v3112, 1.442695
    %v3142 = vpow.pop %v3141
    %v3143 = vmul.f32 %v3113, 1.442695
    %v3144 = vpow.pop %v3143
    %v3145 = vmul.f32 %v3114, 1.442695
    %v3146 = vpow.pop %v3145
    %v3147 = vadd.f32 %v3116, 1.0
    %v3148 = vadd.f32 %v3118, 1.0
    %v3149 = vadd.f32 %v3120, 1.0
    %v3150 = vadd.f32 %v3122, 1.0
    %v3151 = vadd.f32 %v3124, 1.0
    %v3152 = vadd.f32 %v3126, 1.0
    %v3153 = vadd.f32 %v3128, 1.0
    %v3154 = vadd.f32 %v3130, 1.0
    %v3155 = vadd.f32 %v3132, 1.0
    %v3156 = vadd.f32 %v3134, 1.0
    %v3157 = vadd.f32 %v3136, 1.0
    %v3158 = vadd.f32 %v3138, 1.0
    %v3159 = vadd.f32 %v3140, 1.0
    %v3160 = vadd.f32 %v3142, 1.0
    %v3161 = vadd.f32 %v3144, 1.0
    %v3162 = vadd.f32 %v3146, 1.0
    %v3163 = vrcp.pop %v3147
    %v3164 = vmul.f32 %v3147, %v3163
    %v3165 = vsub.f32 1.0, %v3164
    %v3166 = vmul.f32 %v3163, %v3165
    %v3167 = vadd.f32 %v3163, %v3166
    %vm3168 = vweird.f32 %v3147
    %vm3169 = vweird.f32 %v3163
    %vm3170 = vmor %vm3168, %vm3169
    %v3171 = vsel %vm3170, %v3163, %v3167
    %v3172 = vand.u32 2147483647, %v3147
    %vm3173 = vcmp.eq.f32.partialorder %v3172, 8.507059e+37
    %v3174 = vand.u32 %v3147, 2147483648
    %v3175 = vor.u32 1.1754944e-38, %v3174
    %v3176 = vsel %vm3173, %v3175, %v3171
    %v3177 = vmul.f32 1.0, %v3176
    %v3178 = vrcp.pop %v3148
    %v3179 = vmul.f32 %v3148, %v3178
    %v3180 = vsub.f32 1.0, %v3179
    %v3181 = vmul.f32 %v3178, %v3180
    %v3182 = vadd.f32 %v3178, %v3181
    %vm3183 = vweird.f32 %v3148
    %vm3184 = vweird.f32 %v3178
    %vm3185 = vmor %vm3183, %vm3184
    %v3186 = vsel %vm3185, %v3178, %v3182
    %v3187 = vand.u32 2147483647, %v3148
    %vm3188 = vcmp.eq.f32.partialorder %v3187, 8.507059e+37
    %v3189 = vand.u32 %v3148, 2147483648
    %v3190 = vor.u32 1.1754944e-38, %v3189
    %v3191 = vsel %vm3188, %v3190, %v3186
    %v3192 = vmul.f32 1.0, %v3191
    %v3193 = vrcp.pop %v3149
    %v3194 = vmul.f32 %v3149, %v3193
    %v3195 = vsub.f32 1.0, %v3194
    %v3196 = vmul.f32 %v3193, %v3195
    %v3197 = vadd.f32 %v3193, %v3196
    %vm3198 = vweird.f32 %v3149
    %vm3199 = vweird.f32 %v3193
    %vm3200 = vmor %vm3198, %vm3199
    %v3201 = vsel %vm3200, %v3193, %v3197
    %v3202 = vand.u32 2147483647, %v3149
    %vm3203 = vcmp.eq.f32.partialorder %v3202, 8.507059e+37
    %v3204 = vand.u32 %v3149, 2147483648
    %v3205 = vor.u32 1.1754944e-38, %v3204
    %v3206 = vsel %vm3203, %v3205, %v3201
    %v3207 = vmul.f32 1.0, %v3206
    %v3208 = vrcp.pop %v3150
    %v3209 = vmul.f32 %v3150, %v3208
    %v3210 = vsub.f32 1.0, %v3209
    %v3211 = vmul.f32 %v3208, %v3210
    %v3212 = vadd.f32 %v3208, %v3211
    %vm3213 = vweird.f32 %v3150
    %vm3214 = vweird.f32 %v3208
    %vm3215 = vmor %vm3213, %vm3214
    %v3216 = vsel %vm3215, %v3208, %v3212
    %v3217 = vand.u32 2147483647, %v3150
    %vm3218 = vcmp.eq.f32.partialorder %v3217, 8.507059e+37
    %v3219 = vand.u32 %v3150, 2147483648
    %v3220 = vor.u32 1.1754944e-38, %v3219
    %v3221 = vsel %vm3218, %v3220, %v3216
    %v3222 = vmul.f32 1.0, %v3221
    %v3223 = vrcp.pop %v3151
    %v3224 = vmul.f32 %v3151, %v3223
    %v3225 = vsub.f32 1.0, %v3224
    %v3226 = vmul.f32 %v3223, %v3225
    %v3227 = vadd.f32 %v3223, %v3226
    %vm3228 = vweird.f32 %v3151
    %vm3229 = vweird.f32 %v3223
    %vm3230 = vmor %vm3228, %vm3229
    %v3231 = vsel %vm3230, %v3223, %v3227
    %v3232 = vand.u32 2147483647, %v3151
    %vm3233 = vcmp.eq.f32.partialorder %v3232, 8.507059e+37
    %v3234 = vand.u32 %v3151, 2147483648
    %v3235 = vor.u32 1.1754944e-38, %v3234
    %v3236 = vsel %vm3233, %v3235, %v3231
    %v3237 = vmul.f32 1.0, %v3236
    %v3238 = vrcp.pop %v3152
    %v3239 = vmul.f32 %v3152, %v3238
    %v3240 = vsub.f32 1.0, %v3239
    %v3241 = vmul.f32 %v3238, %v3240
    %v3242 = vadd.f32 %v3238, %v3241
    %vm3243 = vweird.f32 %v3152
    %vm3244 = vweird.f32 %v3238
    %vm3245 = vmor %vm3243, %vm3244
    %v3246 = vsel %vm3245, %v3238, %v3242
    %v3247 = vand.u32 2147483647, %v3152
    %vm3248 = vcmp.eq.f32.partialorder %v3247, 8.507059e+37
    %v3249 = vand.u32 %v3152, 2147483648
    %v3250 = vor.u32 1.1754944e-38, %v3249
    %v3251 = vsel %vm3248, %v3250, %v3246
    %v3252 = vmul.f32 1.0, %v3251
    %v3253 = vrcp.pop %v3153
    %v3254 = vmul.f32 %v3153, %v3253
    %v3255 = vsub.f32 1.0, %v3254
    %v3256 = vmul.f32 %v3253, %v3255
    %v3257 = vadd.f32 %v3253, %v3256
    %vm3258 = vweird.f32 %v3153
    %vm3259 = vweird.f32 %v3253
    %vm3260 = vmor %vm3258, %vm3259
    %v3261 = vsel %vm3260, %v3253, %v3257
    %v3262 = vand.u32 2147483647, %v3153
    %vm3263 = vcmp.eq.f32.partialorder %v3262, 8.507059e+37
    %v3264 = vand.u32 %v3153, 2147483648
    %v3265 = vor.u32 1.1754944e-38, %v3264
    %v3266 = vsel %vm3263, %v3265, %v3261
    %v3267 = vmul.f32 1.0, %v3266
    %v3268 = vrcp.pop %v3154
    %v3269 = vmul.f32 %v3154, %v3268
    %v3270 = vsub.f32 1.0, %v3269
    %v3271 = vmul.f32 %v3268, %v3270
    %v3272 = vadd.f32 %v3268, %v3271
    %vm3273 = vweird.f32 %v3154
    %vm3274 = vweird.f32 %v3268
    %vm3275 = vmor %vm3273, %vm3274
    %v3276 = vsel %vm3275, %v3268, %v3272
    %v3277 = vand.u32 2147483647, %v3154
    %vm3278 = vcmp.eq.f32.partialorder %v3277, 8.507059e+37
    %v3279 = vand.u32 %v3154, 2147483648
    %v3280 = vor.u32 1.1754944e-38, %v3279
    %v3281 = vsel %vm3278, %v3280, %v3276
    %v3282 = vmul.f32 1.0, %v3281
    %v3283 = vrcp.pop %v3155
    %v3284 = vmul.f32 %v3155, %v3283
    %v3285 = vsub.f32 1.0, %v3284
    %v3286 = vmul.f32 %v3283, %v3285
    %v3287 = vadd.f32 %v3283, %v3286
    %vm3288 = vweird.f32 %v3155
    %vm3289 = vweird.f32 %v3283
    %vm3290 = vmor %vm3288, %vm3289
    %v3291 = vsel %vm3290, %v3283, %v3287
    %v3292 = vand.u32 2147483647, %v3155
    %vm3293 = vcmp.eq.f32.partialorder %v3292, 8.507059e+37
    %v3294 = vand.u32 %v3155, 2147483648
    %v3295 = vor.u32 1.1754944e-38, %v3294
    %v3296 = vsel %vm3293, %v3295, %v3291
    %v3297 = vmul.f32 1.0, %v3296
    %v3298 = vrcp.pop %v3156
    %v3299 = vmul.f32 %v3156, %v3298
    %v3300 = vsub.f32 1.0, %v3299
    %v3301 = vmul.f32 %v3298, %v3300
    %v3302 = vadd.f32 %v3298, %v3301
    %vm3303 = vweird.f32 %v3156
    %vm3304 = vweird.f32 %v3298
    %vm3305 = vmor %vm3303, %vm3304
    %v3306 = vsel %vm3305, %v3298, %v3302
    %v3307 = vand.u32 2147483647, %v3156
    %vm3308 = vcmp.eq.f32.partialorder %v3307, 8.507059e+37
    %v3309 = vand.u32 %v3156, 2147483648
    %v3310 = vor.u32 1.1754944e-38, %v3309
    %v3311 = vsel %vm3308, %v3310, %v3306
    %v3312 = vmul.f32 1.0, %v3311
    %v3313 = vrcp.pop %v3157
    %v3314 = vmul.f32 %v3157, %v3313
    %v3315 = vsub.f32 1.0, %v3314
    %v3316 = vmul.f32 %v3313, %v3315
    %v3317 = vadd.f32 %v3313, %v3316
    %vm3318 = vweird.f32 %v3157
    %vm3319 = vweird.f32 %v3313
    %vm3320 = vmor %vm3318, %vm3319
    %v3321 = vsel %vm3320, %v3313, %v3317
    %v3322 = vand.u32 2147483647, %v3157
    %vm3323 = vcmp.eq.f32.partialorder %v3322, 8.507059e+37
    %v3324 = vand.u32 %v3157, 2147483648
    %v3325 = vor.u32 1.1754944e-38, %v3324
    %v3326 = vsel %vm3323, %v3325, %v3321
    %v3327 = vmul.f32 1.0, %v3326
    %v3328 = vrcp.pop %v3158
    %v3329 = vmul.f32 %v3158, %v3328
    %v3330 = vsub.f32 1.0, %v3329
    %v3331 = vmul.f32 %v3328, %v3330
    %v3332 = vadd.f32 %v3328, %v3331
    %vm3333 = vweird.f32 %v3158
    %vm3334 = vweird.f32 %v3328
    %vm3335 = vmor %vm3333, %vm3334
    %v3336 = vsel %vm3335, %v3328, %v3332
    %v3337 = vand.u32 2147483647, %v3158
    %vm3338 = vcmp.eq.f32.partialorder %v3337, 8.507059e+37
    %v3339 = vand.u32 %v3158, 2147483648
    %v3340 = vor.u32 1.1754944e-38, %v3339
    %v3341 = vsel %vm3338, %v3340, %v3336
    %v3342 = vmul.f32 1.0, %v3341
    %v3343 = vrcp.pop %v3159
    %v3344 = vmul.f32 %v3159, %v3343
    %v3345 = vsub.f32 1.0, %v3344
    %v3346 = vmul.f32 %v3343, %v3345
    %v3347 = vadd.f32 %v3343, %v3346
    %vm3348 = vweird.f32 %v3159
    %vm3349 = vweird.f32 %v3343
    %vm3350 = vmor %vm3348, %vm3349
    %v3351 = vsel %vm3350, %v3343, %v3347
    %v3352 = vand.u32 2147483647, %v3159
    %vm3353 = vcmp.eq.f32.partialorder %v3352, 8.507059e+37
    %v3354 = vand.u32 %v3159, 2147483648
    %v3355 = vor.u32 1.1754944e-38, %v3354
    %v3356 = vsel %vm3353, %v3355, %v3351
    %v3357 = vmul.f32 1.0, %v3356
    %v3358 = vrcp.pop %v3160
    %v3359 = vmul.f32 %v3160, %v3358
    %v3360 = vsub.f32 1.0, %v3359
    %v3361 = vmul.f32 %v3358, %v3360
    %v3362 = vadd.f32 %v3358, %v3361
    %vm3363 = vweird.f32 %v3160
    %vm3364 = vweird.f32 %v3358
    %vm3365 = vmor %vm3363, %vm3364
    %v3366 = vsel %vm3365, %v3358, %v3362
    %v3367 = vand.u32 2147483647, %v3160
    %vm3368 = vcmp.eq.f32.partialorder %v3367, 8.507059e+37
    %v3369 = vand.u32 %v3160, 2147483648
    %v3370 = vor.u32 1.1754944e-38, %v3369
    %v3371 = vsel %vm3368, %v3370, %v3366
    %v3372 = vmul.f32 1.0, %v3371
    %v3373 = vrcp.pop %v3161
    %v3374 = vmul.f32 %v3161, %v3373
    %v3375 = vsub.f32 1.0, %v3374
    %v3376 = vmul.f32 %v3373, %v3375
    %v3377 = vadd.f32 %v3373, %v3376
    %vm3378 = vweird.f32 %v3161
    %vm3379 = vweird.f32 %v3373
    %vm3380 = vmor %vm3378, %vm3379
    %v3381 = vsel %vm3380, %v3373, %v3377
    %v3382 = vand.u32 2147483647, %v3161
    %vm3383 = vcmp.eq.f32.partialorder %v3382, 8.507059e+37
    %v3384 = vand.u32 %v3161, 2147483648
    %v3385 = vor.u32 1.1754944e-38, %v3384
    %v3386 = vsel %vm3383, %v3385, %v3381
    %v3387 = vmul.f32 1.0, %v3386
    %v3388 = vrcp.pop %v3162
    %v3389 = vmul.f32 %v3162, %v3388
    %v3390 = vsub.f32 1.0, %v3389
    %v3391 = vmul.f32 %v3388, %v3390
    %v3392 = vadd.f32 %v3388, %v3391
    %vm3393 = vweird.f32 %v3162
    %vm3394 = vweird.f32 %v3388
    %vm3395 = vmor %vm3393, %vm3394
    %v3396 = vsel %vm3395, %v3388, %v3392
    %v3397 = vand.u32 2147483647, %v3162
    %vm3398 = vcmp.eq.f32.partialorder %v3397, 8.507059e+37
    %v3399 = vand.u32 %v3162, 2147483648
    %v3400 = vor.u32 1.1754944e-38, %v3399
    %v3401 = vsel %vm3398, %v3400, %v3396
    %v3402 = vmul.f32 1.0, %v3401
    %3419 = vrot.lane.b32.xlu0 %v3083, 32
    %v3420 = vpop.permute.xlu0 %3419
    %3421 = vrot.lane.b32.xlu0 %v3084, 32
    %v3422 = vpop.permute.xlu0 %3421
    %3423 = vrot.lane.b32.xlu0 %v3085, 32
    %v3424 = vpop.permute.xlu0 %3423
    %3425 = vrot.lane.b32.xlu0 %v3086, 32
    %v3426 = vpop.permute.xlu0 %3425
    %3427 = vrot.lane.b32.xlu0 %v3087, 32
    %v3428 = vpop.permute.xlu0 %3427
    %3429 = vrot.lane.b32.xlu0 %v3088, 32
    %v3430 = vpop.permute.xlu0 %3429
    %3431 = vrot.lane.b32.xlu0 %v3089, 32
    %v3432 = vpop.permute.xlu0 %3431
    %3433 = vrot.lane.b32.xlu0 %v3090, 32
    %v3434 = vpop.permute.xlu0 %3433
    %3435 = vrot.lane.b32.xlu0 %v3091, 32
    %v3436 = vpop.permute.xlu0 %3435
    %3437 = vrot.lane.b32.xlu0 %v3092, 32
    %v3438 = vpop.permute.xlu0 %3437
    %3439 = vrot.lane.b32.xlu0 %v3093, 32
    %v3440 = vpop.permute.xlu0 %3439
    %3441 = vrot.lane.b32.xlu0 %v3094, 32
    %v3442 = vpop.permute.xlu0 %3441
    %3443 = vrot.lane.b32.xlu0 %v3095, 32
    %v3444 = vpop.permute.xlu0 %3443
    %3445 = vrot.lane.b32.xlu0 %v3096, 32
    %v3446 = vpop.permute.xlu0 %3445
    %3447 = vrot.lane.b32.xlu0 %v3097, 32
    %v3448 = vpop.permute.xlu0 %3447
    %3449 = vrot.lane.b32.xlu0 %v3098, 32
    %v3450 = vpop.permute.xlu0 %3449
    %v3467 = vmul.f32 %v3177, %v3420
    %v3468 = vmul.f32 %v3192, %v3422
    %v3469 = vmul.f32 %v3207, %v3424
    %v3470 = vmul.f32 %v3222, %v3426
    %v3471 = vmul.f32 %v3237, %v3428
    %v3472 = vmul.f32 %v3252, %v3430
    %v3473 = vmul.f32 %v3267, %v3432
    %v3474 = vmul.f32 %v3282, %v3434
    %v3475 = vmul.f32 %v3297, %v3436
    %v3476 = vmul.f32 %v3312, %v3438
    %v3477 = vmul.f32 %v3327, %v3440
    %v3478 = vmul.f32 %v3342, %v3442
    %v3479 = vmul.f32 %v3357, %v3444
    %v3480 = vmul.f32 %v3372, %v3446
    %v3481 = vmul.f32 %v3387, %v3448
    %v3482 = vmul.f32 %v3402, %v3450
    %3499 = vrot.lane.b32.xlu0 %v3467, 64
    %v3500 = vpop.permute.xlu0 %3499
    %3501 = vrot.lane.b32.xlu0 %v3468, 64
    %v3502 = vpop.permute.xlu0 %3501
    %3503 = vrot.lane.b32.xlu0 %v3469, 64
    %v3504 = vpop.permute.xlu0 %3503
    %3505 = vrot.lane.b32.xlu0 %v3470, 64
    %v3506 = vpop.permute.xlu0 %3505
    %3507 = vrot.lane.b32.xlu0 %v3471, 64
    %v3508 = vpop.permute.xlu0 %3507
    %3509 = vrot.lane.b32.xlu0 %v3472, 64
    %v3510 = vpop.permute.xlu0 %3509
    %3511 = vrot.lane.b32.xlu0 %v3473, 64
    %v3512 = vpop.permute.xlu0 %3511
    %3513 = vrot.lane.b32.xlu0 %v3474, 64
    %v3514 = vpop.permute.xlu0 %3513
    %3515 = vrot.lane.b32.xlu0 %v3475, 64
    %v3516 = vpop.permute.xlu0 %3515
    %3517 = vrot.lane.b32.xlu0 %v3476, 64
    %v3518 = vpop.permute.xlu0 %3517
    %3519 = vrot.lane.b32.xlu0 %v3477, 64
    %v3520 = vpop.permute.xlu0 %3519
    %3521 = vrot.lane.b32.xlu0 %v3478, 64
    %v3522 = vpop.permute.xlu0 %3521
    %3523 = vrot.lane.b32.xlu0 %v3479, 64
    %v3524 = vpop.permute.xlu0 %3523
    %3525 = vrot.lane.b32.xlu0 %v3480, 64
    %v3526 = vpop.permute.xlu0 %3525
    %3527 = vrot.lane.b32.xlu0 %v3481, 64
    %v3528 = vpop.permute.xlu0 %3527
    %3529 = vrot.lane.b32.xlu0 %v3482, 64
    %v3530 = vpop.permute.xlu0 %3529
    %v3547 = vadd.f32 %v3083, %v3500
    %v3548 = vadd.f32 %v3084, %v3502
    %v3549 = vadd.f32 %v3085, %v3504
    %v3550 = vadd.f32 %v3086, %v3506
    %v3551 = vadd.f32 %v3087, %v3508
    %v3552 = vadd.f32 %v3088, %v3510
    %v3553 = vadd.f32 %v3089, %v3512
    %v3554 = vadd.f32 %v3090, %v3514
    %v3555 = vadd.f32 %v3091, %v3516
    %v3556 = vadd.f32 %v3092, %v3518
    %v3557 = vadd.f32 %v3093, %v3520
    %v3558 = vadd.f32 %v3094, %v3522
    %v3559 = vadd.f32 %v3095, %v3524
    %v3560 = vadd.f32 %v3096, %v3526
    %v3561 = vadd.f32 %v3097, %v3528
    %v3562 = vadd.f32 %v3098, %v3530
    %v3563 = vtanh.pop %v3547
    %v3564 = vtanh.pop %v3548
    %v3565 = vtanh.pop %v3549
    %v3566 = vtanh.pop %v3550
    %v3567 = vtanh.pop %v3551
    %v3568 = vtanh.pop %v3552
    %v3569 = vtanh.pop %v3553
    %v3570 = vtanh.pop %v3554
    %v3571 = vtanh.pop %v3555
    %v3572 = vtanh.pop %v3556
    %v3573 = vtanh.pop %v3557
    %v3574 = vtanh.pop %v3558
    %v3575 = vtanh.pop %v3559
    %v3576 = vtanh.pop %v3560
    %v3577 = vtanh.pop %v3561
    %v3578 = vtanh.pop %v3562
    %v3579 = vsub.f32 1.0, %v3177
    %v3580 = vsub.f32 1.0, %v3192
    %v3581 = vsub.f32 1.0, %v3207
    %v3582 = vsub.f32 1.0, %v3222
    %v3583 = vsub.f32 1.0, %v3237
    %v3584 = vsub.f32 1.0, %v3252
    %v3585 = vsub.f32 1.0, %v3267
    %v3586 = vsub.f32 1.0, %v3282
    %v3587 = vsub.f32 1.0, %v3297
    %v3588 = vsub.f32 1.0, %v3312
    %v3589 = vsub.f32 1.0, %v3327
    %v3590 = vsub.f32 1.0, %v3342
    %v3591 = vsub.f32 1.0, %v3357
    %v3592 = vsub.f32 1.0, %v3372
    %v3593 = vsub.f32 1.0, %v3387
    %v3594 = vsub.f32 1.0, %v3402
    %3611 = vrot.lane.b32.xlu0 %v3563, 96
    %v3612 = vpop.permute.xlu0 %3611
    %3613 = vrot.lane.b32.xlu0 %v3564, 96
    %v3614 = vpop.permute.xlu0 %3613
    %3615 = vrot.lane.b32.xlu0 %v3565, 96
    %v3616 = vpop.permute.xlu0 %3615
    %3617 = vrot.lane.b32.xlu0 %v3566, 96
    %v3618 = vpop.permute.xlu0 %3617
    %3619 = vrot.lane.b32.xlu0 %v3567, 96
    %v3620 = vpop.permute.xlu0 %3619
    %3621 = vrot.lane.b32.xlu0 %v3568, 96
    %v3622 = vpop.permute.xlu0 %3621
    %3623 = vrot.lane.b32.xlu0 %v3569, 96
    %v3624 = vpop.permute.xlu0 %3623
    %3625 = vrot.lane.b32.xlu0 %v3570, 96
    %v3626 = vpop.permute.xlu0 %3625
    %3627 = vrot.lane.b32.xlu0 %v3571, 96
    %v3628 = vpop.permute.xlu0 %3627
    %3629 = vrot.lane.b32.xlu0 %v3572, 96
    %v3630 = vpop.permute.xlu0 %3629
    %3631 = vrot.lane.b32.xlu0 %v3573, 96
    %v3632 = vpop.permute.xlu0 %3631
    %3633 = vrot.lane.b32.xlu0 %v3574, 96
    %v3634 = vpop.permute.xlu0 %3633
    %3635 = vrot.lane.b32.xlu0 %v3575, 96
    %v3636 = vpop.permute.xlu0 %3635
    %3637 = vrot.lane.b32.xlu0 %v3576, 96
    %v3638 = vpop.permute.xlu0 %3637
    %3639 = vrot.lane.b32.xlu0 %v3577, 96
    %v3640 = vpop.permute.xlu0 %3639
    %3641 = vrot.lane.b32.xlu0 %v3578, 96
    %v3642 = vpop.permute.xlu0 %3641
    %v3659 = vmul.f32 %v3579, %v3612
    %v3660 = vmul.f32 %v3580, %v3614
    %v3661 = vmul.f32 %v3581, %v3616
    %v3662 = vmul.f32 %v3582, %v3618
    %v3663 = vmul.f32 %v3583, %v3620
    %v3664 = vmul.f32 %v3584, %v3622
    %v3665 = vmul.f32 %v3585, %v3624
    %v3666 = vmul.f32 %v3586, %v3626
    %v3667 = vmul.f32 %v3587, %v3628
    %v3668 = vmul.f32 %v3588, %v3630
    %v3669 = vmul.f32 %v3589, %v3632
    %v3670 = vmul.f32 %v3590, %v3634
    %v3671 = vmul.f32 %v3591, %v3636
    %v3672 = vmul.f32 %v3592, %v3638
    %v3673 = vmul.f32 %v3593, %v3640
    %v3674 = vmul.f32 %v3594, %v3642
    %v3675 = vmul.f32 %v3177, %v2517
    %v3676 = vmul.f32 %v3192, %v2518
    %v3677 = vmul.f32 %v3207, %v2519
    %v3678 = vmul.f32 %v3222, %v2520
    %v3679 = vmul.f32 %v3237, %v2521
    %v3680 = vmul.f32 %v3252, %v2522
    %v3681 = vmul.f32 %v3267, %v2523
    %v3682 = vmul.f32 %v3282, %v2524
    %v3683 = vmul.f32 %v3297, %v2525
    %v3684 = vmul.f32 %v3312, %v2526
    %v3685 = vmul.f32 %v3327, %v2527
    %v3686 = vmul.f32 %v3342, %v2528
    %v3687 = vmul.f32 %v3357, %v2529
    %v3688 = vmul.f32 %v3372, %v2530
    %v3689 = vmul.f32 %v3387, %v2531
    %v3690 = vmul.f32 %v3402, %v2532
    %v3691 = vadd.f32 %v3659, %v3675
    %v3692 = vadd.f32 %v3660, %v3676
    %v3693 = vadd.f32 %v3661, %v3677
    %v3694 = vadd.f32 %v3662, %v3678
    %v3695 = vadd.f32 %v3663, %v3679
    %v3696 = vadd.f32 %v3664, %v3680
    %v3697 = vadd.f32 %v3665, %v3681
    %v3698 = vadd.f32 %v3666, %v3682
    %v3699 = vadd.f32 %v3667, %v3683
    %v3700 = vadd.f32 %v3668, %v3684
    %v3701 = vadd.f32 %v3669, %v3685
    %v3702 = vadd.f32 %v3670, %v3686
    %v3703 = vadd.f32 %v3671, %v3687
    %v3704 = vadd.f32 %v3672, %v3688
    %v3705 = vadd.f32 %v3673, %v3689
    %v3706 = vadd.f32 %v3674, %v3690
    %v3707 = vld [vmem:[%s7] sm:$0xff]
    %v3708 = vld [vmem:[%s7 + $0x8] sm:$0xff]
    %v3709 = vld [vmem:[%s7 + $0x10] sm:$0xff]
    %v3710 = vld [vmem:[%s7 + $0x18] sm:$0xff]
    %v3711 = vld [vmem:[%s8] sm:$0x1]
    %v3713 = vperm.slane %v3711, 0
    %3731 = vrot.lane.b32.xlu0 %v3691, 96
    %v3732 = vpop.permute.xlu0 %3731
    %3733 = vrot.lane.b32.xlu0 %v3692, 96
    %v3734 = vpop.permute.xlu0 %3733
    %3735 = vrot.lane.b32.xlu0 %v3693, 96
    %v3736 = vpop.permute.xlu0 %3735
    %3737 = vrot.lane.b32.xlu0 %v3694, 96
    %v3738 = vpop.permute.xlu0 %3737
    %3739 = vrot.lane.b32.xlu0 %v3695, 96
    %v3740 = vpop.permute.xlu0 %3739
    %3741 = vrot.lane.b32.xlu0 %v3696, 96
    %v3742 = vpop.permute.xlu0 %3741
    %3743 = vrot.lane.b32.xlu0 %v3697, 96
    %v3744 = vpop.permute.xlu0 %3743
    %3745 = vrot.lane.b32.xlu0 %v3698, 96
    %v3746 = vpop.permute.xlu0 %3745
    %3747 = vrot.lane.b32.xlu0 %v3699, 96
    %v3748 = vpop.permute.xlu0 %3747
    %3749 = vrot.lane.b32.xlu0 %v3700, 96
    %v3750 = vpop.permute.xlu0 %3749
    %3751 = vrot.lane.b32.xlu0 %v3701, 96
    %v3752 = vpop.permute.xlu0 %3751
    %3753 = vrot.lane.b32.xlu0 %v3702, 96
    %v3754 = vpop.permute.xlu0 %3753
    %3755 = vrot.lane.b32.xlu0 %v3703, 96
    %v3756 = vpop.permute.xlu0 %3755
    %3757 = vrot.lane.b32.xlu0 %v3704, 96
    %v3758 = vpop.permute.xlu0 %3757
    %3759 = vrot.lane.b32.xlu0 %v3705, 96
    %v3760 = vpop.permute.xlu0 %3759
    %3761 = vrot.lane.b32.xlu0 %v3706, 96
    %v3762 = vpop.permute.xlu0 %3761
    %v3763 = vsel %vm126, %v3732, 0
    %v3765 = vsel %vm126, %v3734, 0
    %v3767 = vsel %vm126, %v3736, 0
    %v3769 = vsel %vm126, %v3738, 0
    %v3771 = vsel %vm126, %v3740, 0
    %v3773 = vsel %vm126, %v3742, 0
    %v3775 = vsel %vm126, %v3744, 0
    %v3777 = vsel %vm126, %v3746, 0
    %v3779 = vsel %vm126, %v3748, 0
    %v3781 = vsel %vm126, %v3750, 0
    %v3783 = vsel %vm126, %v3752, 0
    %v3785 = vsel %vm126, %v3754, 0
    %v3787 = vsel %vm126, %v3756, 0
    %v3789 = vsel %vm126, %v3758, 0
    %v3791 = vsel %vm126, %v3760, 0
    %v3793 = vsel %vm126, %v3762, 0
    %3795 = vmatpush.msra.mxu0 0.0
    %3796 = vmatpush.msra.mxu0 0.0
    %3797 = vmatpush.msra.mxu0 0.0
    %3798 = vmatpush.msra.mxu0 0.0
    %3799 = vmatpush.msra.mxu0 0.0
    %3800 = vmatpush.msra.mxu0 0.0
    %3801 = vmatpush.msra.mxu0 0.0
    %3802 = vmatpush.msra.mxu0 0.0
    %3803 = vmatpush.msra.mxu0 0.0
    %3804 = vmatpush.msra.mxu0 0.0
    %3805 = vmatpush.msra.mxu0 0.0
    %3806 = vmatpush.msra.mxu0 0.0
    %3807 = vmatpush.msra.mxu0 %v3710
    %3808 = vmatpush.msra.mxu0 %v3709
    %3809 = vmatpush.msra.mxu0 %v3708
    %3810 = vmatpush.msra.mxu0 %v3707
    %3811 = vmatmul.f32.gmra.mxu0 %v3763
    %v3812 = vpop.f32.mrf.mxu0
    %v3813 = vadd.f32 %v3713, %v3812
    %3814 = vmatmul.f32.gmra.mxu0 %v3765
    %v3815 = vpop.f32.mrf.mxu0
    %v3816 = vadd.f32 %v3713, %v3815
    %3817 = vmatmul.f32.gmra.mxu0 %v3767
    %v3818 = vpop.f32.mrf.mxu0
    %v3819 = vadd.f32 %v3713, %v3818
    %3820 = vmatmul.f32.gmra.mxu0 %v3769
    %v3821 = vpop.f32.mrf.mxu0
    %v3822 = vadd.f32 %v3713, %v3821
    %3823 = vmatmul.f32.gmra.mxu0 %v3771
    %v3824 = vpop.f32.mrf.mxu0
    %v3825 = vadd.f32 %v3713, %v3824
    %3826 = vmatmul.f32.gmra.mxu0 %v3773
    %v3827 = vpop.f32.mrf.mxu0
    %v3828 = vadd.f32 %v3713, %v3827
    %3829 = vmatmul.f32.gmra.mxu0 %v3775
    %v3830 = vpop.f32.mrf.mxu0
    %v3831 = vadd.f32 %v3713, %v3830
    %3832 = vmatmul.f32.gmra.mxu0 %v3777
    %v3833 = vpop.f32.mrf.mxu0
    %v3834 = vadd.f32 %v3713, %v3833
    %3835 = vmatmul.f32.gmra.mxu0 %v3779
    %v3836 = vpop.f32.mrf.mxu0
    %v3837 = vadd.f32 %v3713, %v3836
    %3838 = vmatmul.f32.gmra.mxu0 %v3781
    %v3839 = vpop.f32.mrf.mxu0
    %v3840 = vadd.f32 %v3713, %v3839
    %3841 = vmatmul.f32.gmra.mxu0 %v3783
    %v3842 = vpop.f32.mrf.mxu0
    %v3843 = vadd.f32 %v3713, %v3842
    %3844 = vmatmul.f32.gmra.mxu0 %v3785
    %v3845 = vpop.f32.mrf.mxu0
    %v3846 = vadd.f32 %v3713, %v3845
    %3847 = vmatmul.f32.gmra.mxu0 %v3787
    %v3848 = vpop.f32.mrf.mxu0
    %v3849 = vadd.f32 %v3713, %v3848
    %3850 = vmatmul.f32.gmra.mxu0 %v3789
    %v3851 = vpop.f32.mrf.mxu0
    %v3852 = vadd.f32 %v3713, %v3851
    %3853 = vmatmul.f32.gmra.mxu0 %v3791
    %v3854 = vpop.f32.mrf.mxu0
    %v3855 = vadd.f32 %v3713, %v3854
    %3856 = vmatmul.f32.gmra.mxu0 %v3793
    %v3857 = vpop.f32.mrf.mxu0
    %v3858 = vadd.f32 %v3713, %v3857
    %3859 = vdwg.mxu0
    %v3860 = vxor.u32 %v3813, 2147483648
    %v3861 = vxor.u32 %v3816, 2147483648
    %v3862 = vxor.u32 %v3819, 2147483648
    %v3863 = vxor.u32 %v3822, 2147483648
    %v3864 = vxor.u32 %v3825, 2147483648
    %v3865 = vxor.u32 %v3828, 2147483648
    %v3866 = vxor.u32 %v3831, 2147483648
    %v3867 = vxor.u32 %v3834, 2147483648
    %v3868 = vxor.u32 %v3837, 2147483648
    %v3869 = vxor.u32 %v3840, 2147483648
    %v3870 = vxor.u32 %v3843, 2147483648
    %v3871 = vxor.u32 %v3846, 2147483648
    %v3872 = vxor.u32 %v3849, 2147483648
    %v3873 = vxor.u32 %v3852, 2147483648
    %v3874 = vxor.u32 %v3855, 2147483648
    %v3875 = vxor.u32 %v3858, 2147483648
    %v3876 = vmul.f32 %v3860, 1.442695
    %v3877 = vpow.pop %v3876
    %v3878 = vmul.f32 %v3861, 1.442695
    %v3879 = vpow.pop %v3878
    %v3880 = vmul.f32 %v3862, 1.442695
    %v3881 = vpow.pop %v3880
    %v3882 = vmul.f32 %v3863, 1.442695
    %v3883 = vpow.pop %v3882
    %v3884 = vmul.f32 %v3864, 1.442695
    %v3885 = vpow.pop %v3884
    %v3886 = vmul.f32 %v3865, 1.442695
    %v3887 = vpow.pop %v3886
    %v3888 = vmul.f32 %v3866, 1.442695
    %v3889 = vpow.pop %v3888
    %v3890 = vmul.f32 %v3867, 1.442695
    %v3891 = vpow.pop %v3890
    %v3892 = vmul.f32 %v3868, 1.442695
    %v3893 = vpow.pop %v3892
    %v3894 = vmul.f32 %v3869, 1.442695
    %v3895 = vpow.pop %v3894
    %v3896 = vmul.f32 %v3870, 1.442695
    %v3897 = vpow.pop %v3896
    %v3898 = vmul.f32 %v3871, 1.442695
    %v3899 = vpow.pop %v3898
    %v3900 = vmul.f32 %v3872, 1.442695
    %v3901 = vpow.pop %v3900
    %v3902 = vmul.f32 %v3873, 1.442695
    %v3903 = vpow.pop %v3902
    %v3904 = vmul.f32 %v3874, 1.442695
    %v3905 = vpow.pop %v3904
    %v3906 = vmul.f32 %v3875, 1.442695
    %v3907 = vpow.pop %v3906
    %v3908 = vadd.f32 %v3877, 1.0
    %v3909 = vadd.f32 %v3879, 1.0
    %v3910 = vadd.f32 %v3881, 1.0
    %v3911 = vadd.f32 %v3883, 1.0
    %v3912 = vadd.f32 %v3885, 1.0
    %v3913 = vadd.f32 %v3887, 1.0
    %v3914 = vadd.f32 %v3889, 1.0
    %v3915 = vadd.f32 %v3891, 1.0
    %v3916 = vadd.f32 %v3893, 1.0
    %v3917 = vadd.f32 %v3895, 1.0
    %v3918 = vadd.f32 %v3897, 1.0
    %v3919 = vadd.f32 %v3899, 1.0
    %v3920 = vadd.f32 %v3901, 1.0
    %v3921 = vadd.f32 %v3903, 1.0
    %v3922 = vadd.f32 %v3905, 1.0
    %v3923 = vadd.f32 %v3907, 1.0
    %v3924 = vrcp.pop %v3908
    %v3925 = vmul.f32 %v3908, %v3924
    %v3926 = vsub.f32 1.0, %v3925
    %v3927 = vmul.f32 %v3924, %v3926
    %v3928 = vadd.f32 %v3924, %v3927
    %vm3929 = vweird.f32 %v3908
    %vm3930 = vweird.f32 %v3924
    %vm3931 = vmor %vm3929, %vm3930
    %v3932 = vsel %vm3931, %v3924, %v3928
    %v3933 = vand.u32 2147483647, %v3908
    %vm3934 = vcmp.eq.f32.partialorder %v3933, 8.507059e+37
    %v3935 = vand.u32 %v3908, 2147483648
    %v3936 = vor.u32 1.1754944e-38, %v3935
    %v3937 = vsel %vm3934, %v3936, %v3932
    %v3938 = vmul.f32 1.0, %v3937
    %v3939 = vrcp.pop %v3909
    %v3940 = vmul.f32 %v3909, %v3939
    %v3941 = vsub.f32 1.0, %v3940
    %v3942 = vmul.f32 %v3939, %v3941
    %v3943 = vadd.f32 %v3939, %v3942
    %vm3944 = vweird.f32 %v3909
    %vm3945 = vweird.f32 %v3939
    %vm3946 = vmor %vm3944, %vm3945
    %v3947 = vsel %vm3946, %v3939, %v3943
    %v3948 = vand.u32 2147483647, %v3909
    %vm3949 = vcmp.eq.f32.partialorder %v3948, 8.507059e+37
    %v3950 = vand.u32 %v3909, 2147483648
    %v3951 = vor.u32 1.1754944e-38, %v3950
    %v3952 = vsel %vm3949, %v3951, %v3947
    %v3953 = vmul.f32 1.0, %v3952
    %v3954 = vrcp.pop %v3910
    %v3955 = vmul.f32 %v3910, %v3954
    %v3956 = vsub.f32 1.0, %v3955
    %v3957 = vmul.f32 %v3954, %v3956
    %v3958 = vadd.f32 %v3954, %v3957
    %vm3959 = vweird.f32 %v3910
    %vm3960 = vweird.f32 %v3954
    %vm3961 = vmor %vm3959, %vm3960
    %v3962 = vsel %vm3961, %v3954, %v3958
    %v3963 = vand.u32 2147483647, %v3910
    %vm3964 = vcmp.eq.f32.partialorder %v3963, 8.507059e+37
    %v3965 = vand.u32 %v3910, 2147483648
    %v3966 = vor.u32 1.1754944e-38, %v3965
    %v3967 = vsel %vm3964, %v3966, %v3962
    %v3968 = vmul.f32 1.0, %v3967
    %v3969 = vrcp.pop %v3911
    %v3970 = vmul.f32 %v3911, %v3969
    %v3971 = vsub.f32 1.0, %v3970
    %v3972 = vmul.f32 %v3969, %v3971
    %v3973 = vadd.f32 %v3969, %v3972
    %vm3974 = vweird.f32 %v3911
    %vm3975 = vweird.f32 %v3969
    %vm3976 = vmor %vm3974, %vm3975
    %v3977 = vsel %vm3976, %v3969, %v3973
    %v3978 = vand.u32 2147483647, %v3911
    %vm3979 = vcmp.eq.f32.partialorder %v3978, 8.507059e+37
    %v3980 = vand.u32 %v3911, 2147483648
    %v3981 = vor.u32 1.1754944e-38, %v3980
    %v3982 = vsel %vm3979, %v3981, %v3977
    %v3983 = vmul.f32 1.0, %v3982
    %v3984 = vrcp.pop %v3912
    %v3985 = vmul.f32 %v3912, %v3984
    %v3986 = vsub.f32 1.0, %v3985
    %v3987 = vmul.f32 %v3984, %v3986
    %v3988 = vadd.f32 %v3984, %v3987
    %vm3989 = vweird.f32 %v3912
    %vm3990 = vweird.f32 %v3984
    %vm3991 = vmor %vm3989, %vm3990
    %v3992 = vsel %vm3991, %v3984, %v3988
    %v3993 = vand.u32 2147483647, %v3912
    %vm3994 = vcmp.eq.f32.partialorder %v3993, 8.507059e+37
    %v3995 = vand.u32 %v3912, 2147483648
    %v3996 = vor.u32 1.1754944e-38, %v3995
    %v3997 = vsel %vm3994, %v3996, %v3992
    %v3998 = vmul.f32 1.0, %v3997
    %v3999 = vrcp.pop %v3913
    %v4000 = vmul.f32 %v3913, %v3999
    %v4001 = vsub.f32 1.0, %v4000
    %v4002 = vmul.f32 %v3999, %v4001
    %v4003 = vadd.f32 %v3999, %v4002
    %vm4004 = vweird.f32 %v3913
    %vm4005 = vweird.f32 %v3999
    %vm4006 = vmor %vm4004, %vm4005
    %v4007 = vsel %vm4006, %v3999, %v4003
    %v4008 = vand.u32 2147483647, %v3913
    %vm4009 = vcmp.eq.f32.partialorder %v4008, 8.507059e+37
    %v4010 = vand.u32 %v3913, 2147483648
    %v4011 = vor.u32 1.1754944e-38, %v4010
    %v4012 = vsel %vm4009, %v4011, %v4007
    %v4013 = vmul.f32 1.0, %v4012
    %v4014 = vrcp.pop %v3914
    %v4015 = vmul.f32 %v3914, %v4014
    %v4016 = vsub.f32 1.0, %v4015
    %v4017 = vmul.f32 %v4014, %v4016
    %v4018 = vadd.f32 %v4014, %v4017
    %vm4019 = vweird.f32 %v3914
    %vm4020 = vweird.f32 %v4014
    %vm4021 = vmor %vm4019, %vm4020
    %v4022 = vsel %vm4021, %v4014, %v4018
    %v4023 = vand.u32 2147483647, %v3914
    %vm4024 = vcmp.eq.f32.partialorder %v4023, 8.507059e+37
    %v4025 = vand.u32 %v3914, 2147483648
    %v4026 = vor.u32 1.1754944e-38, %v4025
    %v4027 = vsel %vm4024, %v4026, %v4022
    %v4028 = vmul.f32 1.0, %v4027
    %v4029 = vrcp.pop %v3915
    %v4030 = vmul.f32 %v3915, %v4029
    %v4031 = vsub.f32 1.0, %v4030
    %v4032 = vmul.f32 %v4029, %v4031
    %v4033 = vadd.f32 %v4029, %v4032
    %vm4034 = vweird.f32 %v3915
    %vm4035 = vweird.f32 %v4029
    %vm4036 = vmor %vm4034, %vm4035
    %v4037 = vsel %vm4036, %v4029, %v4033
    %v4038 = vand.u32 2147483647, %v3915
    %vm4039 = vcmp.eq.f32.partialorder %v4038, 8.507059e+37
    %v4040 = vand.u32 %v3915, 2147483648
    %v4041 = vor.u32 1.1754944e-38, %v4040
    %v4042 = vsel %vm4039, %v4041, %v4037
    %v4043 = vmul.f32 1.0, %v4042
    %v4044 = vrcp.pop %v3916
    %v4045 = vmul.f32 %v3916, %v4044
    %v4046 = vsub.f32 1.0, %v4045
    %v4047 = vmul.f32 %v4044, %v4046
    %v4048 = vadd.f32 %v4044, %v4047
    %vm4049 = vweird.f32 %v3916
    %vm4050 = vweird.f32 %v4044
    %vm4051 = vmor %vm4049, %vm4050
    %v4052 = vsel %vm4051, %v4044, %v4048
    %v4053 = vand.u32 2147483647, %v3916
    %vm4054 = vcmp.eq.f32.partialorder %v4053, 8.507059e+37
    %v4055 = vand.u32 %v3916, 2147483648
    %v4056 = vor.u32 1.1754944e-38, %v4055
    %v4057 = vsel %vm4054, %v4056, %v4052
    %v4058 = vmul.f32 1.0, %v4057
    %v4059 = vrcp.pop %v3917
    %v4060 = vmul.f32 %v3917, %v4059
    %v4061 = vsub.f32 1.0, %v4060
    %v4062 = vmul.f32 %v4059, %v4061
    %v4063 = vadd.f32 %v4059, %v4062
    %vm4064 = vweird.f32 %v3917
    %vm4065 = vweird.f32 %v4059
    %vm4066 = vmor %vm4064, %vm4065
    %v4067 = vsel %vm4066, %v4059, %v4063
    %v4068 = vand.u32 2147483647, %v3917
    %vm4069 = vcmp.eq.f32.partialorder %v4068, 8.507059e+37
    %v4070 = vand.u32 %v3917, 2147483648
    %v4071 = vor.u32 1.1754944e-38, %v4070
    %v4072 = vsel %vm4069, %v4071, %v4067
    %v4073 = vmul.f32 1.0, %v4072
    %v4074 = vrcp.pop %v3918
    %v4075 = vmul.f32 %v3918, %v4074
    %v4076 = vsub.f32 1.0, %v4075
    %v4077 = vmul.f32 %v4074, %v4076
    %v4078 = vadd.f32 %v4074, %v4077
    %vm4079 = vweird.f32 %v3918
    %vm4080 = vweird.f32 %v4074
    %vm4081 = vmor %vm4079, %vm4080
    %v4082 = vsel %vm4081, %v4074, %v4078
    %v4083 = vand.u32 2147483647, %v3918
    %vm4084 = vcmp.eq.f32.partialorder %v4083, 8.507059e+37
    %v4085 = vand.u32 %v3918, 2147483648
    %v4086 = vor.u32 1.1754944e-38, %v4085
    %v4087 = vsel %vm4084, %v4086, %v4082
    %v4088 = vmul.f32 1.0, %v4087
    %v4089 = vrcp.pop %v3919
    %v4090 = vmul.f32 %v3919, %v4089
    %v4091 = vsub.f32 1.0, %v4090
    %v4092 = vmul.f32 %v4089, %v4091
    %v4093 = vadd.f32 %v4089, %v4092
    %vm4094 = vweird.f32 %v3919
    %vm4095 = vweird.f32 %v4089
    %vm4096 = vmor %vm4094, %vm4095
    %v4097 = vsel %vm4096, %v4089, %v4093
    %v4098 = vand.u32 2147483647, %v3919
    %vm4099 = vcmp.eq.f32.partialorder %v4098, 8.507059e+37
    %v4100 = vand.u32 %v3919, 2147483648
    %v4101 = vor.u32 1.1754944e-38, %v4100
    %v4102 = vsel %vm4099, %v4101, %v4097
    %v4103 = vmul.f32 1.0, %v4102
    %v4104 = vrcp.pop %v3920
    %v4105 = vmul.f32 %v3920, %v4104
    %v4106 = vsub.f32 1.0, %v4105
    %v4107 = vmul.f32 %v4104, %v4106
    %v4108 = vadd.f32 %v4104, %v4107
    %vm4109 = vweird.f32 %v3920
    %vm4110 = vweird.f32 %v4104
    %vm4111 = vmor %vm4109, %vm4110
    %v4112 = vsel %vm4111, %v4104, %v4108
    %v4113 = vand.u32 2147483647, %v3920
    %vm4114 = vcmp.eq.f32.partialorder %v4113, 8.507059e+37
    %v4115 = vand.u32 %v3920, 2147483648
    %v4116 = vor.u32 1.1754944e-38, %v4115
    %v4117 = vsel %vm4114, %v4116, %v4112
    %v4118 = vmul.f32 1.0, %v4117
    %v4119 = vrcp.pop %v3921
    %v4120 = vmul.f32 %v3921, %v4119
    %v4121 = vsub.f32 1.0, %v4120
    %v4122 = vmul.f32 %v4119, %v4121
    %v4123 = vadd.f32 %v4119, %v4122
    %vm4124 = vweird.f32 %v3921
    %vm4125 = vweird.f32 %v4119
    %vm4126 = vmor %vm4124, %vm4125
    %v4127 = vsel %vm4126, %v4119, %v4123
    %v4128 = vand.u32 2147483647, %v3921
    %vm4129 = vcmp.eq.f32.partialorder %v4128, 8.507059e+37
    %v4130 = vand.u32 %v3921, 2147483648
    %v4131 = vor.u32 1.1754944e-38, %v4130
    %v4132 = vsel %vm4129, %v4131, %v4127
    %v4133 = vmul.f32 1.0, %v4132
    %v4134 = vrcp.pop %v3922
    %v4135 = vmul.f32 %v3922, %v4134
    %v4136 = vsub.f32 1.0, %v4135
    %v4137 = vmul.f32 %v4134, %v4136
    %v4138 = vadd.f32 %v4134, %v4137
    %vm4139 = vweird.f32 %v3922
    %vm4140 = vweird.f32 %v4134
    %vm4141 = vmor %vm4139, %vm4140
    %v4142 = vsel %vm4141, %v4134, %v4138
    %v4143 = vand.u32 2147483647, %v3922
    %vm4144 = vcmp.eq.f32.partialorder %v4143, 8.507059e+37
    %v4145 = vand.u32 %v3922, 2147483648
    %v4146 = vor.u32 1.1754944e-38, %v4145
    %v4147 = vsel %vm4144, %v4146, %v4142
    %v4148 = vmul.f32 1.0, %v4147
    %v4149 = vrcp.pop %v3923
    %v4150 = vmul.f32 %v3923, %v4149
    %v4151 = vsub.f32 1.0, %v4150
    %v4152 = vmul.f32 %v4149, %v4151
    %v4153 = vadd.f32 %v4149, %v4152
    %vm4154 = vweird.f32 %v3923
    %vm4155 = vweird.f32 %v4149
    %vm4156 = vmor %vm4154, %vm4155
    %v4157 = vsel %vm4156, %v4149, %v4153
    %v4158 = vand.u32 2147483647, %v3923
    %vm4159 = vcmp.eq.f32.partialorder %v4158, 8.507059e+37
    %v4160 = vand.u32 %v3923, 2147483648
    %v4161 = vor.u32 1.1754944e-38, %v4160
    %v4162 = vsel %vm4159, %v4161, %v4157
    %v4163 = vmul.f32 1.0, %v4162
    %4180 = vrot.lane.b32.xlu0 %v3813, 1
    %v4181 = vpop.permute.xlu0 %4180
    %4182 = vrot.lane.b32.xlu0 %v3816, 1
    %v4183 = vpop.permute.xlu0 %4182
    %4184 = vrot.lane.b32.xlu0 %v3819, 1
    %v4185 = vpop.permute.xlu0 %4184
    %4186 = vrot.lane.b32.xlu0 %v3822, 1
    %v4187 = vpop.permute.xlu0 %4186
    %4188 = vrot.lane.b32.xlu0 %v3825, 1
    %v4189 = vpop.permute.xlu0 %4188
    %4190 = vrot.lane.b32.xlu0 %v3828, 1
    %v4191 = vpop.permute.xlu0 %4190
    %4192 = vrot.lane.b32.xlu0 %v3831, 1
    %v4193 = vpop.permute.xlu0 %4192
    %4194 = vrot.lane.b32.xlu0 %v3834, 1
    %v4195 = vpop.permute.xlu0 %4194
    %4196 = vrot.lane.b32.xlu0 %v3837, 1
    %v4197 = vpop.permute.xlu0 %4196
    %4198 = vrot.lane.b32.xlu0 %v3840, 1
    %v4199 = vpop.permute.xlu0 %4198
    %4200 = vrot.lane.b32.xlu0 %v3843, 1
    %v4201 = vpop.permute.xlu0 %4200
    %4202 = vrot.lane.b32.xlu0 %v3846, 1
    %v4203 = vpop.permute.xlu0 %4202
    %4204 = vrot.lane.b32.xlu0 %v3849, 1
    %v4205 = vpop.permute.xlu0 %4204
    %4206 = vrot.lane.b32.xlu0 %v3852, 1
    %v4207 = vpop.permute.xlu0 %4206
    %4208 = vrot.lane.b32.xlu0 %v3855, 1
    %v4209 = vpop.permute.xlu0 %4208
    %4210 = vrot.lane.b32.xlu0 %v3858, 1
    %v4211 = vpop.permute.xlu0 %4210
    %v4228 = vmul.f32 %v3938, %v4181
    %v4229 = vmul.f32 %v3953, %v4183
    %v4230 = vmul.f32 %v3968, %v4185
    %v4231 = vmul.f32 %v3983, %v4187
    %v4232 = vmul.f32 %v3998, %v4189
    %v4233 = vmul.f32 %v4013, %v4191
    %v4234 = vmul.f32 %v4028, %v4193
    %v4235 = vmul.f32 %v4043, %v4195
    %v4236 = vmul.f32 %v4058, %v4197
    %v4237 = vmul.f32 %v4073, %v4199
    %v4238 = vmul.f32 %v4088, %v4201
    %v4239 = vmul.f32 %v4103, %v4203
    %v4240 = vmul.f32 %v4118, %v4205
    %v4241 = vmul.f32 %v4133, %v4207
    %v4242 = vmul.f32 %v4148, %v4209
    %v4243 = vmul.f32 %v4163, %v4211
    %v4244 = vld [vmem:[#allocation6] sm:$0xff]
    %v4245 = vld [vmem:[#allocation6 + $0x8] sm:$0xff]
    %4262 = vrot.lane.b32.xlu0 %v4228, 127
    %v4263 = vpop.permute.xlu0 %4262
    %4264 = vrot.lane.b32.xlu0 %v4229, 127
    %v4265 = vpop.permute.xlu0 %4264
    %4266 = vrot.lane.b32.xlu0 %v4230, 127
    %v4267 = vpop.permute.xlu0 %4266
    %4268 = vrot.lane.b32.xlu0 %v4231, 127
    %v4269 = vpop.permute.xlu0 %4268
    %4270 = vrot.lane.b32.xlu0 %v4232, 127
    %v4271 = vpop.permute.xlu0 %4270
    %4272 = vrot.lane.b32.xlu0 %v4233, 127
    %v4273 = vpop.permute.xlu0 %4272
    %4274 = vrot.lane.b32.xlu0 %v4234, 127
    %v4275 = vpop.permute.xlu0 %4274
    %4276 = vrot.lane.b32.xlu0 %v4235, 127
    %v4277 = vpop.permute.xlu0 %4276
    %4278 = vrot.lane.b32.xlu0 %v4236, 127
    %v4279 = vpop.permute.xlu0 %4278
    %4280 = vrot.lane.b32.xlu0 %v4237, 127
    %v4281 = vpop.permute.xlu0 %4280
    %4282 = vrot.lane.b32.xlu0 %v4238, 127
    %v4283 = vpop.permute.xlu0 %4282
    %4284 = vrot.lane.b32.xlu0 %v4239, 127
    %v4285 = vpop.permute.xlu0 %4284
    %4286 = vrot.lane.b32.xlu0 %v4240, 127
    %v4287 = vpop.permute.xlu0 %4286
    %4288 = vrot.lane.b32.xlu0 %v4241, 127
    %v4289 = vpop.permute.xlu0 %4288
    %4290 = vrot.lane.b32.xlu0 %v4242, 127
    %v4291 = vpop.permute.xlu0 %4290
    %4292 = vrot.lane.b32.xlu0 %v4243, 127
    %v4293 = vpop.permute.xlu0 %4292
    %4310 = vmatpush.msra.mxu0 %v4293
    %4311 = vmatpush.msra.mxu0 %v4291
    %4312 = vmatpush.msra.mxu0 %v4289
    %4313 = vmatpush.msra.mxu0 %v4287
    %4314 = vmatpush.msra.mxu0 %v4285
    %4315 = vmatpush.msra.mxu0 %v4283
    %4316 = vmatpush.msra.mxu0 %v4281
    %4317 = vmatpush.msra.mxu0 %v4279
    %4318 = vmatpush.msra.mxu0 %v4277
    %4319 = vmatpush.msra.mxu0 %v4275
    %4320 = vmatpush.msra.mxu0 %v4273
    %4321 = vmatpush.msra.mxu0 %v4271
    %4322 = vmatpush.msra.mxu0 %v4269
    %4323 = vmatpush.msra.mxu0 %v4267
    %4324 = vmatpush.msra.mxu0 %v4265
    %4325 = vmatpush.msra.mxu0 %v4263
    %4326 = vmatmul.f32.gmra.mxu0 %v4244
    %v4327 = vpop.f32.mrf.mxu0
    %v4328 = vadd.f32 0.0, %v4327
    %4329 = vmatmul.f32.gmra.mxu0 %v4245
    %v4330 = vpop.f32.mrf.mxu0
    %v4331 = vadd.f32 0.0, %v4330
    %4332 = vdwg.mxu0
    %vm4333 = vcmask 7168
    %4334 = vst.msk [vmem:[%s10] sm:$0xff] %vm4333, %v4328
    %4335 = vst.msk [vmem:[%s10 + $0x8] sm:$0xff] %vm4333, %v4331
    // Predicated region
    $region54: #{tpu_custom_call.1} parent=1 // pred_check
      _
    $region55: #{tpu_custom_call.1} parent=1 // pred_check_branch
      %4337 = sbr.rel (0) target = $region57
    $region56: #{tpu_custom_call.1} parent=1 // pred_region
      _
    $region57: #{tpu_custom_call.1} parent=1 // pred_fallthru
      _
    // Predicated region
    $region58: #{tpu_custom_call.1} parent=1 // pred_check
      _
    $region59: #{tpu_custom_call.1} parent=1 // pred_check_branch
      %4339 = sbr.rel (0) target = $region61
    $region60: #{tpu_custom_call.1} parent=1 // pred_region
      _
    $region61: #{tpu_custom_call.1} parent=1 // pred_fallthru
      _
    %4340 = vsyncpa [#allocation3], 1
    %4341 = vsyncpa [#allocation5], 1

</llo_original>
